<compile_context>
chip_gen: v7x
topology: tpu7x:2x2x1
jax: 0.10.0
libtpu: 0.0.40
codegen_flags: <defaults>
</compile_context>

<pallas_src>
import functools

import numpy as np
import jax
import jax.numpy as jnp
from jax.experimental import pallas as pl
from jax.experimental.pallas import tpu as pltpu


# --------------------------------------------------------------------------
# Parameters (PyTorch-equivalent layout) and kernel-ready constants
# --------------------------------------------------------------------------
def init_params(key, state_dim, action_dim,
                conv1_channels=16, conv2_channels=32, conv3_channels=64,
                hidden_units=512):
    cin, H, W = state_dim
    ks = jax.random.split(key, 10)

    def conv_w(k, ci, co):
        return jax.random.normal(k, (3, 3, ci, co), jnp.float32) / jnp.sqrt(9.0 * ci)

    feat_dim = conv3_channels * (H // 8) * (W // 8)   # == get_output_size()
    return {
        "cw1": conv_w(ks[0], cin, conv1_channels),
        "cb1": 0.05 * jax.random.normal(ks[1], (conv1_channels,), jnp.float32),
        "cw2": conv_w(ks[2], conv1_channels, conv2_channels),
        "cb2": 0.05 * jax.random.normal(ks[3], (conv2_channels,), jnp.float32),
        "cw3": conv_w(ks[4], conv2_channels, conv3_channels),
        "cb3": 0.05 * jax.random.normal(ks[5], (conv3_channels,), jnp.float32),
        "fc1_w": jax.random.normal(ks[6], (feat_dim, hidden_units), jnp.float32)
                 / jnp.sqrt(float(feat_dim)),
        "fc1_b": 0.05 * jax.random.normal(ks[7], (hidden_units,), jnp.float32),
        "fc2_w": jax.random.normal(ks[8], (hidden_units, action_dim), jnp.float32)
                 / jnp.sqrt(float(hidden_units)),
        "fc2_b": 0.05 * jax.random.normal(ks[9], (action_dim,), jnp.float32),
    }


def _conv_stage_consts(w_hwio, b, H_in, W_in):
    """Host-side constants for one Conv3x3(pad=1)+ReLU+MaxPool2x2 stage.

    S[y0]  (Ho, H_in):        selects input rows y = y0-1+2k (zero row if OOB,
                              i.e. the vertical zero padding).
    C[dh,px] (W_in*Cin, Wo*Cout): horizontal taps + pool offset px placed as a
                              lane->lane matrix (missing rows == zero padding).
    bt (1, Wo*Cout):          conv bias tiled per output column.
    """
    w = np.asarray(w_hwio, np.float32)                  # (3, 3, Cin, Cout)
    Cin, Cout = w.shape[2], w.shape[3]
    Ho, Wo = H_in // 2, W_in // 2

    S = np.zeros((4, Ho, H_in), np.float32)
    for y0 in range(4):
        for k in range(Ho):
            y = y0 - 1 + 2 * k
            if 0 <= y < H_in:
                S[y0, k, y] = 1.0

    C = np.zeros((3, 2, W_in, Cin, Wo, Cout), np.float32)
    for dh in range(3):
        for px in range(2):
            for xo in range(Wo):
                for dw in range(3):
                    X = 2 * xo + px + dw - 1
                    if 0 <= X < W_in:
                        C[dh, px, X, :, xo, :] = w[dh, dw]

    bt = np.tile(np.asarray(b, np.float32), Wo).reshape(1, Wo * Cout)
    return (jnp.asarray(S, jnp.bfloat16),
            jnp.asarray(C.reshape(3, 2, W_in * Cin, Wo * Cout), jnp.bfloat16),
            jnp.asarray(bt, jnp.float32))


def prepare_kernel_params(params, state_dim):
    """One-time conversion of PyTorch-style params into kernel-ready constants."""
    Cin, H, W = state_dim
    C3 = params["cw3"].shape[-1]
    HID = params["fc1_w"].shape[-1]
    A = params["fc2_w"].shape[-1]
    Hf, Wf = H // 8, W // 8

    s1, c1, bt1 = _conv_stage_consts(params["cw1"], params["cb1"], H, W)
    s2, c2, bt2 = _conv_stage_consts(params["cw2"], params["cb2"], H // 2, W // 2)
    s3, c3, bt3 = _conv_stage_consts(params["cw3"], params["cb3"], H // 4, W // 4)

    # Permute fc1 rows once so features are consumed in (y, x, c) order in-kernel
    # (PyTorch flattens (c, y, x)) -> no runtime NHWC->NCHW relayout.
    w1 = np.asarray(params["fc1_w"], np.float32)        # (C3*Hf*Wf, HID)
    w1r = w1.reshape(C3, Hf, Wf, HID).transpose(1, 2, 0, 3).reshape(Hf, Wf * C3, HID)

    return {
        "s1": s1, "c1": c1, "bt1": bt1,
        "s2": s2, "c2": c2, "bt2": bt2,
        "s3": s3, "c3": c3, "bt3": bt3,
        "w1r": jnp.asarray(w1r, jnp.bfloat16),
        "b1": jnp.asarray(np.asarray(params["fc1_b"], np.float32).reshape(1, HID)),
        "w2": jnp.asarray(params["fc2_w"], jnp.bfloat16),
        "b2": jnp.asarray(np.asarray(params["fc2_b"], np.float32).reshape(1, A)),
    }


# --------------------------------------------------------------------------
# Fused Pallas kernel
# --------------------------------------------------------------------------
def _stage(a, s_ref, c_ref, bt_ref):
    """One Conv3x3(pad=1) + ReLU + MaxPool2x2 stage on a single sample.

    a: (H_in, W_in*Cin) bf16, lanes ordered (x, channel).
    Returns (H_in//2, (W_in//2)*Cout) bf16 in the same lane convention.
    """
    # Vertical tap/pool-window row selection via tiny 0/1 matmuls (exact).
    R = []
    for y0 in range(4):
        r = jnp.dot(s_ref[y0], a, preferred_element_type=jnp.float32)
        R.append(r.astype(jnp.bfloat16))

    best = None
    for py in range(2):
        for px in range(2):
            acc = jnp.dot(R[py], c_ref[0, px], preferred_element_type=jnp.float32)
            acc = acc + jnp.dot(R[py + 1], c_ref[1, px],
                                preferred_element_type=jnp.float32)
            acc = acc + jnp.dot(R[py + 2], c_ref[2, px],
                                preferred_element_type=jnp.float32)
            best = acc if best is None else jnp.maximum(best, acc)

    # bias + ReLU once, AFTER the 2x2 max (ReLU monotone, bias constant -> same).
    return jnp.maximum(best + bt_ref[...], 0.0).astype(jnp.bfloat16)


def _policy_kernel(x_ref, s1_ref, c1_ref, bt1_ref, s2_ref, c2_ref, bt2_ref,
                   s3_ref, c3_ref, bt3_ref, w1r_ref, b1_ref, w2_ref, b2_ref,
                   o_ref, *, ns, Hf):
    for i in range(ns):
        a = x_ref[i]                                     # (H, W*Cin) bf16
        a = _stage(a, s1_ref, c1_ref, bt1_ref)           # (H/2, (W/2)*C1)
        a = _stage(a, s2_ref, c2_ref, bt2_ref)           # (H/4, (W/4)*C2)
        a = _stage(a, s3_ref, c3_ref, bt3_ref)           # (Hf, Wf*C3)

        # MLP head: flatten handled by the pre-permuted fc1 weight slabs.
        h = jnp.dot(a[0:1, :], w1r_ref[0], preferred_element_type=jnp.float32)
        for y in range(1, Hf):
            h = h + jnp.dot(a[y:y + 1, :], w1r_ref[y],
                            preferred_element_type=jnp.float32)
        h = jnp.maximum(h + b1_ref[...], 0.0).astype(jnp.bfloat16)
        logits = jnp.dot(h, w2_ref[...], preferred_element_type=jnp.float32)
        logits = logits + b2_ref[...]
        o_ref[0, i:i + 1, :] = logits


# --------------------------------------------------------------------------
# Forward
# --------------------------------------------------------------------------
@jax.jit
def cnn_policy_forward(kp, x_nchw):
    if x_nchw.ndim == 3:                        # mirror PyTorch's unsqueeze(0)
        x_nchw = x_nchw[None]
    N, Cin, H, W = x_nchw.shape
    assert H % 8 == 0 and W % 8 == 0, "H, W must be divisible by 8 (three 2x2 pools)"
    A = kp["b2"].shape[-1]
    Hf = H // 8

    # samples per grid step; keep >=2 grid steps whenever N >= 2 (v7x megacore)
    ns = 1 if N <= 2 else min(8, N // 2)
    G = -(-N // ns)
    Npad = G * ns

    # NCHW -> per-sample 2D layout: rows = y, lanes = (x, channel)
    x = jnp.transpose(x_nchw, (0, 2, 3, 1)).astype(jnp.bfloat16)
    x = x.reshape(N, H, W * Cin)
    if Npad != N:
        x = jnp.pad(x, ((0, Npad - N), (0, 0), (0, 0)))

    kernel = functools.partial(_policy_kernel, ns=ns, Hf=Hf)

    def _const(arr):
        return pl.BlockSpec(arr.shape, lambda g: (0,) * arr.ndim)

    out = pl.pallas_call(
        kernel,
        out_shape=jax.ShapeDtypeStruct((G, ns, A), jnp.float32),
        grid=(G,),
        in_specs=[
            pl.BlockSpec((ns, H, W * Cin), lambda g: (g, 0, 0)),
            _const(kp["s1"]), _const(kp["c1"]), _const(kp["bt1"]),
            _const(kp["s2"]), _const(kp["c2"]), _const(kp["bt2"]),
            _const(kp["s3"]), _const(kp["c3"]), _const(kp["bt3"]),
            _const(kp["w1r"]), _const(kp["b1"]), _const(kp["w2"]), _const(kp["b2"]),
        ],
        out_specs=pl.BlockSpec((1, ns, A), lambda g: (g, 0, 0)),
        compiler_params=pltpu.CompilerParams(
            dimension_semantics=("parallel",)),
    )(x, kp["s1"], kp["c1"], kp["bt1"], kp["s2"], kp["c2"], kp["bt2"],
      kp["s3"], kp["c3"], kp["bt3"], kp["w1r"], kp["b1"], kp["w2"], kp["b2"])

    return out.reshape(Npad, A)[:N]


# --------------------------------------------------------------------------
# Pure-JAX reference (for a numerical sanity check only)
# --------------------------------------------------------------------------
def _reference_forward(params, x_nchw):
    if x_nchw.ndim == 3:
        x_nchw = x_nchw[None]
    x = jnp.transpose(x_nchw, (0, 2, 3, 1)).astype(jnp.float32)

    def stage(a, w, b):
        z = jax.lax.conv_general_dilated(
            a, w, window_strides=(1, 1), padding="SAME",
            dimension_numbers=("NHWC", "HWIO", "NHWC"))
        z = jnp.maximum(z + b, 0.0)
        return jax.lax.reduce_window(z, -jnp.inf, jax.lax.max,
                                     (1, 2, 2, 1), (1, 2, 2, 1), "VALID")

    a = stage(x, params["cw1"], params["cb1"])
    a = stage(a, params["cw2"], params["cb2"])
    a = stage(a, params["cw3"], params["cb3"])
    feats = jnp.transpose(a, (0, 3, 1, 2)).reshape(a.shape[0], -1)   # (N, C*H*W)
    h = jnp.maximum(feats @ params["fc1_w"] + params["fc1_b"], 0.0)
    return h @ params["fc2_w"] + params["fc2_b"]


# TODO(synk): predict_stochastic's Categorical sampling is host-side glue in
# PyTorch; only the deterministic forward (and argmax-able logits) is kerneled.

if __name__ == "__main__":
    key = jax.random.PRNGKey(0)
    kx, kparams = jax.random.split(key)

    state_dim = (4, 16, 16)     # (C, H, W) -> feature_dim = 64 * 2 * 2 = 256
    action_dim = 6
    batch = 2

    x = jax.random.normal(kx, (batch,) + state_dim, jnp.float32)   # NCHW
    params = init_params(kparams, state_dim, action_dim)
    kp = prepare_kernel_params(params, state_dim)

    logits = cnn_policy_forward(kp, x)
    jax.block_until_ready(logits)
    assert logits.shape == (batch, action_dim)
    assert bool(jnp.all(jnp.isfinite(logits)))

    # numerical sanity check: bf16 fused kernel vs f32 pure-JAX reference
    ref = _reference_forward(params, x)
    np.testing.assert_allclose(np.asarray(logits), np.asarray(ref),
                               rtol=0.15, atol=0.15)

    # "predict": argmax over logits (glue, same as torch.argmax(dim=1))
    actions = jnp.argmax(logits, axis=1)
    jax.block_until_ready(actions)

    print("KERNEL_OK")
</pallas_src>

<mosaic_0001>
module attributes {stable_mosaic.version = 11 : i64} {
  func.func @_policy_kernel(%arg0: i32, %arg1: memref<1x16x64xbf16, #tpu.memory_space<vmem>>, %arg2: memref<4x8x16xbf16, #tpu.memory_space<vmem>>, %arg3: memref<3x2x64x128xbf16, #tpu.memory_space<vmem>>, %arg4: memref<1x128xf32, #tpu.memory_space<vmem>>, %arg5: memref<4x4x8xbf16, #tpu.memory_space<vmem>>, %arg6: memref<3x2x128x128xbf16, #tpu.memory_space<vmem>>, %arg7: memref<1x128xf32, #tpu.memory_space<vmem>>, %arg8: memref<4x2x4xbf16, #tpu.memory_space<vmem>>, %arg9: memref<3x2x128x128xbf16, #tpu.memory_space<vmem>>, %arg10: memref<1x128xf32, #tpu.memory_space<vmem>>, %arg11: memref<2x128x512xbf16, #tpu.memory_space<vmem>>, %arg12: memref<1x512xf32, #tpu.memory_space<vmem>>, %arg13: memref<512x6xbf16, #tpu.memory_space<vmem>>, %arg14: memref<1x6xf32, #tpu.memory_space<vmem>>, %arg15: memref<1x1x6xf32, #tpu.memory_space<vmem>>) attributes {dimension_semantics = [#tpu.dimension_semantics<parallel>], iteration_bounds = array<i64: 2>, scalar_prefetch = 0 : i64, scratch_operands = 0 : i64, tpu.core_type = #tpu.core_type<tc>, window_params = [{transform_indices = @transform_0, window_bounds = array<i64: 1, 16, 64>}, {pipeline_mode = #tpu.pipeline_mode<synchronous>, transform_indices = @transform_1, window_bounds = array<i64: 4, 8, 16>}, {pipeline_mode = #tpu.pipeline_mode<synchronous>, transform_indices = @transform_2, window_bounds = array<i64: 3, 2, 64, 128>}, {pipeline_mode = #tpu.pipeline_mode<synchronous>, transform_indices = @transform_3, window_bounds = array<i64: 1, 128>}, {pipeline_mode = #tpu.pipeline_mode<synchronous>, transform_indices = @transform_4, window_bounds = array<i64: 4, 4, 8>}, {pipeline_mode = #tpu.pipeline_mode<synchronous>, transform_indices = @transform_5, window_bounds = array<i64: 3, 2, 128, 128>}, {pipeline_mode = #tpu.pipeline_mode<synchronous>, transform_indices = @transform_6, window_bounds = array<i64: 1, 128>}, {pipeline_mode = #tpu.pipeline_mode<synchronous>, transform_indices = @transform_7, window_bounds = array<i64: 4, 2, 4>}, {pipeline_mode = #tpu.pipeline_mode<synchronous>, transform_indices = @transform_8, window_bounds = array<i64: 3, 2, 128, 128>}, {pipeline_mode = #tpu.pipeline_mode<synchronous>, transform_indices = @transform_9, window_bounds = array<i64: 1, 128>}, {pipeline_mode = #tpu.pipeline_mode<synchronous>, transform_indices = @transform_10, window_bounds = array<i64: 2, 128, 512>}, {pipeline_mode = #tpu.pipeline_mode<synchronous>, transform_indices = @transform_11, window_bounds = array<i64: 1, 512>}, {pipeline_mode = #tpu.pipeline_mode<synchronous>, transform_indices = @transform_12, window_bounds = array<i64: 512, 6>}, {pipeline_mode = #tpu.pipeline_mode<synchronous>, transform_indices = @transform_13, window_bounds = array<i64: 1, 6>}, {transform_indices = @transform_14, window_bounds = array<i64: 1, 1, 6>}]} {
    %c0 = arith.constant 0 : index
    %c0_0 = arith.constant 0 : index
    %c0_1 = arith.constant 0 : index
    %0 = vector.load %arg1[%c0, %c0_0, %c0_1] : memref<1x16x64xbf16, #tpu.memory_space<vmem>>, vector<1x16x64xbf16>
    %1 = vector.shape_cast %0 : vector<1x16x64xbf16> to vector<16x64xbf16>
    %c0_2 = arith.constant 0 : index
    %c0_3 = arith.constant 0 : index
    %c0_4 = arith.constant 0 : index
    %2 = vector.load %arg2[%c0_2, %c0_3, %c0_4] : memref<4x8x16xbf16, #tpu.memory_space<vmem>>, vector<1x8x16xbf16>
    %3 = vector.shape_cast %2 : vector<1x8x16xbf16> to vector<8x16xbf16>
    %cst = arith.constant dense<0.000000e+00> : vector<8x64xf32>
    %4 = tpu.matmul %3, %1, %cst {dimension_numbers = #tpu.dot_dimension_numbers<[1], [0], [0], [1], [0, 0, 1, 1], [], []>} : vector<8x16xbf16>, vector<16x64xbf16>, vector<8x64xf32> -> vector<8x64xf32>
    %5 = arith.truncf %4 : vector<8x64xf32> to vector<8x64xbf16>
    %c1 = arith.constant 1 : index
    %c0_5 = arith.constant 0 : index
    %c0_6 = arith.constant 0 : index
    %6 = vector.load %arg2[%c1, %c0_5, %c0_6] : memref<4x8x16xbf16, #tpu.memory_space<vmem>>, vector<1x8x16xbf16>
    %7 = vector.shape_cast %6 : vector<1x8x16xbf16> to vector<8x16xbf16>
    %cst_7 = arith.constant dense<0.000000e+00> : vector<8x64xf32>
    %8 = tpu.matmul %7, %1, %cst_7 {dimension_numbers = #tpu.dot_dimension_numbers<[1], [0], [0], [1], [0, 0, 1, 1], [], []>} : vector<8x16xbf16>, vector<16x64xbf16>, vector<8x64xf32> -> vector<8x64xf32>
    %9 = arith.truncf %8 : vector<8x64xf32> to vector<8x64xbf16>
    %c2 = arith.constant 2 : index
    %c0_8 = arith.constant 0 : index
    %c0_9 = arith.constant 0 : index
    %10 = vector.load %arg2[%c2, %c0_8, %c0_9] : memref<4x8x16xbf16, #tpu.memory_space<vmem>>, vector<1x8x16xbf16>
    %11 = vector.shape_cast %10 : vector<1x8x16xbf16> to vector<8x16xbf16>
    %cst_10 = arith.constant dense<0.000000e+00> : vector<8x64xf32>
    %12 = tpu.matmul %11, %1, %cst_10 {dimension_numbers = #tpu.dot_dimension_numbers<[1], [0], [0], [1], [0, 0, 1, 1], [], []>} : vector<8x16xbf16>, vector<16x64xbf16>, vector<8x64xf32> -> vector<8x64xf32>
    %13 = arith.truncf %12 : vector<8x64xf32> to vector<8x64xbf16>
    %c3 = arith.constant 3 : index
    %c0_11 = arith.constant 0 : index
    %c0_12 = arith.constant 0 : index
    %14 = vector.load %arg2[%c3, %c0_11, %c0_12] : memref<4x8x16xbf16, #tpu.memory_space<vmem>>, vector<1x8x16xbf16>
    %15 = vector.shape_cast %14 : vector<1x8x16xbf16> to vector<8x16xbf16>
    %cst_13 = arith.constant dense<0.000000e+00> : vector<8x64xf32>
    %16 = tpu.matmul %15, %1, %cst_13 {dimension_numbers = #tpu.dot_dimension_numbers<[1], [0], [0], [1], [0, 0, 1, 1], [], []>} : vector<8x16xbf16>, vector<16x64xbf16>, vector<8x64xf32> -> vector<8x64xf32>
    %17 = arith.truncf %16 : vector<8x64xf32> to vector<8x64xbf16>
    %c0_14 = arith.constant 0 : index
    %c0_15 = arith.constant 0 : index
    %c0_16 = arith.constant 0 : index
    %c0_17 = arith.constant 0 : index
    %18 = vector.load %arg3[%c0_14, %c0_15, %c0_16, %c0_17] : memref<3x2x64x128xbf16, #tpu.memory_space<vmem>>, vector<1x1x64x128xbf16>
    %19 = vector.shape_cast %18 : vector<1x1x64x128xbf16> to vector<64x128xbf16>
    %cst_18 = arith.constant dense<0.000000e+00> : vector<8x128xf32>
    %20 = tpu.matmul %5, %19, %cst_18 {dimension_numbers = #tpu.dot_dimension_numbers<[1], [0], [0], [1], [0, 0, 1, 1], [], []>} : vector<8x64xbf16>, vector<64x128xbf16>, vector<8x128xf32> -> vector<8x128xf32>
    %c1_19 = arith.constant 1 : index
    %c0_20 = arith.constant 0 : index
    %c0_21 = arith.constant 0 : index
    %c0_22 = arith.constant 0 : index
    %21 = vector.load %arg3[%c1_19, %c0_20, %c0_21, %c0_22] : memref<3x2x64x128xbf16, #tpu.memory_space<vmem>>, vector<1x1x64x128xbf16>
    %22 = vector.shape_cast %21 : vector<1x1x64x128xbf16> to vector<64x128xbf16>
    %cst_23 = arith.constant dense<0.000000e+00> : vector<8x128xf32>
    %23 = tpu.matmul %9, %22, %cst_23 {dimension_numbers = #tpu.dot_dimension_numbers<[1], [0], [0], [1], [0, 0, 1, 1], [], []>} : vector<8x64xbf16>, vector<64x128xbf16>, vector<8x128xf32> -> vector<8x128xf32>
    %24 = arith.addf %20, %23 : vector<8x128xf32>
    %c2_24 = arith.constant 2 : index
    %c0_25 = arith.constant 0 : index
    %c0_26 = arith.constant 0 : index
    %c0_27 = arith.constant 0 : index
    %25 = vector.load %arg3[%c2_24, %c0_25, %c0_26, %c0_27] : memref<3x2x64x128xbf16, #tpu.memory_space<vmem>>, vector<1x1x64x128xbf16>
    %26 = vector.shape_cast %25 : vector<1x1x64x128xbf16> to vector<64x128xbf16>
    %cst_28 = arith.constant dense<0.000000e+00> : vector<8x128xf32>
    %27 = tpu.matmul %13, %26, %cst_28 {dimension_numbers = #tpu.dot_dimension_numbers<[1], [0], [0], [1], [0, 0, 1, 1], [], []>} : vector<8x64xbf16>, vector<64x128xbf16>, vector<8x128xf32> -> vector<8x128xf32>
    %28 = arith.addf %24, %27 : vector<8x128xf32>
    %c0_29 = arith.constant 0 : index
    %c1_30 = arith.constant 1 : index
    %c0_31 = arith.constant 0 : index
    %c0_32 = arith.constant 0 : index
    %29 = vector.load %arg3[%c0_29, %c1_30, %c0_31, %c0_32] : memref<3x2x64x128xbf16, #tpu.memory_space<vmem>>, vector<1x1x64x128xbf16>
    %30 = vector.shape_cast %29 : vector<1x1x64x128xbf16> to vector<64x128xbf16>
    %cst_33 = arith.constant dense<0.000000e+00> : vector<8x128xf32>
    %31 = tpu.matmul %5, %30, %cst_33 {dimension_numbers = #tpu.dot_dimension_numbers<[1], [0], [0], [1], [0, 0, 1, 1], [], []>} : vector<8x64xbf16>, vector<64x128xbf16>, vector<8x128xf32> -> vector<8x128xf32>
    %c1_34 = arith.constant 1 : index
    %c1_35 = arith.constant 1 : index
    %c0_36 = arith.constant 0 : index
    %c0_37 = arith.constant 0 : index
    %32 = vector.load %arg3[%c1_34, %c1_35, %c0_36, %c0_37] : memref<3x2x64x128xbf16, #tpu.memory_space<vmem>>, vector<1x1x64x128xbf16>
    %33 = vector.shape_cast %32 : vector<1x1x64x128xbf16> to vector<64x128xbf16>
    %cst_38 = arith.constant dense<0.000000e+00> : vector<8x128xf32>
    %34 = tpu.matmul %9, %33, %cst_38 {dimension_numbers = #tpu.dot_dimension_numbers<[1], [0], [0], [1], [0, 0, 1, 1], [], []>} : vector<8x64xbf16>, vector<64x128xbf16>, vector<8x128xf32> -> vector<8x128xf32>
    %35 = arith.addf %31, %34 : vector<8x128xf32>
    %c2_39 = arith.constant 2 : index
    %c1_40 = arith.constant 1 : index
    %c0_41 = arith.constant 0 : index
    %c0_42 = arith.constant 0 : index
    %36 = vector.load %arg3[%c2_39, %c1_40, %c0_41, %c0_42] : memref<3x2x64x128xbf16, #tpu.memory_space<vmem>>, vector<1x1x64x128xbf16>
    %37 = vector.shape_cast %36 : vector<1x1x64x128xbf16> to vector<64x128xbf16>
    %cst_43 = arith.constant dense<0.000000e+00> : vector<8x128xf32>
    %38 = tpu.matmul %13, %37, %cst_43 {dimension_numbers = #tpu.dot_dimension_numbers<[1], [0], [0], [1], [0, 0, 1, 1], [], []>} : vector<8x64xbf16>, vector<64x128xbf16>, vector<8x128xf32> -> vector<8x128xf32>
    %39 = arith.addf %35, %38 : vector<8x128xf32>
    %40 = arith.maximumf %28, %39 : vector<8x128xf32>
    %c0_44 = arith.constant 0 : index
    %c0_45 = arith.constant 0 : index
    %c0_46 = arith.constant 0 : index
    %c0_47 = arith.constant 0 : index
    %41 = vector.load %arg3[%c0_44, %c0_45, %c0_46, %c0_47] : memref<3x2x64x128xbf16, #tpu.memory_space<vmem>>, vector<1x1x64x128xbf16>
    %42 = vector.shape_cast %41 : vector<1x1x64x128xbf16> to vector<64x128xbf16>
    %cst_48 = arith.constant dense<0.000000e+00> : vector<8x128xf32>
    %43 = tpu.matmul %9, %42, %cst_48 {dimension_numbers = #tpu.dot_dimension_numbers<[1], [0], [0], [1], [0, 0, 1, 1], [], []>} : vector<8x64xbf16>, vector<64x128xbf16>, vector<8x128xf32> -> vector<8x128xf32>
    %c1_49 = arith.constant 1 : index
    %c0_50 = arith.constant 0 : index
    %c0_51 = arith.constant 0 : index
    %c0_52 = arith.constant 0 : index
    %44 = vector.load %arg3[%c1_49, %c0_50, %c0_51, %c0_52] : memref<3x2x64x128xbf16, #tpu.memory_space<vmem>>, vector<1x1x64x128xbf16>
    %45 = vector.shape_cast %44 : vector<1x1x64x128xbf16> to vector<64x128xbf16>
    %cst_53 = arith.constant dense<0.000000e+00> : vector<8x128xf32>
    %46 = tpu.matmul %13, %45, %cst_53 {dimension_numbers = #tpu.dot_dimension_numbers<[1], [0], [0], [1], [0, 0, 1, 1], [], []>} : vector<8x64xbf16>, vector<64x128xbf16>, vector<8x128xf32> -> vector<8x128xf32>
    %47 = arith.addf %43, %46 : vector<8x128xf32>
    %c2_54 = arith.constant 2 : index
    %c0_55 = arith.constant 0 : index
    %c0_56 = arith.constant 0 : index
    %c0_57 = arith.constant 0 : index
    %48 = vector.load %arg3[%c2_54, %c0_55, %c0_56, %c0_57] : memref<3x2x64x128xbf16, #tpu.memory_space<vmem>>, vector<1x1x64x128xbf16>
    %49 = vector.shape_cast %48 : vector<1x1x64x128xbf16> to vector<64x128xbf16>
    %cst_58 = arith.constant dense<0.000000e+00> : vector<8x128xf32>
    %50 = tpu.matmul %17, %49, %cst_58 {dimension_numbers = #tpu.dot_dimension_numbers<[1], [0], [0], [1], [0, 0, 1, 1], [], []>} : vector<8x64xbf16>, vector<64x128xbf16>, vector<8x128xf32> -> vector<8x128xf32>
    %51 = arith.addf %47, %50 : vector<8x128xf32>
    %52 = arith.maximumf %40, %51 : vector<8x128xf32>
    %c0_59 = arith.constant 0 : index
    %c1_60 = arith.constant 1 : index
    %c0_61 = arith.constant 0 : index
    %c0_62 = arith.constant 0 : index
    %53 = vector.load %arg3[%c0_59, %c1_60, %c0_61, %c0_62] : memref<3x2x64x128xbf16, #tpu.memory_space<vmem>>, vector<1x1x64x128xbf16>
    %54 = vector.shape_cast %53 : vector<1x1x64x128xbf16> to vector<64x128xbf16>
    %cst_63 = arith.constant dense<0.000000e+00> : vector<8x128xf32>
    %55 = tpu.matmul %9, %54, %cst_63 {dimension_numbers = #tpu.dot_dimension_numbers<[1], [0], [0], [1], [0, 0, 1, 1], [], []>} : vector<8x64xbf16>, vector<64x128xbf16>, vector<8x128xf32> -> vector<8x128xf32>
    %c1_64 = arith.constant 1 : index
    %c1_65 = arith.constant 1 : index
    %c0_66 = arith.constant 0 : index
    %c0_67 = arith.constant 0 : index
    %56 = vector.load %arg3[%c1_64, %c1_65, %c0_66, %c0_67] : memref<3x2x64x128xbf16, #tpu.memory_space<vmem>>, vector<1x1x64x128xbf16>
    %57 = vector.shape_cast %56 : vector<1x1x64x128xbf16> to vector<64x128xbf16>
    %cst_68 = arith.constant dense<0.000000e+00> : vector<8x128xf32>
    %58 = tpu.matmul %13, %57, %cst_68 {dimension_numbers = #tpu.dot_dimension_numbers<[1], [0], [0], [1], [0, 0, 1, 1], [], []>} : vector<8x64xbf16>, vector<64x128xbf16>, vector<8x128xf32> -> vector<8x128xf32>
    %59 = arith.addf %55, %58 : vector<8x128xf32>
    %c2_69 = arith.constant 2 : index
    %c1_70 = arith.constant 1 : index
    %c0_71 = arith.constant 0 : index
    %c0_72 = arith.constant 0 : index
    %60 = vector.load %arg3[%c2_69, %c1_70, %c0_71, %c0_72] : memref<3x2x64x128xbf16, #tpu.memory_space<vmem>>, vector<1x1x64x128xbf16>
    %61 = vector.shape_cast %60 : vector<1x1x64x128xbf16> to vector<64x128xbf16>
    %cst_73 = arith.constant dense<0.000000e+00> : vector<8x128xf32>
    %62 = tpu.matmul %17, %61, %cst_73 {dimension_numbers = #tpu.dot_dimension_numbers<[1], [0], [0], [1], [0, 0, 1, 1], [], []>} : vector<8x64xbf16>, vector<64x128xbf16>, vector<8x128xf32> -> vector<8x128xf32>
    %63 = arith.addf %59, %62 : vector<8x128xf32>
    %64 = arith.maximumf %52, %63 : vector<8x128xf32>
    %c0_74 = arith.constant 0 : index
    %c0_75 = arith.constant 0 : index
    %65 = vector.load %arg4[%c0_74, %c0_75] : memref<1x128xf32, #tpu.memory_space<vmem>>, vector<1x128xf32>
    %66 = vector.broadcast %65 : vector<1x128xf32> to vector<8x128xf32>
    %67 = arith.addf %64, %66 : vector<8x128xf32>
    %cst_76 = arith.constant 0.000000e+00 : f32
    %68 = vector.broadcast %cst_76 : f32 to vector<8x128xf32>
    %69 = arith.maximumf %67, %68 : vector<8x128xf32>
    %70 = arith.truncf %69 : vector<8x128xf32> to vector<8x128xbf16>
    %c0_77 = arith.constant 0 : index
    %c0_78 = arith.constant 0 : index
    %c0_79 = arith.constant 0 : index
    %71 = vector.load %arg5[%c0_77, %c0_78, %c0_79] : memref<4x4x8xbf16, #tpu.memory_space<vmem>>, vector<1x4x8xbf16>
    %72 = vector.shape_cast %71 : vector<1x4x8xbf16> to vector<4x8xbf16>
    %cst_80 = arith.constant dense<0.000000e+00> : vector<4x128xf32>
    %73 = tpu.matmul %72, %70, %cst_80 {dimension_numbers = #tpu.dot_dimension_numbers<[1], [0], [0], [1], [0, 0, 1, 1], [], []>} : vector<4x8xbf16>, vector<8x128xbf16>, vector<4x128xf32> -> vector<4x128xf32>
    %74 = arith.truncf %73 : vector<4x128xf32> to vector<4x128xbf16>
    %c1_81 = arith.constant 1 : index
    %c0_82 = arith.constant 0 : index
    %c0_83 = arith.constant 0 : index
    %75 = vector.load %arg5[%c1_81, %c0_82, %c0_83] : memref<4x4x8xbf16, #tpu.memory_space<vmem>>, vector<1x4x8xbf16>
    %76 = vector.shape_cast %75 : vector<1x4x8xbf16> to vector<4x8xbf16>
    %cst_84 = arith.constant dense<0.000000e+00> : vector<4x128xf32>
    %77 = tpu.matmul %76, %70, %cst_84 {dimension_numbers = #tpu.dot_dimension_numbers<[1], [0], [0], [1], [0, 0, 1, 1], [], []>} : vector<4x8xbf16>, vector<8x128xbf16>, vector<4x128xf32> -> vector<4x128xf32>
    %78 = arith.truncf %77 : vector<4x128xf32> to vector<4x128xbf16>
    %c2_85 = arith.constant 2 : index
    %c0_86 = arith.constant 0 : index
    %c0_87 = arith.constant 0 : index
    %79 = vector.load %arg5[%c2_85, %c0_86, %c0_87] : memref<4x4x8xbf16, #tpu.memory_space<vmem>>, vector<1x4x8xbf16>
    %80 = vector.shape_cast %79 : vector<1x4x8xbf16> to vector<4x8xbf16>
    %cst_88 = arith.constant dense<0.000000e+00> : vector<4x128xf32>
    %81 = tpu.matmul %80, %70, %cst_88 {dimension_numbers = #tpu.dot_dimension_numbers<[1], [0], [0], [1], [0, 0, 1, 1], [], []>} : vector<4x8xbf16>, vector<8x128xbf16>, vector<4x128xf32> -> vector<4x128xf32>
    %82 = arith.truncf %81 : vector<4x128xf32> to vector<4x128xbf16>
    %c3_89 = arith.constant 3 : index
    %c0_90 = arith.constant 0 : index
    %c0_91 = arith.constant 0 : index
    %83 = vector.load %arg5[%c3_89, %c0_90, %c0_91] : memref<4x4x8xbf16, #tpu.memory_space<vmem>>, vector<1x4x8xbf16>
    %84 = vector.shape_cast %83 : vector<1x4x8xbf16> to vector<4x8xbf16>
    %cst_92 = arith.constant dense<0.000000e+00> : vector<4x128xf32>
    %85 = tpu.matmul %84, %70, %cst_92 {dimension_numbers = #tpu.dot_dimension_numbers<[1], [0], [0], [1], [0, 0, 1, 1], [], []>} : vector<4x8xbf16>, vector<8x128xbf16>, vector<4x128xf32> -> vector<4x128xf32>
    %86 = arith.truncf %85 : vector<4x128xf32> to vector<4x128xbf16>
    %c0_93 = arith.constant 0 : index
    %c0_94 = arith.constant 0 : index
    %c0_95 = arith.constant 0 : index
    %c0_96 = arith.constant 0 : index
    %87 = vector.load %arg6[%c0_93, %c0_94, %c0_95, %c0_96] : memref<3x2x128x128xbf16, #tpu.memory_space<vmem>>, vector<1x1x128x128xbf16>
    %88 = vector.shape_cast %87 : vector<1x1x128x128xbf16> to vector<128x128xbf16>
    %cst_97 = arith.constant dense<0.000000e+00> : vector<4x128xf32>
    %89 = tpu.matmul %74, %88, %cst_97 {dimension_numbers = #tpu.dot_dimension_numbers<[1], [0], [0], [1], [0, 0, 1, 1], [], []>} : vector<4x128xbf16>, vector<128x128xbf16>, vector<4x128xf32> -> vector<4x128xf32>
    %c1_98 = arith.constant 1 : index
    %c0_99 = arith.constant 0 : index
    %c0_100 = arith.constant 0 : index
    %c0_101 = arith.constant 0 : index
    %90 = vector.load %arg6[%c1_98, %c0_99, %c0_100, %c0_101] : memref<3x2x128x128xbf16, #tpu.memory_space<vmem>>, vector<1x1x128x128xbf16>
    %91 = vector.shape_cast %90 : vector<1x1x128x128xbf16> to vector<128x128xbf16>
    %cst_102 = arith.constant dense<0.000000e+00> : vector<4x128xf32>
    %92 = tpu.matmul %78, %91, %cst_102 {dimension_numbers = #tpu.dot_dimension_numbers<[1], [0], [0], [1], [0, 0, 1, 1], [], []>} : vector<4x128xbf16>, vector<128x128xbf16>, vector<4x128xf32> -> vector<4x128xf32>
    %93 = arith.addf %89, %92 : vector<4x128xf32>
    %c2_103 = arith.constant 2 : index
    %c0_104 = arith.constant 0 : index
    %c0_105 = arith.constant 0 : index
    %c0_106 = arith.constant 0 : index
    %94 = vector.load %arg6[%c2_103, %c0_104, %c0_105, %c0_106] : memref<3x2x128x128xbf16, #tpu.memory_space<vmem>>, vector<1x1x128x128xbf16>
    %95 = vector.shape_cast %94 : vector<1x1x128x128xbf16> to vector<128x128xbf16>
    %cst_107 = arith.constant dense<0.000000e+00> : vector<4x128xf32>
    %96 = tpu.matmul %82, %95, %cst_107 {dimension_numbers = #tpu.dot_dimension_numbers<[1], [0], [0], [1], [0, 0, 1, 1], [], []>} : vector<4x128xbf16>, vector<128x128xbf16>, vector<4x128xf32> -> vector<4x128xf32>
    %97 = arith.addf %93, %96 : vector<4x128xf32>
    %c0_108 = arith.constant 0 : index
    %c1_109 = arith.constant 1 : index
    %c0_110 = arith.constant 0 : index
    %c0_111 = arith.constant 0 : index
    %98 = vector.load %arg6[%c0_108, %c1_109, %c0_110, %c0_111] : memref<3x2x128x128xbf16, #tpu.memory_space<vmem>>, vector<1x1x128x128xbf16>
    %99 = vector.shape_cast %98 : vector<1x1x128x128xbf16> to vector<128x128xbf16>
    %cst_112 = arith.constant dense<0.000000e+00> : vector<4x128xf32>
    %100 = tpu.matmul %74, %99, %cst_112 {dimension_numbers = #tpu.dot_dimension_numbers<[1], [0], [0], [1], [0, 0, 1, 1], [], []>} : vector<4x128xbf16>, vector<128x128xbf16>, vector<4x128xf32> -> vector<4x128xf32>
    %c1_113 = arith.constant 1 : index
    %c1_114 = arith.constant 1 : index
    %c0_115 = arith.constant 0 : index
    %c0_116 = arith.constant 0 : index
    %101 = vector.load %arg6[%c1_113, %c1_114, %c0_115, %c0_116] : memref<3x2x128x128xbf16, #tpu.memory_space<vmem>>, vector<1x1x128x128xbf16>
    %102 = vector.shape_cast %101 : vector<1x1x128x128xbf16> to vector<128x128xbf16>
    %cst_117 = arith.constant dense<0.000000e+00> : vector<4x128xf32>
    %103 = tpu.matmul %78, %102, %cst_117 {dimension_numbers = #tpu.dot_dimension_numbers<[1], [0], [0], [1], [0, 0, 1, 1], [], []>} : vector<4x128xbf16>, vector<128x128xbf16>, vector<4x128xf32> -> vector<4x128xf32>
    %104 = arith.addf %100, %103 : vector<4x128xf32>
    %c2_118 = arith.constant 2 : index
    %c1_119 = arith.constant 1 : index
    %c0_120 = arith.constant 0 : index
    %c0_121 = arith.constant 0 : index
    %105 = vector.load %arg6[%c2_118, %c1_119, %c0_120, %c0_121] : memref<3x2x128x128xbf16, #tpu.memory_space<vmem>>, vector<1x1x128x128xbf16>
    %106 = vector.shape_cast %105 : vector<1x1x128x128xbf16> to vector<128x128xbf16>
    %cst_122 = arith.constant dense<0.000000e+00> : vector<4x128xf32>
    %107 = tpu.matmul %82, %106, %cst_122 {dimension_numbers = #tpu.dot_dimension_numbers<[1], [0], [0], [1], [0, 0, 1, 1], [], []>} : vector<4x128xbf16>, vector<128x128xbf16>, vector<4x128xf32> -> vector<4x128xf32>
    %108 = arith.addf %104, %107 : vector<4x128xf32>
    %109 = arith.maximumf %97, %108 : vector<4x128xf32>
    %c0_123 = arith.constant 0 : index
    %c0_124 = arith.constant 0 : index
    %c0_125 = arith.constant 0 : index
    %c0_126 = arith.constant 0 : index
    %110 = vector.load %arg6[%c0_123, %c0_124, %c0_125, %c0_126] : memref<3x2x128x128xbf16, #tpu.memory_space<vmem>>, vector<1x1x128x128xbf16>
    %111 = vector.shape_cast %110 : vector<1x1x128x128xbf16> to vector<128x128xbf16>
    %cst_127 = arith.constant dense<0.000000e+00> : vector<4x128xf32>
    %112 = tpu.matmul %78, %111, %cst_127 {dimension_numbers = #tpu.dot_dimension_numbers<[1], [0], [0], [1], [0, 0, 1, 1], [], []>} : vector<4x128xbf16>, vector<128x128xbf16>, vector<4x128xf32> -> vector<4x128xf32>
    %c1_128 = arith.constant 1 : index
    %c0_129 = arith.constant 0 : index
    %c0_130 = arith.constant 0 : index
    %c0_131 = arith.constant 0 : index
    %113 = vector.load %arg6[%c1_128, %c0_129, %c0_130, %c0_131] : memref<3x2x128x128xbf16, #tpu.memory_space<vmem>>, vector<1x1x128x128xbf16>
    %114 = vector.shape_cast %113 : vector<1x1x128x128xbf16> to vector<128x128xbf16>
    %cst_132 = arith.constant dense<0.000000e+00> : vector<4x128xf32>
    %115 = tpu.matmul %82, %114, %cst_132 {dimension_numbers = #tpu.dot_dimension_numbers<[1], [0], [0], [1], [0, 0, 1, 1], [], []>} : vector<4x128xbf16>, vector<128x128xbf16>, vector<4x128xf32> -> vector<4x128xf32>
    %116 = arith.addf %112, %115 : vector<4x128xf32>
    %c2_133 = arith.constant 2 : index
    %c0_134 = arith.constant 0 : index
    %c0_135 = arith.constant 0 : index
    %c0_136 = arith.constant 0 : index
    %117 = vector.load %arg6[%c2_133, %c0_134, %c0_135, %c0_136] : memref<3x2x128x128xbf16, #tpu.memory_space<vmem>>, vector<1x1x128x128xbf16>
    %118 = vector.shape_cast %117 : vector<1x1x128x128xbf16> to vector<128x128xbf16>
    %cst_137 = arith.constant dense<0.000000e+00> : vector<4x128xf32>
    %119 = tpu.matmul %86, %118, %cst_137 {dimension_numbers = #tpu.dot_dimension_numbers<[1], [0], [0], [1], [0, 0, 1, 1], [], []>} : vector<4x128xbf16>, vector<128x128xbf16>, vector<4x128xf32> -> vector<4x128xf32>
    %120 = arith.addf %116, %119 : vector<4x128xf32>
    %121 = arith.maximumf %109, %120 : vector<4x128xf32>
    %c0_138 = arith.constant 0 : index
    %c1_139 = arith.constant 1 : index
    %c0_140 = arith.constant 0 : index
    %c0_141 = arith.constant 0 : index
    %122 = vector.load %arg6[%c0_138, %c1_139, %c0_140, %c0_141] : memref<3x2x128x128xbf16, #tpu.memory_space<vmem>>, vector<1x1x128x128xbf16>
    %123 = vector.shape_cast %122 : vector<1x1x128x128xbf16> to vector<128x128xbf16>
    %cst_142 = arith.constant dense<0.000000e+00> : vector<4x128xf32>
    %124 = tpu.matmul %78, %123, %cst_142 {dimension_numbers = #tpu.dot_dimension_numbers<[1], [0], [0], [1], [0, 0, 1, 1], [], []>} : vector<4x128xbf16>, vector<128x128xbf16>, vector<4x128xf32> -> vector<4x128xf32>
    %c1_143 = arith.constant 1 : index
    %c1_144 = arith.constant 1 : index
    %c0_145 = arith.constant 0 : index
    %c0_146 = arith.constant 0 : index
    %125 = vector.load %arg6[%c1_143, %c1_144, %c0_145, %c0_146] : memref<3x2x128x128xbf16, #tpu.memory_space<vmem>>, vector<1x1x128x128xbf16>
    %126 = vector.shape_cast %125 : vector<1x1x128x128xbf16> to vector<128x128xbf16>
    %cst_147 = arith.constant dense<0.000000e+00> : vector<4x128xf32>
    %127 = tpu.matmul %82, %126, %cst_147 {dimension_numbers = #tpu.dot_dimension_numbers<[1], [0], [0], [1], [0, 0, 1, 1], [], []>} : vector<4x128xbf16>, vector<128x128xbf16>, vector<4x128xf32> -> vector<4x128xf32>
    %128 = arith.addf %124, %127 : vector<4x128xf32>
    %c2_148 = arith.constant 2 : index
    %c1_149 = arith.constant 1 : index
    %c0_150 = arith.constant 0 : index
    %c0_151 = arith.constant 0 : index
    %129 = vector.load %arg6[%c2_148, %c1_149, %c0_150, %c0_151] : memref<3x2x128x128xbf16, #tpu.memory_space<vmem>>, vector<1x1x128x128xbf16>
    %130 = vector.shape_cast %129 : vector<1x1x128x128xbf16> to vector<128x128xbf16>
    %cst_152 = arith.constant dense<0.000000e+00> : vector<4x128xf32>
    %131 = tpu.matmul %86, %130, %cst_152 {dimension_numbers = #tpu.dot_dimension_numbers<[1], [0], [0], [1], [0, 0, 1, 1], [], []>} : vector<4x128xbf16>, vector<128x128xbf16>, vector<4x128xf32> -> vector<4x128xf32>
    %132 = arith.addf %128, %131 : vector<4x128xf32>
    %133 = arith.maximumf %121, %132 : vector<4x128xf32>
    %c0_153 = arith.constant 0 : index
    %c0_154 = arith.constant 0 : index
    %134 = vector.load %arg7[%c0_153, %c0_154] : memref<1x128xf32, #tpu.memory_space<vmem>>, vector<1x128xf32>
    %135 = vector.broadcast %134 : vector<1x128xf32> to vector<4x128xf32>
    %136 = arith.addf %133, %135 : vector<4x128xf32>
    %cst_155 = arith.constant 0.000000e+00 : f32
    %137 = vector.broadcast %cst_155 : f32 to vector<4x128xf32>
    %138 = arith.maximumf %136, %137 : vector<4x128xf32>
    %139 = arith.truncf %138 : vector<4x128xf32> to vector<4x128xbf16>
    %c0_156 = arith.constant 0 : index
    %c0_157 = arith.constant 0 : index
    %c0_158 = arith.constant 0 : index
    %140 = vector.load %arg8[%c0_156, %c0_157, %c0_158] : memref<4x2x4xbf16, #tpu.memory_space<vmem>>, vector<1x2x4xbf16>
    %141 = vector.shape_cast %140 : vector<1x2x4xbf16> to vector<2x4xbf16>
    %cst_159 = arith.constant dense<0.000000e+00> : vector<2x128xf32>
    %142 = tpu.matmul %141, %139, %cst_159 {dimension_numbers = #tpu.dot_dimension_numbers<[1], [0], [0], [1], [0, 0, 1, 1], [], []>} : vector<2x4xbf16>, vector<4x128xbf16>, vector<2x128xf32> -> vector<2x128xf32>
    %143 = arith.truncf %142 : vector<2x128xf32> to vector<2x128xbf16>
    %c1_160 = arith.constant 1 : index
    %c0_161 = arith.constant 0 : index
    %c0_162 = arith.constant 0 : index
    %144 = vector.load %arg8[%c1_160, %c0_161, %c0_162] : memref<4x2x4xbf16, #tpu.memory_space<vmem>>, vector<1x2x4xbf16>
    %145 = vector.shape_cast %144 : vector<1x2x4xbf16> to vector<2x4xbf16>
    %cst_163 = arith.constant dense<0.000000e+00> : vector<2x128xf32>
    %146 = tpu.matmul %145, %139, %cst_163 {dimension_numbers = #tpu.dot_dimension_numbers<[1], [0], [0], [1], [0, 0, 1, 1], [], []>} : vector<2x4xbf16>, vector<4x128xbf16>, vector<2x128xf32> -> vector<2x128xf32>
    %147 = arith.truncf %146 : vector<2x128xf32> to vector<2x128xbf16>
    %c2_164 = arith.constant 2 : index
    %c0_165 = arith.constant 0 : index
    %c0_166 = arith.constant 0 : index
    %148 = vector.load %arg8[%c2_164, %c0_165, %c0_166] : memref<4x2x4xbf16, #tpu.memory_space<vmem>>, vector<1x2x4xbf16>
    %149 = vector.shape_cast %148 : vector<1x2x4xbf16> to vector<2x4xbf16>
    %cst_167 = arith.constant dense<0.000000e+00> : vector<2x128xf32>
    %150 = tpu.matmul %149, %139, %cst_167 {dimension_numbers = #tpu.dot_dimension_numbers<[1], [0], [0], [1], [0, 0, 1, 1], [], []>} : vector<2x4xbf16>, vector<4x128xbf16>, vector<2x128xf32> -> vector<2x128xf32>
    %151 = arith.truncf %150 : vector<2x128xf32> to vector<2x128xbf16>
    %c3_168 = arith.constant 3 : index
    %c0_169 = arith.constant 0 : index
    %c0_170 = arith.constant 0 : index
    %152 = vector.load %arg8[%c3_168, %c0_169, %c0_170] : memref<4x2x4xbf16, #tpu.memory_space<vmem>>, vector<1x2x4xbf16>
    %153 = vector.shape_cast %152 : vector<1x2x4xbf16> to vector<2x4xbf16>
    %cst_171 = arith.constant dense<0.000000e+00> : vector<2x128xf32>
    %154 = tpu.matmul %153, %139, %cst_171 {dimension_numbers = #tpu.dot_dimension_numbers<[1], [0], [0], [1], [0, 0, 1, 1], [], []>} : vector<2x4xbf16>, vector<4x128xbf16>, vector<2x128xf32> -> vector<2x128xf32>
    %155 = arith.truncf %154 : vector<2x128xf32> to vector<2x128xbf16>
    %c0_172 = arith.constant 0 : index
    %c0_173 = arith.constant 0 : index
    %c0_174 = arith.constant 0 : index
    %c0_175 = arith.constant 0 : index
    %156 = vector.load %arg9[%c0_172, %c0_173, %c0_174, %c0_175] : memref<3x2x128x128xbf16, #tpu.memory_space<vmem>>, vector<1x1x128x128xbf16>
    %157 = vector.shape_cast %156 : vector<1x1x128x128xbf16> to vector<128x128xbf16>
    %cst_176 = arith.constant dense<0.000000e+00> : vector<2x128xf32>
    %158 = tpu.matmul %143, %157, %cst_176 {dimension_numbers = #tpu.dot_dimension_numbers<[1], [0], [0], [1], [0, 0, 1, 1], [], []>} : vector<2x128xbf16>, vector<128x128xbf16>, vector<2x128xf32> -> vector<2x128xf32>
    %c1_177 = arith.constant 1 : index
    %c0_178 = arith.constant 0 : index
    %c0_179 = arith.constant 0 : index
    %c0_180 = arith.constant 0 : index
    %159 = vector.load %arg9[%c1_177, %c0_178, %c0_179, %c0_180] : memref<3x2x128x128xbf16, #tpu.memory_space<vmem>>, vector<1x1x128x128xbf16>
    %160 = vector.shape_cast %159 : vector<1x1x128x128xbf16> to vector<128x128xbf16>
    %cst_181 = arith.constant dense<0.000000e+00> : vector<2x128xf32>
    %161 = tpu.matmul %147, %160, %cst_181 {dimension_numbers = #tpu.dot_dimension_numbers<[1], [0], [0], [1], [0, 0, 1, 1], [], []>} : vector<2x128xbf16>, vector<128x128xbf16>, vector<2x128xf32> -> vector<2x128xf32>
    %162 = arith.addf %158, %161 : vector<2x128xf32>
    %c2_182 = arith.constant 2 : index
    %c0_183 = arith.constant 0 : index
    %c0_184 = arith.constant 0 : index
    %c0_185 = arith.constant 0 : index
    %163 = vector.load %arg9[%c2_182, %c0_183, %c0_184, %c0_185] : memref<3x2x128x128xbf16, #tpu.memory_space<vmem>>, vector<1x1x128x128xbf16>
    %164 = vector.shape_cast %163 : vector<1x1x128x128xbf16> to vector<128x128xbf16>
    %cst_186 = arith.constant dense<0.000000e+00> : vector<2x128xf32>
    %165 = tpu.matmul %151, %164, %cst_186 {dimension_numbers = #tpu.dot_dimension_numbers<[1], [0], [0], [1], [0, 0, 1, 1], [], []>} : vector<2x128xbf16>, vector<128x128xbf16>, vector<2x128xf32> -> vector<2x128xf32>
    %166 = arith.addf %162, %165 : vector<2x128xf32>
    %c0_187 = arith.constant 0 : index
    %c1_188 = arith.constant 1 : index
    %c0_189 = arith.constant 0 : index
    %c0_190 = arith.constant 0 : index
    %167 = vector.load %arg9[%c0_187, %c1_188, %c0_189, %c0_190] : memref<3x2x128x128xbf16, #tpu.memory_space<vmem>>, vector<1x1x128x128xbf16>
    %168 = vector.shape_cast %167 : vector<1x1x128x128xbf16> to vector<128x128xbf16>
    %cst_191 = arith.constant dense<0.000000e+00> : vector<2x128xf32>
    %169 = tpu.matmul %143, %168, %cst_191 {dimension_numbers = #tpu.dot_dimension_numbers<[1], [0], [0], [1], [0, 0, 1, 1], [], []>} : vector<2x128xbf16>, vector<128x128xbf16>, vector<2x128xf32> -> vector<2x128xf32>
    %c1_192 = arith.constant 1 : index
    %c1_193 = arith.constant 1 : index
    %c0_194 = arith.constant 0 : index
    %c0_195 = arith.constant 0 : index
    %170 = vector.load %arg9[%c1_192, %c1_193, %c0_194, %c0_195] : memref<3x2x128x128xbf16, #tpu.memory_space<vmem>>, vector<1x1x128x128xbf16>
    %171 = vector.shape_cast %170 : vector<1x1x128x128xbf16> to vector<128x128xbf16>
    %cst_196 = arith.constant dense<0.000000e+00> : vector<2x128xf32>
    %172 = tpu.matmul %147, %171, %cst_196 {dimension_numbers = #tpu.dot_dimension_numbers<[1], [0], [0], [1], [0, 0, 1, 1], [], []>} : vector<2x128xbf16>, vector<128x128xbf16>, vector<2x128xf32> -> vector<2x128xf32>
    %173 = arith.addf %169, %172 : vector<2x128xf32>
    %c2_197 = arith.constant 2 : index
    %c1_198 = arith.constant 1 : index
    %c0_199 = arith.constant 0 : index
    %c0_200 = arith.constant 0 : index
    %174 = vector.load %arg9[%c2_197, %c1_198, %c0_199, %c0_200] : memref<3x2x128x128xbf16, #tpu.memory_space<vmem>>, vector<1x1x128x128xbf16>
    %175 = vector.shape_cast %174 : vector<1x1x128x128xbf16> to vector<128x128xbf16>
    %cst_201 = arith.constant dense<0.000000e+00> : vector<2x128xf32>
    %176 = tpu.matmul %151, %175, %cst_201 {dimension_numbers = #tpu.dot_dimension_numbers<[1], [0], [0], [1], [0, 0, 1, 1], [], []>} : vector<2x128xbf16>, vector<128x128xbf16>, vector<2x128xf32> -> vector<2x128xf32>
    %177 = arith.addf %173, %176 : vector<2x128xf32>
    %178 = arith.maximumf %166, %177 : vector<2x128xf32>
    %c0_202 = arith.constant 0 : index
    %c0_203 = arith.constant 0 : index
    %c0_204 = arith.constant 0 : index
    %c0_205 = arith.constant 0 : index
    %179 = vector.load %arg9[%c0_202, %c0_203, %c0_204, %c0_205] : memref<3x2x128x128xbf16, #tpu.memory_space<vmem>>, vector<1x1x128x128xbf16>
    %180 = vector.shape_cast %179 : vector<1x1x128x128xbf16> to vector<128x128xbf16>
    %cst_206 = arith.constant dense<0.000000e+00> : vector<2x128xf32>
    %181 = tpu.matmul %147, %180, %cst_206 {dimension_numbers = #tpu.dot_dimension_numbers<[1], [0], [0], [1], [0, 0, 1, 1], [], []>} : vector<2x128xbf16>, vector<128x128xbf16>, vector<2x128xf32> -> vector<2x128xf32>
    %c1_207 = arith.constant 1 : index
    %c0_208 = arith.constant 0 : index
    %c0_209 = arith.constant 0 : index
    %c0_210 = arith.constant 0 : index
    %182 = vector.load %arg9[%c1_207, %c0_208, %c0_209, %c0_210] : memref<3x2x128x128xbf16, #tpu.memory_space<vmem>>, vector<1x1x128x128xbf16>
    %183 = vector.shape_cast %182 : vector<1x1x128x128xbf16> to vector<128x128xbf16>
    %cst_211 = arith.constant dense<0.000000e+00> : vector<2x128xf32>
    %184 = tpu.matmul %151, %183, %cst_211 {dimension_numbers = #tpu.dot_dimension_numbers<[1], [0], [0], [1], [0, 0, 1, 1], [], []>} : vector<2x128xbf16>, vector<128x128xbf16>, vector<2x128xf32> -> vector<2x128xf32>
    %185 = arith.addf %181, %184 : vector<2x128xf32>
    %c2_212 = arith.constant 2 : index
    %c0_213 = arith.constant 0 : index
    %c0_214 = arith.constant 0 : index
    %c0_215 = arith.constant 0 : index
    %186 = vector.load %arg9[%c2_212, %c0_213, %c0_214, %c0_215] : memref<3x2x128x128xbf16, #tpu.memory_space<vmem>>, vector<1x1x128x128xbf16>
    %187 = vector.shape_cast %186 : vector<1x1x128x128xbf16> to vector<128x128xbf16>
    %cst_216 = arith.constant dense<0.000000e+00> : vector<2x128xf32>
    %188 = tpu.matmul %155, %187, %cst_216 {dimension_numbers = #tpu.dot_dimension_numbers<[1], [0], [0], [1], [0, 0, 1, 1], [], []>} : vector<2x128xbf16>, vector<128x128xbf16>, vector<2x128xf32> -> vector<2x128xf32>
    %189 = arith.addf %185, %188 : vector<2x128xf32>
    %190 = arith.maximumf %178, %189 : vector<2x128xf32>
    %c0_217 = arith.constant 0 : index
    %c1_218 = arith.constant 1 : index
    %c0_219 = arith.constant 0 : index
    %c0_220 = arith.constant 0 : index
    %191 = vector.load %arg9[%c0_217, %c1_218, %c0_219, %c0_220] : memref<3x2x128x128xbf16, #tpu.memory_space<vmem>>, vector<1x1x128x128xbf16>
    %192 = vector.shape_cast %191 : vector<1x1x128x128xbf16> to vector<128x128xbf16>
    %cst_221 = arith.constant dense<0.000000e+00> : vector<2x128xf32>
    %193 = tpu.matmul %147, %192, %cst_221 {dimension_numbers = #tpu.dot_dimension_numbers<[1], [0], [0], [1], [0, 0, 1, 1], [], []>} : vector<2x128xbf16>, vector<128x128xbf16>, vector<2x128xf32> -> vector<2x128xf32>
    %c1_222 = arith.constant 1 : index
    %c1_223 = arith.constant 1 : index
    %c0_224 = arith.constant 0 : index
    %c0_225 = arith.constant 0 : index
    %194 = vector.load %arg9[%c1_222, %c1_223, %c0_224, %c0_225] : memref<3x2x128x128xbf16, #tpu.memory_space<vmem>>, vector<1x1x128x128xbf16>
    %195 = vector.shape_cast %194 : vector<1x1x128x128xbf16> to vector<128x128xbf16>
    %cst_226 = arith.constant dense<0.000000e+00> : vector<2x128xf32>
    %196 = tpu.matmul %151, %195, %cst_226 {dimension_numbers = #tpu.dot_dimension_numbers<[1], [0], [0], [1], [0, 0, 1, 1], [], []>} : vector<2x128xbf16>, vector<128x128xbf16>, vector<2x128xf32> -> vector<2x128xf32>
    %197 = arith.addf %193, %196 : vector<2x128xf32>
    %c2_227 = arith.constant 2 : index
    %c1_228 = arith.constant 1 : index
    %c0_229 = arith.constant 0 : index
    %c0_230 = arith.constant 0 : index
    %198 = vector.load %arg9[%c2_227, %c1_228, %c0_229, %c0_230] : memref<3x2x128x128xbf16, #tpu.memory_space<vmem>>, vector<1x1x128x128xbf16>
    %199 = vector.shape_cast %198 : vector<1x1x128x128xbf16> to vector<128x128xbf16>
    %cst_231 = arith.constant dense<0.000000e+00> : vector<2x128xf32>
    %200 = tpu.matmul %155, %199, %cst_231 {dimension_numbers = #tpu.dot_dimension_numbers<[1], [0], [0], [1], [0, 0, 1, 1], [], []>} : vector<2x128xbf16>, vector<128x128xbf16>, vector<2x128xf32> -> vector<2x128xf32>
    %201 = arith.addf %197, %200 : vector<2x128xf32>
    %202 = arith.maximumf %190, %201 : vector<2x128xf32>
    %c0_232 = arith.constant 0 : index
    %c0_233 = arith.constant 0 : index
    %203 = vector.load %arg10[%c0_232, %c0_233] : memref<1x128xf32, #tpu.memory_space<vmem>>, vector<1x128xf32>
    %204 = vector.broadcast %203 : vector<1x128xf32> to vector<2x128xf32>
    %205 = arith.addf %202, %204 : vector<2x128xf32>
    %cst_234 = arith.constant 0.000000e+00 : f32
    %206 = vector.broadcast %cst_234 : f32 to vector<2x128xf32>
    %207 = arith.maximumf %205, %206 : vector<2x128xf32>
    %208 = arith.truncf %207 : vector<2x128xf32> to vector<2x128xbf16>
    %209 = vector.extract_strided_slice %208 {offsets = [0, 0], sizes = [1, 128], strides = [1, 1]} : vector<2x128xbf16> to vector<1x128xbf16>
    %c0_235 = arith.constant 0 : index
    %c0_236 = arith.constant 0 : index
    %c0_237 = arith.constant 0 : index
    %210 = vector.load %arg11[%c0_235, %c0_236, %c0_237] : memref<2x128x512xbf16, #tpu.memory_space<vmem>>, vector<1x128x512xbf16>
    %211 = vector.shape_cast %210 : vector<1x128x512xbf16> to vector<128x512xbf16>
    %cst_238 = arith.constant dense<0.000000e+00> : vector<1x512xf32>
    %212 = tpu.matmul %209, %211, %cst_238 {dimension_numbers = #tpu.dot_dimension_numbers<[1], [0], [0], [1], [0, 0, 1, 1], [], []>} : vector<1x128xbf16>, vector<128x512xbf16>, vector<1x512xf32> -> vector<1x512xf32>
    %213 = vector.extract_strided_slice %208 {offsets = [1, 0], sizes = [1, 128], strides = [1, 1]} : vector<2x128xbf16> to vector<1x128xbf16>
    %c1_239 = arith.constant 1 : index
    %c0_240 = arith.constant 0 : index
    %c0_241 = arith.constant 0 : index
    %214 = vector.load %arg11[%c1_239, %c0_240, %c0_241] : memref<2x128x512xbf16, #tpu.memory_space<vmem>>, vector<1x128x512xbf16>
    %215 = vector.shape_cast %214 : vector<1x128x512xbf16> to vector<128x512xbf16>
    %cst_242 = arith.constant dense<0.000000e+00> : vector<1x512xf32>
    %216 = tpu.matmul %213, %215, %cst_242 {dimension_numbers = #tpu.dot_dimension_numbers<[1], [0], [0], [1], [0, 0, 1, 1], [], []>} : vector<1x128xbf16>, vector<128x512xbf16>, vector<1x512xf32> -> vector<1x512xf32>
    %217 = arith.addf %212, %216 : vector<1x512xf32>
    %c0_243 = arith.constant 0 : index
    %c0_244 = arith.constant 0 : index
    %218 = vector.load %arg12[%c0_243, %c0_244] : memref<1x512xf32, #tpu.memory_space<vmem>>, vector<1x512xf32>
    %219 = arith.addf %217, %218 : vector<1x512xf32>
    %cst_245 = arith.constant 0.000000e+00 : f32
    %220 = vector.broadcast %cst_245 : f32 to vector<1x512xf32>
    %221 = arith.maximumf %219, %220 : vector<1x512xf32>
    %222 = arith.truncf %221 : vector<1x512xf32> to vector<1x512xbf16>
    %c0_246 = arith.constant 0 : index
    %c0_247 = arith.constant 0 : index
    %223 = vector.load %arg13[%c0_246, %c0_247] : memref<512x6xbf16, #tpu.memory_space<vmem>>, vector<512x6xbf16>
    %cst_248 = arith.constant dense<0.000000e+00> : vector<1x6xf32>
    %224 = tpu.matmul %222, %223, %cst_248 {dimension_numbers = #tpu.dot_dimension_numbers<[1], [0], [0], [1], [0, 0, 1, 1], [], []>} : vector<1x512xbf16>, vector<512x6xbf16>, vector<1x6xf32> -> vector<1x6xf32>
    %c0_249 = arith.constant 0 : index
    %c0_250 = arith.constant 0 : index
    %225 = vector.load %arg14[%c0_249, %c0_250] : memref<1x6xf32, #tpu.memory_space<vmem>>, vector<1x6xf32>
    %226 = arith.addf %224, %225 : vector<1x6xf32>
    %c0_251 = arith.constant 0 : index
    %c0_252 = arith.constant 0 : index
    %c0_253 = arith.constant 0 : index
    %227 = vector.load %arg15[%c0_251, %c0_252, %c0_253] : memref<1x1x6xf32, #tpu.memory_space<vmem>>, vector<1x1x6xf32>
    %228 = vector.shape_cast %227 : vector<1x1x6xf32> to vector<1x6xf32>
    %229 = vector.shape_cast %226 : vector<1x6xf32> to vector<1x1x6xf32>
    tpu.vector_store %arg15[%c0_251, %c0_252, %c0_253], %229 {strides = array<i32>} : memref<1x1x6xf32, #tpu.memory_space<vmem>>, vector<1x1x6xf32>,
    return
  }
  func.func @transform_0(%arg0: i32) -> (i32, i32, i32) {
    %c0_i32 = arith.constant 0 : i32
    %c0_i32_0 = arith.constant 0 : i32
    %c0_i32_1 = arith.constant 0 : i32
    return %arg0, %c0_i32, %c0_i32_0 : i32, i32, i32
  }
  func.func @transform_1(%arg0: i32) -> (i32, i32, i32) {
    %c0_i32 = arith.constant 0 : i32
    %c0_i32_0 = arith.constant 0 : i32
    %c0_i32_1 = arith.constant 0 : i32
    %c0_i32_2 = arith.constant 0 : i32
    return %c0_i32, %c0_i32_0, %c0_i32_1 : i32, i32, i32
  }
  func.func @transform_2(%arg0: i32) -> (i32, i32, i32, i32) {
    %c0_i32 = arith.constant 0 : i32
    %c0_i32_0 = arith.constant 0 : i32
    %c0_i32_1 = arith.constant 0 : i32
    %c0_i32_2 = arith.constant 0 : i32
    %c0_i32_3 = arith.constant 0 : i32
    return %c0_i32, %c0_i32_0, %c0_i32_1, %c0_i32_2 : i32, i32, i32, i32
  }
  func.func @transform_3(%arg0: i32) -> (i32, i32) {
    %c0_i32 = arith.constant 0 : i32
    %c0_i32_0 = arith.constant 0 : i32
    %c0_i32_1 = arith.constant 0 : i32
    return %c0_i32, %c0_i32_0 : i32, i32
  }
  func.func @transform_4(%arg0: i32) -> (i32, i32, i32) {
    %c0_i32 = arith.constant 0 : i32
    %c0_i32_0 = arith.constant 0 : i32
    %c0_i32_1 = arith.constant 0 : i32
    %c0_i32_2 = arith.constant 0 : i32
    return %c0_i32, %c0_i32_0, %c0_i32_1 : i32, i32, i32
  }
  func.func @transform_5(%arg0: i32) -> (i32, i32, i32, i32) {
    %c0_i32 = arith.constant 0 : i32
    %c0_i32_0 = arith.constant 0 : i32
    %c0_i32_1 = arith.constant 0 : i32
    %c0_i32_2 = arith.constant 0 : i32
    %c0_i32_3 = arith.constant 0 : i32
    return %c0_i32, %c0_i32_0, %c0_i32_1, %c0_i32_2 : i32, i32, i32, i32
  }
  func.func @transform_6(%arg0: i32) -> (i32, i32) {
    %c0_i32 = arith.constant 0 : i32
    %c0_i32_0 = arith.constant 0 : i32
    %c0_i32_1 = arith.constant 0 : i32
    return %c0_i32, %c0_i32_0 : i32, i32
  }
  func.func @transform_7(%arg0: i32) -> (i32, i32, i32) {
    %c0_i32 = arith.constant 0 : i32
    %c0_i32_0 = arith.constant 0 : i32
    %c0_i32_1 = arith.constant 0 : i32
    %c0_i32_2 = arith.constant 0 : i32
    return %c0_i32, %c0_i32_0, %c0_i32_1 : i32, i32, i32
  }
  func.func @transform_8(%arg0: i32) -> (i32, i32, i32, i32) {
    %c0_i32 = arith.constant 0 : i32
    %c0_i32_0 = arith.constant 0 : i32
    %c0_i32_1 = arith.constant 0 : i32
    %c0_i32_2 = arith.constant 0 : i32
    %c0_i32_3 = arith.constant 0 : i32
    return %c0_i32, %c0_i32_0, %c0_i32_1, %c0_i32_2 : i32, i32, i32, i32
  }
  func.func @transform_9(%arg0: i32) -> (i32, i32) {
    %c0_i32 = arith.constant 0 : i32
    %c0_i32_0 = arith.constant 0 : i32
    %c0_i32_1 = arith.constant 0 : i32
    return %c0_i32, %c0_i32_0 : i32, i32
  }
  func.func @transform_10(%arg0: i32) -> (i32, i32, i32) {
    %c0_i32 = arith.constant 0 : i32
    %c0_i32_0 = arith.constant 0 : i32
    %c0_i32_1 = arith.constant 0 : i32
    %c0_i32_2 = arith.constant 0 : i32
    return %c0_i32, %c0_i32_0, %c0_i32_1 : i32, i32, i32
  }
  func.func @transform_11(%arg0: i32) -> (i32, i32) {
    %c0_i32 = arith.constant 0 : i32
    %c0_i32_0 = arith.constant 0 : i32
    %c0_i32_1 = arith.constant 0 : i32
    return %c0_i32, %c0_i32_0 : i32, i32
  }
  func.func @transform_12(%arg0: i32) -> (i32, i32) {
    %c0_i32 = arith.constant 0 : i32
    %c0_i32_0 = arith.constant 0 : i32
    %c0_i32_1 = arith.constant 0 : i32
    return %c0_i32, %c0_i32_0 : i32, i32
  }
  func.func @transform_13(%arg0: i32) -> (i32, i32) {
    %c0_i32 = arith.constant 0 : i32
    %c0_i32_0 = arith.constant 0 : i32
    %c0_i32_1 = arith.constant 0 : i32
    return %c0_i32, %c0_i32_0 : i32, i32
  }
  func.func @transform_14(%arg0: i32) -> (i32, i32, i32) {
    %c0_i32 = arith.constant 0 : i32
    %c0_i32_0 = arith.constant 0 : i32
    %c0_i32_1 = arith.constant 0 : i32
    return %arg0, %c0_i32, %c0_i32_0 : i32, i32, i32
  }
}

</mosaic_0001>

<llo_original>
// kernel: cnn_policy_forward.1
$region0: #{cnn_policy_forward.1}
  #allocation0 [shape = 'u32[]', space=smem, size = 0x4, offset = 0x4, fixed_abs, tag = 'smem constant byte address 0x4 - core index']
  #allocation1 [shape = 'u32[144,128]{1,0:T(1,128)}', space=vmem, size = 0x12000, scoped, tag = 'internal scratch']
  %s0 = inlined_call_operand.vmem [shape: bf16[2,16,64], index: 0, kind: input, shape index: {}]
  %s1 = inlined_call_operand.hbm [shape: bf16[4,8,16], index: 1, kind: input, shape index: {}]
  %s2 = inlined_call_operand.vmem [shape: bf16[3,2,64,128], index: 2, kind: input, shape index: {}]
  %s3 = inlined_call_operand.vmem [shape: f32[1,128], index: 3, kind: input, shape index: {}]
  %s4 = inlined_call_operand.hbm [shape: bf16[4,4,8], index: 4, kind: input, shape index: {}]
  %s5 = inlined_call_operand.hbm [shape: bf16[3,2,128,128], index: 5, kind: input, shape index: {}]
  %s6 = inlined_call_operand.hbm [shape: f32[1,128], index: 6, kind: input, shape index: {}]
  %s7 = inlined_call_operand.hbm [shape: bf16[4,2,4], index: 7, kind: input, shape index: {}]
  %s8 = inlined_call_operand.hbm [shape: bf16[3,2,128,128], index: 8, kind: input, shape index: {}]
  %s9 = inlined_call_operand.hbm [shape: f32[1,128], index: 9, kind: input, shape index: {}]
  %s10 = inlined_call_operand.vmem [shape: bf16[2,128,512], index: 10, kind: input, shape index: {}]
  %s11 = inlined_call_operand.hbm [shape: f32[1,512], index: 11, kind: input, shape index: {}]
  %s12 = inlined_call_operand.vmem [shape: bf16[512,6], index: 12, kind: input, shape index: {}]
  %s13 = inlined_call_operand.hbm [shape: f32[1,6], index: 13, kind: input, shape index: {}]
  %s14 = inlined_call_operand.hbm [shape: f32[2,1,6], index: 14, kind: output, shape index: {}]
  %s15 = sld [smem:[#allocation0]]
  $region125: #{cnn_policy_forward.1} parent=0
    _
  %s17 = ssub.s32 1, %s15
  %s18 = scalar_select 0, %s17, %s15
  $region1: #{cnn_policy_forward.1} parent=0
    #allocation2 [shape = 'u8[8192]{0}', space=vmem, size = 0x2000, scoped, tag = 'input window, operand 1, single buffered']
    #allocation3 [shape = 's32[2]{0}', space=sflag, size = 0x8, scoped, tag = 'scoped memory for cnn_policy_forward.1']
    #allocation4 [shape = 's32[2]{0}', space=sflag, size = 0x8, scoped, tag = 'scoped memory for cnn_policy_forward.1']
    #allocation5 [shape = 'u8[4096]{0}', space=vmem, size = 0x1000, scoped, tag = 'input window, operand 4, single buffered']
    #allocation6 [shape = 's32[1]{0}', space=sflag, size = 0x4, scoped, tag = 'scoped memory for cnn_policy_forward.1']
    #allocation7 [shape = 'u8[196608]{0}', space=vmem, size = 0x30000, scoped, tag = 'input window, operand 5, single buffered']
    #allocation8 [shape = 'u8[512]{0}', space=vmem, size = 0x400, scoped, tag = 'input window, operand 6, single buffered']
    #allocation9 [shape = 's32[1]{0}', space=sflag, size = 0x4, scoped, tag = 'scoped memory for cnn_policy_forward.1']
    #allocation10 [shape = 'u8[2048]{0}', space=vmem, size = 0x800, scoped, tag = 'input window, operand 7, single buffered']
    #allocation11 [shape = 'u8[196608]{0}', space=vmem, size = 0x30000, scoped, tag = 'input window, operand 8, single buffered']
    #allocation12 [shape = 's32[1]{0}', space=sflag, size = 0x4, scoped, tag = 'scoped memory for cnn_policy_forward.1']
    #allocation13 [shape = 'u8[512]{0}', space=vmem, size = 0x400, scoped, tag = 'input window, operand 9, single buffered']
    #allocation14 [shape = 'u8[2048]{0}', space=vmem, size = 0x800, scoped, tag = 'input window, operand 11, single buffered']
    #allocation15 [shape = 's32[1]{0}', space=sflag, size = 0x4, scoped, tag = 'scoped memory for cnn_policy_forward.1']
    #allocation16 [shape = 'u8[512]{0}', space=vmem, size = 0x400, scoped, tag = 'input window, operand 13, single buffered']
    #allocation17 [shape = 'u8[1024]{0}', space=vmem, size = 0x400, scoped, tag = 'output window, operand 0']
    %19 = vsyncpa [#allocation3], 0
    %20 = vsyncpa [#allocation6], 0
    %21 = vsyncpa [#allocation9], 0
    %22 = vsyncpa [#allocation12], 0
    %23 = vsyncpa [#allocation15], 0
    %24 = vsyncpa [#allocation4], 0
    %s25 = scalar_lea.sflag [#allocation4], 1
    %26 = vsyncpa %s25, 0
    loop: start=0, step=1, limit=4
    $region2: #{cnn_policy_forward.1} parent=1 // loop_pre_header
      _
    $region3: #{cnn_policy_forward.1} parent=1 // loop_header
      %s28 = sphi 0, %s32
      %p29 = scmp.ge.s32.totalorder %s28, 4
      %s38 = sphi 0, %s40
      %s41 = sphi 0, %s38
      %s42 = sphi 0, %s41
      %s58 = sphi 0, %s42
      %s62 = sphi 0, %s62
      %s64 = sphi 0, %s62
      %s65 = sphi 0, %s64
      %s79 = sphi 0, %s65
      %s83 = sphi 0, %s83
      %s85 = sphi 0, %s83
      %s86 = sphi 0, %s85
      %s100 = sphi 0, %s86
      %s104 = sphi 0, %s104
      %s106 = sphi 0, %s104
      %s107 = sphi 0, %s106
      %s121 = sphi 0, %s107
      %s125 = sphi 0, %s125
      %s127 = sphi 0, %s125
      %s128 = sphi 0, %s127
      %s142 = sphi 0, %s128
      %s146 = sphi 0, %s146
      %s148 = sphi 0, %s146
      %s149 = sphi 0, %s148
      %s163 = sphi 0, %s149
      %s167 = sphi 0, %s167
      %s169 = sphi 0, %s167
      %s170 = sphi 0, %s169
      %s184 = sphi 0, %s170
      %s188 = sphi 0, %s188
      %s190 = sphi 0, %s188
      %s191 = sphi 0, %s190
      %s205 = sphi 0, %s191
      %s209 = sphi 0, %s209
      %s211 = sphi 0, %s209
      %s212 = sphi 0, %s211
      %s226 = sphi 0, %s212
      %s230 = sphi 0, %s230
      %s232 = sphi 0, %s230
      %s233 = sphi 0, %s232
      %s247 = sphi 0, %s233
      %s251 = sphi 0, %s251
      %s253 = sphi 0, %s251
      %s254 = sphi 0, %s253
      %s268 = sphi 0, %s254
      %s272 = sphi 0, %s272
      %s274 = sphi 0, %s272
      %s275 = sphi 0, %s274
      %s289 = sphi 0, %s275
      %s293 = sphi 0, %s293
      %s295 = sphi 0, %s293
      %s296 = sphi 0, %s295
      %s310 = sphi 0, %s296
      %s314 = sphi 0, %s314
      %s316 = sphi 0, %s314
      %s317 = sphi 0, %s316
      %s331 = sphi 0, %s317
      %s337 = sphi 0, %s339
      %s340 = sphi 0, %s337
      %s341 = sphi 0, %s340
      %s357 = sphi 0, %s341
    $region4: #{cnn_policy_forward.1} parent=1 // loop_header_branch
      %31 = sbr.rel (%p29) target = $region8
    $region5: #{cnn_policy_forward.1} parent=1 // loop_body
      %s33 = ssub.s32 %s28, 1
      %s34 = ssub.s32 %s28, 2
      %s35 = sadd.s32 %s28, 1
      %s36 = ssub.s32 %s28, %s35
      %p37 = scmp.eq.s32.totalorder %s36, 0
      %s39 = sadd.s32 %s38, 1
      %s40 = scalar_select %p37, %s38, %s39
      %p43 = pneg %p37
      %p44 = scmp.eq.s32.totalorder %s28, 1
      %p45 = por %p43, %p44
      %p46 = scmp.ne.s32.totalorder %s38, %s41
      %p47 = scmp.eq.s32.totalorder %s28, 0
      %p48 = por %p46, %p47
      %p49 = scmp.ne.s32.totalorder %s38, %s41
      %p50 = scmp.eq.s32.totalorder %s33, 1
      %p51 = por %p49, %p50
      %p52 = scmp.ne.s32.totalorder %s41, %s42
      %p53 = scmp.eq.s32.totalorder %s33, 0
      %p54 = por %p52, %p53
      %p55 = scmp.ne.s32.totalorder %s41, %s42
      %p56 = scmp.eq.s32.totalorder %s34, 1
      %p57 = por %p55, %p56
      %p59 = scmp.ne.s32.totalorder %s42, %s58
      %p60 = scmp.eq.s32.totalorder %s34, 0
      %p61 = por %p59, %p60
      %s63 = sadd.s32 %s62, 1
      %p66 = scmp.eq.s32.totalorder %s28, 1
      %p67 = scmp.ne.s32.totalorder %s62, %s64
      %p68 = scmp.eq.s32.totalorder %s28, 0
      %p69 = por %p67, %p68
      %p70 = scmp.ne.s32.totalorder %s62, %s64
      %p71 = scmp.eq.s32.totalorder %s33, 1
      %p72 = por %p70, %p71
      %p73 = scmp.ne.s32.totalorder %s64, %s65
      %p74 = scmp.eq.s32.totalorder %s33, 0
      %p75 = por %p73, %p74
      %p76 = scmp.ne.s32.totalorder %s64, %s65
      %p77 = scmp.eq.s32.totalorder %s34, 1
      %p78 = por %p76, %p77
      %p80 = scmp.ne.s32.totalorder %s65, %s79
      %p81 = scmp.eq.s32.totalorder %s34, 0
      %p82 = por %p80, %p81
      %s84 = sadd.s32 %s83, 1
      %p87 = scmp.eq.s32.totalorder %s28, 1
      %p88 = scmp.ne.s32.totalorder %s83, %s85
      %p89 = scmp.eq.s32.totalorder %s28, 0
      %p90 = por %p88, %p89
      %p91 = scmp.ne.s32.totalorder %s83, %s85
      %p92 = scmp.eq.s32.totalorder %s33, 1
      %p93 = por %p91, %p92
      %p94 = scmp.ne.s32.totalorder %s85, %s86
      %p95 = scmp.eq.s32.totalorder %s33, 0
      %p96 = por %p94, %p95
      %p97 = scmp.ne.s32.totalorder %s85, %s86
      %p98 = scmp.eq.s32.totalorder %s34, 1
      %p99 = por %p97, %p98
      %p101 = scmp.ne.s32.totalorder %s86, %s100
      %p102 = scmp.eq.s32.totalorder %s34, 0
      %p103 = por %p101, %p102
      %s105 = sadd.s32 %s104, 1
      %p108 = scmp.eq.s32.totalorder %s28, 1
      %p109 = scmp.ne.s32.totalorder %s104, %s106
      %p110 = scmp.eq.s32.totalorder %s28, 0
      %p111 = por %p109, %p110
      %p112 = scmp.ne.s32.totalorder %s104, %s106
      %p113 = scmp.eq.s32.totalorder %s33, 1
      %p114 = por %p112, %p113
      %p115 = scmp.ne.s32.totalorder %s106, %s107
      %p116 = scmp.eq.s32.totalorder %s33, 0
      %p117 = por %p115, %p116
      %p118 = scmp.ne.s32.totalorder %s106, %s107
      %p119 = scmp.eq.s32.totalorder %s34, 1
      %p120 = por %p118, %p119
      %p122 = scmp.ne.s32.totalorder %s107, %s121
      %p123 = scmp.eq.s32.totalorder %s34, 0
      %p124 = por %p122, %p123
      %s126 = sadd.s32 %s125, 1
      %p129 = scmp.eq.s32.totalorder %s28, 1
      %p130 = scmp.ne.s32.totalorder %s125, %s127
      %p131 = scmp.eq.s32.totalorder %s28, 0
      %p132 = por %p130, %p131
      %p133 = scmp.ne.s32.totalorder %s125, %s127
      %p134 = scmp.eq.s32.totalorder %s33, 1
      %p135 = por %p133, %p134
      %p136 = scmp.ne.s32.totalorder %s127, %s128
      %p137 = scmp.eq.s32.totalorder %s33, 0
      %p138 = por %p136, %p137
      %p139 = scmp.ne.s32.totalorder %s127, %s128
      %p140 = scmp.eq.s32.totalorder %s34, 1
      %p141 = por %p139, %p140
      %p143 = scmp.ne.s32.totalorder %s128, %s142
      %p144 = scmp.eq.s32.totalorder %s34, 0
      %p145 = por %p143, %p144
      %s147 = sadd.s32 %s146, 1
      %p150 = scmp.eq.s32.totalorder %s28, 1
      %p151 = scmp.ne.s32.totalorder %s146, %s148
      %p152 = scmp.eq.s32.totalorder %s28, 0
      %p153 = por %p151, %p152
      %p154 = scmp.ne.s32.totalorder %s146, %s148
      %p155 = scmp.eq.s32.totalorder %s33, 1
      %p156 = por %p154, %p155
      %p157 = scmp.ne.s32.totalorder %s148, %s149
      %p158 = scmp.eq.s32.totalorder %s33, 0
      %p159 = por %p157, %p158
      %p160 = scmp.ne.s32.totalorder %s148, %s149
      %p161 = scmp.eq.s32.totalorder %s34, 1
      %p162 = por %p160, %p161
      %p164 = scmp.ne.s32.totalorder %s149, %s163
      %p165 = scmp.eq.s32.totalorder %s34, 0
      %p166 = por %p164, %p165
      %s168 = sadd.s32 %s167, 1
      %p171 = scmp.eq.s32.totalorder %s28, 1
      %p172 = scmp.ne.s32.totalorder %s167, %s169
      %p173 = scmp.eq.s32.totalorder %s28, 0
      %p174 = por %p172, %p173
      %p175 = scmp.ne.s32.totalorder %s167, %s169
      %p176 = scmp.eq.s32.totalorder %s33, 1
      %p177 = por %p175, %p176
      %p178 = scmp.ne.s32.totalorder %s169, %s170
      %p179 = scmp.eq.s32.totalorder %s33, 0
      %p180 = por %p178, %p179
      %p181 = scmp.ne.s32.totalorder %s169, %s170
      %p182 = scmp.eq.s32.totalorder %s34, 1
      %p183 = por %p181, %p182
      %p185 = scmp.ne.s32.totalorder %s170, %s184
      %p186 = scmp.eq.s32.totalorder %s34, 0
      %p187 = por %p185, %p186
      %s189 = sadd.s32 %s188, 1
      %p192 = scmp.eq.s32.totalorder %s28, 1
      %p193 = scmp.ne.s32.totalorder %s188, %s190
      %p194 = scmp.eq.s32.totalorder %s28, 0
      %p195 = por %p193, %p194
      %p196 = scmp.ne.s32.totalorder %s188, %s190
      %p197 = scmp.eq.s32.totalorder %s33, 1
      %p198 = por %p196, %p197
      %p199 = scmp.ne.s32.totalorder %s190, %s191
      %p200 = scmp.eq.s32.totalorder %s33, 0
      %p201 = por %p199, %p200
      %p202 = scmp.ne.s32.totalorder %s190, %s191
      %p203 = scmp.eq.s32.totalorder %s34, 1
      %p204 = por %p202, %p203
      %p206 = scmp.ne.s32.totalorder %s191, %s205
      %p207 = scmp.eq.s32.totalorder %s34, 0
      %p208 = por %p206, %p207
      %s210 = sadd.s32 %s209, 1
      %p213 = scmp.eq.s32.totalorder %s28, 1
      %p214 = scmp.ne.s32.totalorder %s209, %s211
      %p215 = scmp.eq.s32.totalorder %s28, 0
      %p216 = por %p214, %p215
      %p217 = scmp.ne.s32.totalorder %s209, %s211
      %p218 = scmp.eq.s32.totalorder %s33, 1
      %p219 = por %p217, %p218
      %p220 = scmp.ne.s32.totalorder %s211, %s212
      %p221 = scmp.eq.s32.totalorder %s33, 0
      %p222 = por %p220, %p221
      %p223 = scmp.ne.s32.totalorder %s211, %s212
      %p224 = scmp.eq.s32.totalorder %s34, 1
      %p225 = por %p223, %p224
      %p227 = scmp.ne.s32.totalorder %s212, %s226
      %p228 = scmp.eq.s32.totalorder %s34, 0
      %p229 = por %p227, %p228
      %s231 = sadd.s32 %s230, 1
      %p234 = scmp.eq.s32.totalorder %s28, 1
      %p235 = scmp.ne.s32.totalorder %s230, %s232
      %p236 = scmp.eq.s32.totalorder %s28, 0
      %p237 = por %p235, %p236
      %p238 = scmp.ne.s32.totalorder %s230, %s232
      %p239 = scmp.eq.s32.totalorder %s33, 1
      %p240 = por %p238, %p239
      %p241 = scmp.ne.s32.totalorder %s232, %s233
      %p242 = scmp.eq.s32.totalorder %s33, 0
      %p243 = por %p241, %p242
      %p244 = scmp.ne.s32.totalorder %s232, %s233
      %p245 = scmp.eq.s32.totalorder %s34, 1
      %p246 = por %p244, %p245
      %p248 = scmp.ne.s32.totalorder %s233, %s247
      %p249 = scmp.eq.s32.totalorder %s34, 0
      %p250 = por %p248, %p249
      %s252 = sadd.s32 %s251, 1
      %p255 = scmp.eq.s32.totalorder %s28, 1
      %p256 = scmp.ne.s32.totalorder %s251, %s253
      %p257 = scmp.eq.s32.totalorder %s28, 0
      %p258 = por %p256, %p257
      %p259 = scmp.ne.s32.totalorder %s251, %s253
      %p260 = scmp.eq.s32.totalorder %s33, 1
      %p261 = por %p259, %p260
      %p262 = scmp.ne.s32.totalorder %s253, %s254
      %p263 = scmp.eq.s32.totalorder %s33, 0
      %p264 = por %p262, %p263
      %p265 = scmp.ne.s32.totalorder %s253, %s254
      %p266 = scmp.eq.s32.totalorder %s34, 1
      %p267 = por %p265, %p266
      %p269 = scmp.ne.s32.totalorder %s254, %s268
      %p270 = scmp.eq.s32.totalorder %s34, 0
      %p271 = por %p269, %p270
      %s273 = sadd.s32 %s272, 1
      %p276 = scmp.eq.s32.totalorder %s28, 1
      %p277 = scmp.ne.s32.totalorder %s272, %s274
      %p278 = scmp.eq.s32.totalorder %s28, 0
      %p279 = por %p277, %p278
      %p280 = scmp.ne.s32.totalorder %s272, %s274
      %p281 = scmp.eq.s32.totalorder %s33, 1
      %p282 = por %p280, %p281
      %p283 = scmp.ne.s32.totalorder %s274, %s275
      %p284 = scmp.eq.s32.totalorder %s33, 0
      %p285 = por %p283, %p284
      %p286 = scmp.ne.s32.totalorder %s274, %s275
      %p287 = scmp.eq.s32.totalorder %s34, 1
      %p288 = por %p286, %p287
      %p290 = scmp.ne.s32.totalorder %s275, %s289
      %p291 = scmp.eq.s32.totalorder %s34, 0
      %p292 = por %p290, %p291
      %s294 = sadd.s32 %s293, 1
      %p297 = scmp.eq.s32.totalorder %s28, 1
      %p298 = scmp.ne.s32.totalorder %s293, %s295
      %p299 = scmp.eq.s32.totalorder %s28, 0
      %p300 = por %p298, %p299
      %p301 = scmp.ne.s32.totalorder %s293, %s295
      %p302 = scmp.eq.s32.totalorder %s33, 1
      %p303 = por %p301, %p302
      %p304 = scmp.ne.s32.totalorder %s295, %s296
      %p305 = scmp.eq.s32.totalorder %s33, 0
      %p306 = por %p304, %p305
      %p307 = scmp.ne.s32.totalorder %s295, %s296
      %p308 = scmp.eq.s32.totalorder %s34, 1
      %p309 = por %p307, %p308
      %p311 = scmp.ne.s32.totalorder %s296, %s310
      %p312 = scmp.eq.s32.totalorder %s34, 0
      %p313 = por %p311, %p312
      %s315 = sadd.s32 %s314, 1
      %p318 = scmp.eq.s32.totalorder %s28, 1
      %p319 = scmp.ne.s32.totalorder %s314, %s316
      %p320 = scmp.eq.s32.totalorder %s28, 0
      %p321 = por %p319, %p320
      %p322 = scmp.ne.s32.totalorder %s314, %s316
      %p323 = scmp.eq.s32.totalorder %s33, 1
      %p324 = por %p322, %p323
      %p325 = scmp.ne.s32.totalorder %s316, %s317
      %p326 = scmp.eq.s32.totalorder %s33, 0
      %p327 = por %p325, %p326
      %p328 = scmp.ne.s32.totalorder %s316, %s317
      %p329 = scmp.eq.s32.totalorder %s34, 1
      %p330 = por %p328, %p329
      %p332 = scmp.ne.s32.totalorder %s317, %s331
      %p333 = scmp.eq.s32.totalorder %s34, 0
      %p334 = por %p332, %p333
      %s335 = ssub.s32 %s28, %s35
      %p336 = scmp.eq.s32.totalorder %s335, 0
      %s338 = sadd.s32 %s337, 1
      %s339 = scalar_select %p336, %s337, %s338
      %p342 = pneg %p336
      %p343 = scmp.eq.s32.totalorder %s28, 1
      %p344 = por %p342, %p343
      %p345 = scmp.ne.s32.totalorder %s337, %s340
      %p346 = scmp.eq.s32.totalorder %s28, 0
      %p347 = por %p345, %p346
      %p348 = scmp.ne.s32.totalorder %s337, %s340
      %p349 = scmp.eq.s32.totalorder %s33, 1
      %p350 = por %p348, %p349
      %p351 = scmp.ne.s32.totalorder %s340, %s341
      %p352 = scmp.eq.s32.totalorder %s33, 0
      %p353 = por %p351, %p352
      %p354 = scmp.ne.s32.totalorder %s340, %s341
      %p355 = scmp.eq.s32.totalorder %s34, 1
      %p356 = por %p354, %p355
      %p358 = scmp.ne.s32.totalorder %s341, %s357
      %p359 = scmp.eq.s32.totalorder %s34, 0
      %p360 = por %p358, %p359
      %p361 = scmp.le.s32.totalorder 1, %s28
      %p362 = scmp.lt.s32.totalorder %s28, 3
      %p363 = pnand %p361, %p362
      %p364 = pneg %p363
      // Predicated region
      $region9: #{cnn_policy_forward.1} parent=5 // pred_check
        _
      $region10: #{cnn_policy_forward.1} parent=5 // pred_check_branch
        %366 = sbr.rel (%p363) target = $region12
      $region11: #{cnn_policy_forward.1} parent=5 // pred_region
        %s367 = ssub.s32 %s28, 1
        // Predicated region
        $region13: #{cnn_policy_forward.1} parent=11 // pred_check
          %p368 = pneg %p75
        $region14: #{cnn_policy_forward.1} parent=11 // pred_check_branch
          %370 = sbr.rel (%p368) target = $region16
        $region15: #{cnn_policy_forward.1} parent=11 // pred_region
          %s372 = ssub.s32 256, 256
          %373 = vsyncadd [#allocation3], %s372
          %s374 = sshll.u32 [#allocation2], 4
          %s375 = int_to_ptr.vmem [resolvable:$true] %s374
          %380 = dma.hbm_to_vmem [thread:$0]  %s1, 256, %s375, [#allocation3], 64, 64, 4
        $region16: #{cnn_policy_forward.1} parent=11 // pred_fallthru
          _
        // Predicated region
        $region17: #{cnn_policy_forward.1} parent=11 // pred_check
          %p381 = pneg %p96
        $region18: #{cnn_policy_forward.1} parent=11 // pred_check_branch
          %383 = sbr.rel (%p381) target = $region20
        $region19: #{cnn_policy_forward.1} parent=11 // pred_region
          _
        $region20: #{cnn_policy_forward.1} parent=11 // pred_fallthru
          _
        // Predicated region
        $region21: #{cnn_policy_forward.1} parent=11 // pred_check
          %p384 = pneg %p117
        $region22: #{cnn_policy_forward.1} parent=11 // pred_check_branch
          %386 = sbr.rel (%p384) target = $region24
        $region23: #{cnn_policy_forward.1} parent=11 // pred_region
          _
        $region24: #{cnn_policy_forward.1} parent=11 // pred_fallthru
          _
        // Predicated region
        $region25: #{cnn_policy_forward.1} parent=11 // pred_check
          %p387 = pneg %p138
        $region26: #{cnn_policy_forward.1} parent=11 // pred_check_branch
          %389 = sbr.rel (%p387) target = $region28
        $region27: #{cnn_policy_forward.1} parent=11 // pred_region
          %s391 = ssub.s32 128, 128
          %392 = vsyncadd [#allocation6], %s391
          %s393 = sshll.u32 [#allocation5], 4
          %s394 = int_to_ptr.vmem [resolvable:$true] %s393
          %399 = dma.hbm_to_vmem [thread:$0]  %s4, 128, %s394, [#allocation6], 32, 32, 2
        $region28: #{cnn_policy_forward.1} parent=11 // pred_fallthru
          _
        // Predicated region
        $region29: #{cnn_policy_forward.1} parent=11 // pred_check
          %p400 = pneg %p159
        $region30: #{cnn_policy_forward.1} parent=11 // pred_check_branch
          %402 = sbr.rel (%p400) target = $region32
        $region31: #{cnn_policy_forward.1} parent=11 // pred_region
          %s404 = ssub.s32 6144, 6144
          %405 = vsyncadd [#allocation6], %s404
          %s406 = sshll.u32 [#allocation7], 4
          %s407 = int_to_ptr.vmem [resolvable:$true] %s406
          %412 = dma.hbm_to_vmem [thread:$0]  %s5, 6144, %s407, [#allocation6], 64, 64, 4
        $region32: #{cnn_policy_forward.1} parent=11 // pred_fallthru
          _
        // Predicated region
        $region33: #{cnn_policy_forward.1} parent=11 // pred_check
          %p413 = pneg %p180
        $region34: #{cnn_policy_forward.1} parent=11 // pred_check_branch
          %415 = sbr.rel (%p413) target = $region36
        $region35: #{cnn_policy_forward.1} parent=11 // pred_region
          %s417 = ssub.s32 16, 16
          %418 = vsyncadd [#allocation9], %s417
          %s420 = sshll.u32 [#allocation8], 4
          %s421 = int_to_ptr.vmem [resolvable:$true] %s420
          %423 = dma.hbm_to_vmem [thread:$0]  %s6, 16, %s421, [#allocation9]
        $region36: #{cnn_policy_forward.1} parent=11 // pred_fallthru
          _
        // Predicated region
        $region37: #{cnn_policy_forward.1} parent=11 // pred_check
          %p424 = pneg %p201
        $region38: #{cnn_policy_forward.1} parent=11 // pred_check_branch
          %426 = sbr.rel (%p424) target = $region40
        $region39: #{cnn_policy_forward.1} parent=11 // pred_region
          %s428 = ssub.s32 64, 64
          %429 = vsyncadd [#allocation9], %s428
          %s430 = sshll.u32 [#allocation10], 4
          %s431 = int_to_ptr.vmem [resolvable:$true] %s430
          %436 = dma.hbm_to_vmem [thread:$0]  %s7, 64, %s431, [#allocation9], 16, 16, 1
        $region40: #{cnn_policy_forward.1} parent=11 // pred_fallthru
          _
        // Predicated region
        $region41: #{cnn_policy_forward.1} parent=11 // pred_check
          %p437 = pneg %p222
        $region42: #{cnn_policy_forward.1} parent=11 // pred_check_branch
          %439 = sbr.rel (%p437) target = $region44
        $region43: #{cnn_policy_forward.1} parent=11 // pred_region
          %s441 = ssub.s32 6144, 6144
          %442 = vsyncadd [#allocation12], %s441
          %s443 = sshll.u32 [#allocation11], 4
          %s444 = int_to_ptr.vmem [resolvable:$true] %s443
          %449 = dma.hbm_to_vmem [thread:$0]  %s8, 6144, %s444, [#allocation12], 64, 64, 4
        $region44: #{cnn_policy_forward.1} parent=11 // pred_fallthru
          _
        // Predicated region
        $region45: #{cnn_policy_forward.1} parent=11 // pred_check
          %p450 = pneg %p243
        $region46: #{cnn_policy_forward.1} parent=11 // pred_check_branch
          %452 = sbr.rel (%p450) target = $region48
        $region47: #{cnn_policy_forward.1} parent=11 // pred_region
          %s454 = ssub.s32 16, 16
          %455 = vsyncadd [#allocation12], %s454
          %s457 = sshll.u32 [#allocation13], 4
          %s458 = int_to_ptr.vmem [resolvable:$true] %s457
          %460 = dma.hbm_to_vmem [thread:$0]  %s9, 16, %s458, [#allocation12]
        $region48: #{cnn_policy_forward.1} parent=11 // pred_fallthru
          _
        // Predicated region
        $region49: #{cnn_policy_forward.1} parent=11 // pred_check
          %p461 = pneg %p264
        $region50: #{cnn_policy_forward.1} parent=11 // pred_check_branch
          %463 = sbr.rel (%p461) target = $region52
        $region51: #{cnn_policy_forward.1} parent=11 // pred_region
          _
        $region52: #{cnn_policy_forward.1} parent=11 // pred_fallthru
          _
        // Predicated region
        $region53: #{cnn_policy_forward.1} parent=11 // pred_check
          %p464 = pneg %p285
        $region54: #{cnn_policy_forward.1} parent=11 // pred_check_branch
          %466 = sbr.rel (%p464) target = $region56
        $region55: #{cnn_policy_forward.1} parent=11 // pred_region
          %s468 = ssub.s32 64, 64
          %469 = vsyncadd [#allocation15], %s468
          %s471 = sshll.u32 [#allocation14], 4
          %s472 = int_to_ptr.vmem [resolvable:$true] %s471
          %474 = dma.hbm_to_vmem [thread:$0]  %s11, 64, %s472, [#allocation15]
        $region56: #{cnn_policy_forward.1} parent=11 // pred_fallthru
          _
        // Predicated region
        $region57: #{cnn_policy_forward.1} parent=11 // pred_check
          %p475 = pneg %p306
        $region58: #{cnn_policy_forward.1} parent=11 // pred_check_branch
          %477 = sbr.rel (%p475) target = $region60
        $region59: #{cnn_policy_forward.1} parent=11 // pred_region
          _
        $region60: #{cnn_policy_forward.1} parent=11 // pred_fallthru
          _
        // Predicated region
        $region61: #{cnn_policy_forward.1} parent=11 // pred_check
          %p478 = pneg %p327
        $region62: #{cnn_policy_forward.1} parent=11 // pred_check_branch
          %480 = sbr.rel (%p478) target = $region64
        $region63: #{cnn_policy_forward.1} parent=11 // pred_region
          %s482 = ssub.s32 16, 16
          %483 = vsyncadd [#allocation15], %s482
          %s485 = sshll.u32 [#allocation16], 4
          %s486 = int_to_ptr.vmem [resolvable:$true] %s485
          %488 = dma.hbm_to_vmem [thread:$0]  %s13, 16, %s486, [#allocation15]
        $region64: #{cnn_policy_forward.1} parent=11 // pred_fallthru
          _
      $region12: #{cnn_policy_forward.1} parent=5 // pred_fallthru
        _
      %p489 = scmp.lt.s32.totalorder %s28, 2
      // Predicated region
      $region65: #{cnn_policy_forward.1} parent=5 // pred_check
        %p490 = pneg %p489
      $region66: #{cnn_policy_forward.1} parent=5 // pred_check_branch
        %492 = sbr.rel (%p490) target = $region68
      $region67: #{cnn_policy_forward.1} parent=5 // pred_region
        // Predicated region
        $region69: #{cnn_policy_forward.1} parent=67 // pred_check
          %p493 = pneg %p48
        $region70: #{cnn_policy_forward.1} parent=67 // pred_check_branch
          %495 = sbr.rel (%p493) target = $region72
        $region71: #{cnn_policy_forward.1} parent=67 // pred_region
          %p496 = scmp.lt.s32.totalorder %s28, 1
          %s497 = scalar_select %p496, %s28, 1
          %s498 = smul.addr %s497, 2
          %s499 = smul.addr %s498, 4
          %s500 = scalar_lea.vmem %s0, %s499
        $region72: #{cnn_policy_forward.1} parent=67 // pred_fallthru
          _
      $region68: #{cnn_policy_forward.1} parent=5 // pred_fallthru
        _
      %p501 = scmp.le.s32.totalorder 1, %s28
      %p502 = scmp.lt.s32.totalorder %s28, 3
      %p503 = pnand %p501, %p502
      %p504 = pneg %p503
      // Predicated region
      $region73: #{cnn_policy_forward.1} parent=5 // pred_check
        _
      $region74: #{cnn_policy_forward.1} parent=5 // pred_check_branch
        %506 = sbr.rel (%p503) target = $region76
      $region75: #{cnn_policy_forward.1} parent=5 // pred_region
        %s507 = ssub.s32 %s28, 1
        // Predicated region
        $region77: #{cnn_policy_forward.1} parent=75 // pred_check
          %p508 = pneg %p75
        $region78: #{cnn_policy_forward.1} parent=75 // pred_check_branch
          %510 = sbr.rel (%p508) target = $region80
        $region79: #{cnn_policy_forward.1} parent=75 // pred_region
          %511 = dma.done [#allocation3], 256
        $region80: #{cnn_policy_forward.1} parent=75 // pred_fallthru
          _
        // Predicated region
        $region81: #{cnn_policy_forward.1} parent=75 // pred_check
          %p512 = pneg %p138
        $region82: #{cnn_policy_forward.1} parent=75 // pred_check_branch
          %514 = sbr.rel (%p512) target = $region84
        $region83: #{cnn_policy_forward.1} parent=75 // pred_region
          %515 = dma.done [#allocation6], 128
        $region84: #{cnn_policy_forward.1} parent=75 // pred_fallthru
          _
        // Predicated region
        $region85: #{cnn_policy_forward.1} parent=75 // pred_check
          %p516 = pneg %p159
        $region86: #{cnn_policy_forward.1} parent=75 // pred_check_branch
          %518 = sbr.rel (%p516) target = $region88
        $region87: #{cnn_policy_forward.1} parent=75 // pred_region
          %519 = dma.done [#allocation6], 6144
        $region88: #{cnn_policy_forward.1} parent=75 // pred_fallthru
          _
        // Predicated region
        $region89: #{cnn_policy_forward.1} parent=75 // pred_check
          %p520 = pneg %p180
        $region90: #{cnn_policy_forward.1} parent=75 // pred_check_branch
          %522 = sbr.rel (%p520) target = $region92
        $region91: #{cnn_policy_forward.1} parent=75 // pred_region
          %523 = dma.done [#allocation9], 16
        $region92: #{cnn_policy_forward.1} parent=75 // pred_fallthru
          _
        // Predicated region
        $region93: #{cnn_policy_forward.1} parent=75 // pred_check
          %p524 = pneg %p201
        $region94: #{cnn_policy_forward.1} parent=75 // pred_check_branch
          %526 = sbr.rel (%p524) target = $region96
        $region95: #{cnn_policy_forward.1} parent=75 // pred_region
          %527 = dma.done [#allocation9], 64
        $region96: #{cnn_policy_forward.1} parent=75 // pred_fallthru
          _
        // Predicated region
        $region97: #{cnn_policy_forward.1} parent=75 // pred_check
          %p528 = pneg %p222
        $region98: #{cnn_policy_forward.1} parent=75 // pred_check_branch
          %530 = sbr.rel (%p528) target = $region100
        $region99: #{cnn_policy_forward.1} parent=75 // pred_region
          %531 = dma.done [#allocation12], 6144
        $region100: #{cnn_policy_forward.1} parent=75 // pred_fallthru
          _
        // Predicated region
        $region101: #{cnn_policy_forward.1} parent=75 // pred_check
          %p532 = pneg %p243
        $region102: #{cnn_policy_forward.1} parent=75 // pred_check_branch
          %534 = sbr.rel (%p532) target = $region104
        $region103: #{cnn_policy_forward.1} parent=75 // pred_region
          %535 = dma.done [#allocation12], 16
        $region104: #{cnn_policy_forward.1} parent=75 // pred_fallthru
          _
        // Predicated region
        $region105: #{cnn_policy_forward.1} parent=75 // pred_check
          %p536 = pneg %p285
        $region106: #{cnn_policy_forward.1} parent=75 // pred_check_branch
          %538 = sbr.rel (%p536) target = $region108
        $region107: #{cnn_policy_forward.1} parent=75 // pred_region
          %539 = dma.done [#allocation15], 64
        $region108: #{cnn_policy_forward.1} parent=75 // pred_fallthru
          _
        // Predicated region
        $region109: #{cnn_policy_forward.1} parent=75 // pred_check
          %p540 = pneg %p327
        $region110: #{cnn_policy_forward.1} parent=75 // pred_check_branch
          %542 = sbr.rel (%p540) target = $region112
        $region111: #{cnn_policy_forward.1} parent=75 // pred_region
          %543 = dma.done [#allocation15], 16
        $region112: #{cnn_policy_forward.1} parent=75 // pred_fallthru
          _
        %p544 = scmp.lt.s32.totalorder %s33, 1
        %s545 = scalar_select %p544, %s33, 1
        %s546 = smul.addr %s545, 2
        %s547 = smul.addr %s546, 4
        %s548 = scalar_lea.vmem %s0, %s547
        %p549 = pneg %p54
        %p550 = pneg %p51
        %p551 = pneg %p75
        %p552 = pneg %p72
        %p553 = pneg %p96
        %p554 = pneg %p93
        %p555 = pneg %p117
        %p556 = pneg %p114
        %p557 = pneg %p138
        %p558 = pneg %p135
        %p559 = pneg %p159
        %p560 = pneg %p156
        %p561 = pneg %p180
        %p562 = pneg %p177
        %p563 = pneg %p201
        %p564 = pneg %p198
        %p565 = pneg %p222
        %p566 = pneg %p219
        %p567 = pneg %p243
        %p568 = pneg %p240
        %p569 = pneg %p264
        %p570 = pneg %p261
        %p571 = pneg %p285
        %p572 = pneg %p282
        %p573 = pneg %p306
        %p574 = pneg %p303
        %p575 = pneg %p327
        %p576 = pneg %p324
        %p577 = pneg %p353
        %p578 = pneg %p350
        %s579 = sand.u32 %s340, 1
        %s580 = scalar_lea.sflag [#allocation4], %s579
        %s581 = sand.u32 %s340, 1
        %s582 = scalar_lea.vmem [#allocation17], %s581
        %p583 = scmp.lt.s32.totalorder %s33, 1
        %s584 = scalar_select %p583, %s33, 1
        %s585 = smul.addr %s584, 2
        %s586 = smul.addr %s585, 4
        %s587 = scalar_lea.vmem %s0, %s586
        %v589 = vld [vmem:[%s587] sm:$0xf]
        %v590 = vld [vmem:[%s587 + $0x4] sm:$0xf]
        %v591 = vld [vmem:[#allocation2] sm:$0xf]
        %v594 = vunpack.c.l.b16 %v589
        %v595 = vunpack.c.l.b16 %v590
        %v596 = vpack.c.b16 %v595, %v594
        %vm598 = vcmask 130048
        %v600 = vsel %vm598, %v591, 0
        %602 = vmatprep.subr.bf16.mxu0 0
        %603 = vmatpush1.bf16.msra.mxu0 %v596
        %604 = vmatprep.subr.bf16.mxu0 0
        %605 = vmatpush1.bf16.msra.mxu0 0
        %606 = vmatprep.subr.bf16.mxu0 0
        %607 = vmatpush1.bf16.msra.mxu0 0
        %608 = vmatprep.subr.bf16.mxu0 0
        %609 = vmatpush1.bf16.msra.mxu0 0
        %610 = vmatprep.subr.bf16.mxu0 0
        %611 = vmatpush1.bf16.msra.mxu0 0
        %612 = vmatprep.subr.bf16.mxu0 0
        %613 = vmatpush1.bf16.msra.mxu0 0
        %614 = vmatprep.subr.bf16.mxu0 0
        %615 = vmatpush1.bf16.msra.mxu0 0
        %616 = vmatprep.subr.bf16.mxu0 0
        %617 = vmatpush1.bf16.msra.mxu0 0
        %618 = vmatprep.subr.bf16.mxu0 0
        %619 = vmatpush1.bf16.msra.mxu0 0
        %620 = vmatprep.subr.bf16.mxu0 0
        %621 = vmatpush1.bf16.msra.mxu0 0
        %622 = vmatprep.subr.bf16.mxu0 0
        %623 = vmatpush1.bf16.msra.mxu0 0
        %624 = vmatprep.subr.bf16.mxu0 0
        %625 = vmatpush1.bf16.msra.mxu0 0
        %626 = vmatprep.subr.bf16.mxu0 0
        %627 = vmatpush1.bf16.msra.mxu0 0
        %628 = vmatprep.subr.bf16.mxu0 0
        %629 = vmatpush1.bf16.msra.mxu0 0
        %630 = vmatprep.subr.bf16.mxu0 0
        %631 = vmatpush1.bf16.msra.mxu0 0
        %632 = vmatprep.subr.bf16.mxu0 0
        %633 = vmatpush1.bf16.msra.mxu0 0
        %634 = vmatprep.mubr.bf16.mxu0 0
        %635 = vmatmul.mubr.bf16.gmra.mrb[0].mxu0 %v600
        %v636 = vpop.f32.mrb[0].mxu0
        %v637 = vadd.f32 0.0, %v636
        %v638 = vpop.f32.mrb[0].mxu0
        %v639 = vpop.f32.mrb[0].mxu0
        %v640 = vpop.f32.mrb[0].mxu0
        %641 = vdwg.mxu0
        %v642 = vpack.c.bf16 %v637, %v637
        %s643 = scalar_lea.vmem [#allocation2], 4
        %v644 = vld [vmem:[%s643] sm:$0xf]
        %v646 = vsel %vm598, %v644, 0
        %648 = vmatprep.subr.bf16.mxu0 0
        %649 = vmatpush1.bf16.msra.mxu0 %v596
        %650 = vmatprep.subr.bf16.mxu0 0
        %651 = vmatpush1.bf16.msra.mxu0 0
        %652 = vmatprep.subr.bf16.mxu0 0
        %653 = vmatpush1.bf16.msra.mxu0 0
        %654 = vmatprep.subr.bf16.mxu0 0
        %655 = vmatpush1.bf16.msra.mxu0 0
        %656 = vmatprep.subr.bf16.mxu0 0
        %657 = vmatpush1.bf16.msra.mxu0 0
        %658 = vmatprep.subr.bf16.mxu0 0
        %659 = vmatpush1.bf16.msra.mxu0 0
        %660 = vmatprep.subr.bf16.mxu0 0
        %661 = vmatpush1.bf16.msra.mxu0 0
        %662 = vmatprep.subr.bf16.mxu0 0
        %663 = vmatpush1.bf16.msra.mxu0 0
        %664 = vmatprep.subr.bf16.mxu0 0
        %665 = vmatpush1.bf16.msra.mxu0 0
        %666 = vmatprep.subr.bf16.mxu0 0
        %667 = vmatpush1.bf16.msra.mxu0 0
        %668 = vmatprep.subr.bf16.mxu0 0
        %669 = vmatpush1.bf16.msra.mxu0 0
        %670 = vmatprep.subr.bf16.mxu0 0
        %671 = vmatpush1.bf16.msra.mxu0 0
        %672 = vmatprep.subr.bf16.mxu0 0
        %673 = vmatpush1.bf16.msra.mxu0 0
        %674 = vmatprep.subr.bf16.mxu0 0
        %675 = vmatpush1.bf16.msra.mxu0 0
        %676 = vmatprep.subr.bf16.mxu0 0
        %677 = vmatpush1.bf16.msra.mxu0 0
        %678 = vmatprep.subr.bf16.mxu0 0
        %679 = vmatpush1.bf16.msra.mxu0 0
        %680 = vmatprep.mubr.bf16.mxu0 0
        %681 = vmatmul.mubr.bf16.gmra.mrb[0].mxu0 %v646
        %v682 = vpop.f32.mrb[0].mxu0
        %v683 = vadd.f32 0.0, %v682
        %v684 = vpop.f32.mrb[0].mxu0
        %v685 = vpop.f32.mrb[0].mxu0
        %v686 = vpop.f32.mrb[0].mxu0
        %687 = vdwg.mxu0
        %v688 = vpack.c.bf16 %v683, %v683
        %s689 = scalar_lea.vmem [#allocation2], 8
        %v690 = vld [vmem:[%s689] sm:$0xf]
        %v692 = vsel %vm598, %v690, 0
        %694 = vmatprep.subr.bf16.mxu0 0
        %695 = vmatpush1.bf16.msra.mxu0 %v596
        %696 = vmatprep.subr.bf16.mxu0 0
        %697 = vmatpush1.bf16.msra.mxu0 0
        %698 = vmatprep.subr.bf16.mxu0 0
        %699 = vmatpush1.bf16.msra.mxu0 0
        %700 = vmatprep.subr.bf16.mxu0 0
        %701 = vmatpush1.bf16.msra.mxu0 0
        %702 = vmatprep.subr.bf16.mxu0 0
        %703 = vmatpush1.bf16.msra.mxu0 0
        %704 = vmatprep.subr.bf16.mxu0 0
        %705 = vmatpush1.bf16.msra.mxu0 0
        %706 = vmatprep.subr.bf16.mxu0 0
        %707 = vmatpush1.bf16.msra.mxu0 0
        %708 = vmatprep.subr.bf16.mxu0 0
        %709 = vmatpush1.bf16.msra.mxu0 0
        %710 = vmatprep.subr.bf16.mxu0 0
        %711 = vmatpush1.bf16.msra.mxu0 0
        %712 = vmatprep.subr.bf16.mxu0 0
        %713 = vmatpush1.bf16.msra.mxu0 0
        %714 = vmatprep.subr.bf16.mxu0 0
        %715 = vmatpush1.bf16.msra.mxu0 0
        %716 = vmatprep.subr.bf16.mxu0 0
        %717 = vmatpush1.bf16.msra.mxu0 0
        %718 = vmatprep.subr.bf16.mxu0 0
        %719 = vmatpush1.bf16.msra.mxu0 0
        %720 = vmatprep.subr.bf16.mxu0 0
        %721 = vmatpush1.bf16.msra.mxu0 0
        %722 = vmatprep.subr.bf16.mxu0 0
        %723 = vmatpush1.bf16.msra.mxu0 0
        %724 = vmatprep.subr.bf16.mxu0 0
        %725 = vmatpush1.bf16.msra.mxu0 0
        %726 = vmatprep.mubr.bf16.mxu0 0
        %727 = vmatmul.mubr.bf16.gmra.mrb[0].mxu0 %v692
        %v728 = vpop.f32.mrb[0].mxu0
        %v729 = vadd.f32 0.0, %v728
        %v730 = vpop.f32.mrb[0].mxu0
        %v731 = vpop.f32.mrb[0].mxu0
        %v732 = vpop.f32.mrb[0].mxu0
        %733 = vdwg.mxu0
        %v734 = vpack.c.bf16 %v729, %v729
        %s735 = scalar_lea.vmem [#allocation2], 12
        %v736 = vld [vmem:[%s735] sm:$0xf]
        %v738 = vsel %vm598, %v736, 0
        %740 = vmatprep.subr.bf16.mxu0 0
        %741 = vmatpush1.bf16.msra.mxu0 %v596
        %742 = vmatprep.subr.bf16.mxu0 0
        %743 = vmatpush1.bf16.msra.mxu0 0
        %744 = vmatprep.subr.bf16.mxu0 0
        %745 = vmatpush1.bf16.msra.mxu0 0
        %746 = vmatprep.subr.bf16.mxu0 0
        %747 = vmatpush1.bf16.msra.mxu0 0
        %748 = vmatprep.subr.bf16.mxu0 0
        %749 = vmatpush1.bf16.msra.mxu0 0
        %750 = vmatprep.subr.bf16.mxu0 0
        %751 = vmatpush1.bf16.msra.mxu0 0
        %752 = vmatprep.subr.bf16.mxu0 0
        %753 = vmatpush1.bf16.msra.mxu0 0
        %754 = vmatprep.subr.bf16.mxu0 0
        %755 = vmatpush1.bf16.msra.mxu0 0
        %756 = vmatprep.subr.bf16.mxu0 0
        %757 = vmatpush1.bf16.msra.mxu0 0
        %758 = vmatprep.subr.bf16.mxu0 0
        %759 = vmatpush1.bf16.msra.mxu0 0
        %760 = vmatprep.subr.bf16.mxu0 0
        %761 = vmatpush1.bf16.msra.mxu0 0
        %762 = vmatprep.subr.bf16.mxu0 0
        %763 = vmatpush1.bf16.msra.mxu0 0
        %764 = vmatprep.subr.bf16.mxu0 0
        %765 = vmatpush1.bf16.msra.mxu0 0
        %766 = vmatprep.subr.bf16.mxu0 0
        %767 = vmatpush1.bf16.msra.mxu0 0
        %768 = vmatprep.subr.bf16.mxu0 0
        %769 = vmatpush1.bf16.msra.mxu0 0
        %770 = vmatprep.subr.bf16.mxu0 0
        %771 = vmatpush1.bf16.msra.mxu0 0
        %772 = vmatprep.mubr.bf16.mxu0 0
        %773 = vmatmul.mubr.bf16.gmra.mrb[0].mxu0 %v738
        %v774 = vpop.f32.mrb[0].mxu0
        %v775 = vadd.f32 0.0, %v774
        %v776 = vpop.f32.mrb[0].mxu0
        %v777 = vpop.f32.mrb[0].mxu0
        %v778 = vpop.f32.mrb[0].mxu0
        %779 = vdwg.mxu0
        %v780 = vpack.c.bf16 %v775, %v775
        %v781 = vld [vmem:[%s2] sm:$0xf]
        %v782 = vld [vmem:[%s2 + $0x4] sm:$0xf]
        %v783 = vld [vmem:[%s2 + $0x8] sm:$0xf]
        %v784 = vld [vmem:[%s2 + $0xc] sm:$0xf]
        %v785 = vld [vmem:[%s2 + $0x10] sm:$0xf]
        %v786 = vld [vmem:[%s2 + $0x14] sm:$0xf]
        %v787 = vld [vmem:[%s2 + $0x18] sm:$0xf]
        %v788 = vld [vmem:[%s2 + $0x1c] sm:$0xf]
        %s789 = scalar_lea.vmem %s2, 64
        %v790 = vld [vmem:[%s789] sm:$0xf]
        %v791 = vld [vmem:[%s789 + $0x4] sm:$0xf]
        %v792 = vld [vmem:[%s789 + $0x8] sm:$0xf]
        %v793 = vld [vmem:[%s789 + $0xc] sm:$0xf]
        %v794 = vld [vmem:[%s789 + $0x10] sm:$0xf]
        %v795 = vld [vmem:[%s789 + $0x14] sm:$0xf]
        %v796 = vld [vmem:[%s789 + $0x18] sm:$0xf]
        %v797 = vld [vmem:[%s789 + $0x1c] sm:$0xf]
        %v806 = vunpack.c.l.b16 %v790
        %v807 = vunpack.c.l.b16 %v791
        %v808 = vunpack.c.l.b16 %v792
        %v809 = vunpack.c.l.b16 %v793
        %v810 = vunpack.c.l.b16 %v794
        %v811 = vunpack.c.l.b16 %v795
        %v812 = vunpack.c.l.b16 %v796
        %v813 = vunpack.c.l.b16 %v797
        %v814 = vpack.c.b16 %v807, %v806
        %v815 = vpack.c.b16 %v809, %v808
        %v816 = vpack.c.b16 %v811, %v810
        %v817 = vpack.c.b16 %v813, %v812
        %vm822 = vcmask 523264
        %v824 = vsel %vm822, %v688, 0
        %826 = vmatprep.subr.bf16.mxu0 0
        %827 = vmatpush1.bf16.msra.mxu0 %v814
        %828 = vmatprep.subr.bf16.mxu0 0
        %829 = vmatpush1.bf16.msra.mxu0 %v815
        %830 = vmatprep.subr.bf16.mxu0 0
        %831 = vmatpush1.bf16.msra.mxu0 %v816
        %832 = vmatprep.subr.bf16.mxu0 0
        %833 = vmatpush1.bf16.msra.mxu0 %v817
        %834 = vmatprep.subr.bf16.mxu0 0
        %835 = vmatpush1.bf16.msra.mxu0 0
        %836 = vmatprep.subr.bf16.mxu0 0
        %837 = vmatpush1.bf16.msra.mxu0 0
        %838 = vmatprep.subr.bf16.mxu0 0
        %839 = vmatpush1.bf16.msra.mxu0 0
        %840 = vmatprep.subr.bf16.mxu0 0
        %841 = vmatpush1.bf16.msra.mxu0 0
        %842 = vmatprep.subr.bf16.mxu0 0
        %843 = vmatpush1.bf16.msra.mxu0 0
        %844 = vmatprep.subr.bf16.mxu0 0
        %845 = vmatpush1.bf16.msra.mxu0 0
        %846 = vmatprep.subr.bf16.mxu0 0
        %847 = vmatpush1.bf16.msra.mxu0 0
        %848 = vmatprep.subr.bf16.mxu0 0
        %849 = vmatpush1.bf16.msra.mxu0 0
        %850 = vmatprep.subr.bf16.mxu0 0
        %851 = vmatpush1.bf16.msra.mxu0 0
        %852 = vmatprep.subr.bf16.mxu0 0
        %853 = vmatpush1.bf16.msra.mxu0 0
        %854 = vmatprep.subr.bf16.mxu0 0
        %855 = vmatpush1.bf16.msra.mxu0 0
        %856 = vmatprep.subr.bf16.mxu0 0
        %857 = vmatpush1.bf16.msra.mxu0 0
        %858 = vmatprep.mubr.bf16.mxu0 0
        %859 = vmatmul.mubr.bf16.gmra.mrb[0].mxu0 %v824
        %v860 = vpop.f32.mrb[0].mxu0
        %v861 = vadd.f32 0.0, %v860
        %v862 = vpop.f32.mrb[0].mxu0
        %v863 = vpop.f32.mrb[0].mxu0
        %v864 = vpop.f32.mrb[0].mxu0
        %865 = vdwg.mxu0
        %v874 = vunpack.c.l.b16 %v781
        %v875 = vunpack.c.l.b16 %v782
        %v876 = vunpack.c.l.b16 %v783
        %v877 = vunpack.c.l.b16 %v784
        %v878 = vunpack.c.l.b16 %v785
        %v879 = vunpack.c.l.b16 %v786
        %v880 = vunpack.c.l.b16 %v787
        %v881 = vunpack.c.l.b16 %v788
        %v882 = vpack.c.b16 %v875, %v874
        %v883 = vpack.c.b16 %v877, %v876
        %v884 = vpack.c.b16 %v879, %v878
        %v885 = vpack.c.b16 %v881, %v880
        %v891 = vsel %vm822, %v642, 0
        %893 = vmatprep.subr.bf16.mxu0 0
        %894 = vmatpush1.bf16.msra.mxu0 %v882
        %895 = vmatprep.subr.bf16.mxu0 0
        %896 = vmatpush1.bf16.msra.mxu0 %v883
        %897 = vmatprep.subr.bf16.mxu0 0
        %898 = vmatpush1.bf16.msra.mxu0 %v884
        %899 = vmatprep.subr.bf16.mxu0 0
        %900 = vmatpush1.bf16.msra.mxu0 %v885
        %901 = vmatprep.subr.bf16.mxu0 0
        %902 = vmatpush1.bf16.msra.mxu0 0
        %903 = vmatprep.subr.bf16.mxu0 0
        %904 = vmatpush1.bf16.msra.mxu0 0
        %905 = vmatprep.subr.bf16.mxu0 0
        %906 = vmatpush1.bf16.msra.mxu0 0
        %907 = vmatprep.subr.bf16.mxu0 0
        %908 = vmatpush1.bf16.msra.mxu0 0
        %909 = vmatprep.subr.bf16.mxu0 0
        %910 = vmatpush1.bf16.msra.mxu0 0
        %911 = vmatprep.subr.bf16.mxu0 0
        %912 = vmatpush1.bf16.msra.mxu0 0
        %913 = vmatprep.subr.bf16.mxu0 0
        %914 = vmatpush1.bf16.msra.mxu0 0
        %915 = vmatprep.subr.bf16.mxu0 0
        %916 = vmatpush1.bf16.msra.mxu0 0
        %917 = vmatprep.subr.bf16.mxu0 0
        %918 = vmatpush1.bf16.msra.mxu0 0
        %919 = vmatprep.subr.bf16.mxu0 0
        %920 = vmatpush1.bf16.msra.mxu0 0
        %921 = vmatprep.subr.bf16.mxu0 0
        %922 = vmatpush1.bf16.msra.mxu0 0
        %923 = vmatprep.subr.bf16.mxu0 0
        %924 = vmatpush1.bf16.msra.mxu0 0
        %925 = vmatprep.mubr.bf16.mxu0 0
        %926 = vmatmul.mubr.bf16.gmra.mrb[0].mxu0 %v891
        %v927 = vpop.f32.mrb[0].mxu0
        %v928 = vadd.f32 %v861, %v927
        %v929 = vpop.f32.mrb[0].mxu0
        %v930 = vpop.f32.mrb[0].mxu0
        %v931 = vpop.f32.mrb[0].mxu0
        %932 = vdwg.mxu0
        %s933 = scalar_lea.vmem %s2, 128
        %v934 = vld [vmem:[%s933] sm:$0xf]
        %v935 = vld [vmem:[%s933 + $0x4] sm:$0xf]
        %v936 = vld [vmem:[%s933 + $0x8] sm:$0xf]
        %v937 = vld [vmem:[%s933 + $0xc] sm:$0xf]
        %v938 = vld [vmem:[%s933 + $0x10] sm:$0xf]
        %v939 = vld [vmem:[%s933 + $0x14] sm:$0xf]
        %v940 = vld [vmem:[%s933 + $0x18] sm:$0xf]
        %v941 = vld [vmem:[%s933 + $0x1c] sm:$0xf]
        %v950 = vunpack.c.l.b16 %v934
        %v951 = vunpack.c.l.b16 %v935
        %v952 = vunpack.c.l.b16 %v936
        %v953 = vunpack.c.l.b16 %v937
        %v954 = vunpack.c.l.b16 %v938
        %v955 = vunpack.c.l.b16 %v939
        %v956 = vunpack.c.l.b16 %v940
        %v957 = vunpack.c.l.b16 %v941
        %v958 = vpack.c.b16 %v951, %v950
        %v959 = vpack.c.b16 %v953, %v952
        %v960 = vpack.c.b16 %v955, %v954
        %v961 = vpack.c.b16 %v957, %v956
        %v967 = vsel %vm822, %v734, 0
        %969 = vmatprep.subr.bf16.mxu0 0
        %970 = vmatpush1.bf16.msra.mxu0 %v958
        %971 = vmatprep.subr.bf16.mxu0 0
        %972 = vmatpush1.bf16.msra.mxu0 %v959
        %973 = vmatprep.subr.bf16.mxu0 0
        %974 = vmatpush1.bf16.msra.mxu0 %v960
        %975 = vmatprep.subr.bf16.mxu0 0
        %976 = vmatpush1.bf16.msra.mxu0 %v961
        %977 = vmatprep.subr.bf16.mxu0 0
        %978 = vmatpush1.bf16.msra.mxu0 0
        %979 = vmatprep.subr.bf16.mxu0 0
        %980 = vmatpush1.bf16.msra.mxu0 0
        %981 = vmatprep.subr.bf16.mxu0 0
        %982 = vmatpush1.bf16.msra.mxu0 0
        %983 = vmatprep.subr.bf16.mxu0 0
        %984 = vmatpush1.bf16.msra.mxu0 0
        %985 = vmatprep.subr.bf16.mxu0 0
        %986 = vmatpush1.bf16.msra.mxu0 0
        %987 = vmatprep.subr.bf16.mxu0 0
        %988 = vmatpush1.bf16.msra.mxu0 0
        %989 = vmatprep.subr.bf16.mxu0 0
        %990 = vmatpush1.bf16.msra.mxu0 0
        %991 = vmatprep.subr.bf16.mxu0 0
        %992 = vmatpush1.bf16.msra.mxu0 0
        %993 = vmatprep.subr.bf16.mxu0 0
        %994 = vmatpush1.bf16.msra.mxu0 0
        %995 = vmatprep.subr.bf16.mxu0 0
        %996 = vmatpush1.bf16.msra.mxu0 0
        %997 = vmatprep.subr.bf16.mxu0 0
        %998 = vmatpush1.bf16.msra.mxu0 0
        %999 = vmatprep.subr.bf16.mxu0 0
        %1000 = vmatpush1.bf16.msra.mxu0 0
        %1001 = vmatprep.mubr.bf16.mxu0 0
        %1002 = vmatmul.mubr.bf16.gmra.mrb[0].mxu0 %v967
        %v1003 = vpop.f32.mrb[0].mxu0
        %v1004 = vadd.f32 0.0, %v1003
        %v1005 = vpop.f32.mrb[0].mxu0
        %v1006 = vpop.f32.mrb[0].mxu0
        %v1007 = vpop.f32.mrb[0].mxu0
        %1008 = vdwg.mxu0
        %v1009 = vadd.f32 %v928, %v1004
        %s1010 = scalar_lea.vmem %s2, 32
        %v1011 = vld [vmem:[%s1010] sm:$0xf]
        %v1012 = vld [vmem:[%s1010 + $0x4] sm:$0xf]
        %v1013 = vld [vmem:[%s1010 + $0x8] sm:$0xf]
        %v1014 = vld [vmem:[%s1010 + $0xc] sm:$0xf]
        %v1015 = vld [vmem:[%s1010 + $0x10] sm:$0xf]
        %v1016 = vld [vmem:[%s1010 + $0x14] sm:$0xf]
        %v1017 = vld [vmem:[%s1010 + $0x18] sm:$0xf]
        %v1018 = vld [vmem:[%s1010 + $0x1c] sm:$0xf]
        %s1019 = scalar_lea.vmem %s2, 96
        %v1020 = vld [vmem:[%s1019] sm:$0xf]
        %v1021 = vld [vmem:[%s1019 + $0x4] sm:$0xf]
        %v1022 = vld [vmem:[%s1019 + $0x8] sm:$0xf]
        %v1023 = vld [vmem:[%s1019 + $0xc] sm:$0xf]
        %v1024 = vld [vmem:[%s1019 + $0x10] sm:$0xf]
        %v1025 = vld [vmem:[%s1019 + $0x14] sm:$0xf]
        %v1026 = vld [vmem:[%s1019 + $0x18] sm:$0xf]
        %v1027 = vld [vmem:[%s1019 + $0x1c] sm:$0xf]
        %v1036 = vunpack.c.l.b16 %v1020
        %v1037 = vunpack.c.l.b16 %v1021
        %v1038 = vunpack.c.l.b16 %v1022
        %v1039 = vunpack.c.l.b16 %v1023
        %v1040 = vunpack.c.l.b16 %v1024
        %v1041 = vunpack.c.l.b16 %v1025
        %v1042 = vunpack.c.l.b16 %v1026
        %v1043 = vunpack.c.l.b16 %v1027
        %v1044 = vpack.c.b16 %v1037, %v1036
        %v1045 = vpack.c.b16 %v1039, %v1038
        %v1046 = vpack.c.b16 %v1041, %v1040
        %v1047 = vpack.c.b16 %v1043, %v1042
        %1052 = vmatprep.subr.bf16.mxu0 0
        %1053 = vmatpush1.bf16.msra.mxu0 %v1044
        %1054 = vmatprep.subr.bf16.mxu0 0
        %1055 = vmatpush1.bf16.msra.mxu0 %v1045
        %1056 = vmatprep.subr.bf16.mxu0 0
        %1057 = vmatpush1.bf16.msra.mxu0 %v1046
        %1058 = vmatprep.subr.bf16.mxu0 0
        %1059 = vmatpush1.bf16.msra.mxu0 %v1047
        %1060 = vmatprep.subr.bf16.mxu0 0
        %1061 = vmatpush1.bf16.msra.mxu0 0
        %1062 = vmatprep.subr.bf16.mxu0 0
        %1063 = vmatpush1.bf16.msra.mxu0 0
        %1064 = vmatprep.subr.bf16.mxu0 0
        %1065 = vmatpush1.bf16.msra.mxu0 0
        %1066 = vmatprep.subr.bf16.mxu0 0
        %1067 = vmatpush1.bf16.msra.mxu0 0
        %1068 = vmatprep.subr.bf16.mxu0 0
        %1069 = vmatpush1.bf16.msra.mxu0 0
        %1070 = vmatprep.subr.bf16.mxu0 0
        %1071 = vmatpush1.bf16.msra.mxu0 0
        %1072 = vmatprep.subr.bf16.mxu0 0
        %1073 = vmatpush1.bf16.msra.mxu0 0
        %1074 = vmatprep.subr.bf16.mxu0 0
        %1075 = vmatpush1.bf16.msra.mxu0 0
        %1076 = vmatprep.subr.bf16.mxu0 0
        %1077 = vmatpush1.bf16.msra.mxu0 0
        %1078 = vmatprep.subr.bf16.mxu0 0
        %1079 = vmatpush1.bf16.msra.mxu0 0
        %1080 = vmatprep.subr.bf16.mxu0 0
        %1081 = vmatpush1.bf16.msra.mxu0 0
        %1082 = vmatprep.subr.bf16.mxu0 0
        %1083 = vmatpush1.bf16.msra.mxu0 0
        %1084 = vmatprep.mubr.bf16.mxu0 0
        %1085 = vmatmul.mubr.bf16.gmra.mrb[0].mxu0 %v824
        %v1086 = vpop.f32.mrb[0].mxu0
        %v1087 = vadd.f32 0.0, %v1086
        %v1088 = vpop.f32.mrb[0].mxu0
        %v1089 = vpop.f32.mrb[0].mxu0
        %v1090 = vpop.f32.mrb[0].mxu0
        %1091 = vdwg.mxu0
        %v1100 = vunpack.c.l.b16 %v1011
        %v1101 = vunpack.c.l.b16 %v1012
        %v1102 = vunpack.c.l.b16 %v1013
        %v1103 = vunpack.c.l.b16 %v1014
        %v1104 = vunpack.c.l.b16 %v1015
        %v1105 = vunpack.c.l.b16 %v1016
        %v1106 = vunpack.c.l.b16 %v1017
        %v1107 = vunpack.c.l.b16 %v1018
        %v1108 = vpack.c.b16 %v1101, %v1100
        %v1109 = vpack.c.b16 %v1103, %v1102
        %v1110 = vpack.c.b16 %v1105, %v1104
        %v1111 = vpack.c.b16 %v1107, %v1106
        %1116 = vmatprep.subr.bf16.mxu0 0
        %1117 = vmatpush1.bf16.msra.mxu0 %v1108
        %1118 = vmatprep.subr.bf16.mxu0 0
        %1119 = vmatpush1.bf16.msra.mxu0 %v1109
        %1120 = vmatprep.subr.bf16.mxu0 0
        %1121 = vmatpush1.bf16.msra.mxu0 %v1110
        %1122 = vmatprep.subr.bf16.mxu0 0
        %1123 = vmatpush1.bf16.msra.mxu0 %v1111
        %1124 = vmatprep.subr.bf16.mxu0 0
        %1125 = vmatpush1.bf16.msra.mxu0 0
        %1126 = vmatprep.subr.bf16.mxu0 0
        %1127 = vmatpush1.bf16.msra.mxu0 0
        %1128 = vmatprep.subr.bf16.mxu0 0
        %1129 = vmatpush1.bf16.msra.mxu0 0
        %1130 = vmatprep.subr.bf16.mxu0 0
        %1131 = vmatpush1.bf16.msra.mxu0 0
        %1132 = vmatprep.subr.bf16.mxu0 0
        %1133 = vmatpush1.bf16.msra.mxu0 0
        %1134 = vmatprep.subr.bf16.mxu0 0
        %1135 = vmatpush1.bf16.msra.mxu0 0
        %1136 = vmatprep.subr.bf16.mxu0 0
        %1137 = vmatpush1.bf16.msra.mxu0 0
        %1138 = vmatprep.subr.bf16.mxu0 0
        %1139 = vmatpush1.bf16.msra.mxu0 0
        %1140 = vmatprep.subr.bf16.mxu0 0
        %1141 = vmatpush1.bf16.msra.mxu0 0
        %1142 = vmatprep.subr.bf16.mxu0 0
        %1143 = vmatpush1.bf16.msra.mxu0 0
        %1144 = vmatprep.subr.bf16.mxu0 0
        %1145 = vmatpush1.bf16.msra.mxu0 0
        %1146 = vmatprep.subr.bf16.mxu0 0
        %1147 = vmatpush1.bf16.msra.mxu0 0
        %1148 = vmatprep.mubr.bf16.mxu0 0
        %1149 = vmatmul.mubr.bf16.gmra.mrb[0].mxu0 %v891
        %v1150 = vpop.f32.mrb[0].mxu0
        %v1151 = vadd.f32 %v1087, %v1150
        %v1152 = vpop.f32.mrb[0].mxu0
        %v1153 = vpop.f32.mrb[0].mxu0
        %v1154 = vpop.f32.mrb[0].mxu0
        %1155 = vdwg.mxu0
        %s1156 = scalar_lea.vmem %s2, 160
        %v1157 = vld [vmem:[%s1156] sm:$0xf]
        %v1158 = vld [vmem:[%s1156 + $0x4] sm:$0xf]
        %v1159 = vld [vmem:[%s1156 + $0x8] sm:$0xf]
        %v1160 = vld [vmem:[%s1156 + $0xc] sm:$0xf]
        %v1161 = vld [vmem:[%s1156 + $0x10] sm:$0xf]
        %v1162 = vld [vmem:[%s1156 + $0x14] sm:$0xf]
        %v1163 = vld [vmem:[%s1156 + $0x18] sm:$0xf]
        %v1164 = vld [vmem:[%s1156 + $0x1c] sm:$0xf]
        %v1173 = vunpack.c.l.b16 %v1157
        %v1174 = vunpack.c.l.b16 %v1158
        %v1175 = vunpack.c.l.b16 %v1159
        %v1176 = vunpack.c.l.b16 %v1160
        %v1177 = vunpack.c.l.b16 %v1161
        %v1178 = vunpack.c.l.b16 %v1162
        %v1179 = vunpack.c.l.b16 %v1163
        %v1180 = vunpack.c.l.b16 %v1164
        %v1181 = vpack.c.b16 %v1174, %v1173
        %v1182 = vpack.c.b16 %v1176, %v1175
        %v1183 = vpack.c.b16 %v1178, %v1177
        %v1184 = vpack.c.b16 %v1180, %v1179
        %1189 = vmatprep.subr.bf16.mxu0 0
        %1190 = vmatpush1.bf16.msra.mxu0 %v1181
        %1191 = vmatprep.subr.bf16.mxu0 0
        %1192 = vmatpush1.bf16.msra.mxu0 %v1182
        %1193 = vmatprep.subr.bf16.mxu0 0
        %1194 = vmatpush1.bf16.msra.mxu0 %v1183
        %1195 = vmatprep.subr.bf16.mxu0 0
        %1196 = vmatpush1.bf16.msra.mxu0 %v1184
        %1197 = vmatprep.subr.bf16.mxu0 0
        %1198 = vmatpush1.bf16.msra.mxu0 0
        %1199 = vmatprep.subr.bf16.mxu0 0
        %1200 = vmatpush1.bf16.msra.mxu0 0
        %1201 = vmatprep.subr.bf16.mxu0 0
        %1202 = vmatpush1.bf16.msra.mxu0 0
        %1203 = vmatprep.subr.bf16.mxu0 0
        %1204 = vmatpush1.bf16.msra.mxu0 0
        %1205 = vmatprep.subr.bf16.mxu0 0
        %1206 = vmatpush1.bf16.msra.mxu0 0
        %1207 = vmatprep.subr.bf16.mxu0 0
        %1208 = vmatpush1.bf16.msra.mxu0 0
        %1209 = vmatprep.subr.bf16.mxu0 0
        %1210 = vmatpush1.bf16.msra.mxu0 0
        %1211 = vmatprep.subr.bf16.mxu0 0
        %1212 = vmatpush1.bf16.msra.mxu0 0
        %1213 = vmatprep.subr.bf16.mxu0 0
        %1214 = vmatpush1.bf16.msra.mxu0 0
        %1215 = vmatprep.subr.bf16.mxu0 0
        %1216 = vmatpush1.bf16.msra.mxu0 0
        %1217 = vmatprep.subr.bf16.mxu0 0
        %1218 = vmatpush1.bf16.msra.mxu0 0
        %1219 = vmatprep.subr.bf16.mxu0 0
        %1220 = vmatpush1.bf16.msra.mxu0 0
        %1221 = vmatprep.mubr.bf16.mxu0 0
        %1222 = vmatmul.mubr.bf16.gmra.mrb[0].mxu0 %v967
        %v1223 = vpop.f32.mrb[0].mxu0
        %v1224 = vadd.f32 0.0, %v1223
        %v1225 = vpop.f32.mrb[0].mxu0
        %v1226 = vpop.f32.mrb[0].mxu0
        %v1227 = vpop.f32.mrb[0].mxu0
        %1228 = vdwg.mxu0
        %v1229 = vadd.f32 %v1151, %v1224
        %v1230 = vmax.f32 %v1009, %v1229
        %1231 = vmatprep.subr.bf16.mxu0 0
        %1232 = vmatpush1.bf16.msra.mxu0 %v814
        %1233 = vmatprep.subr.bf16.mxu0 0
        %1234 = vmatpush1.bf16.msra.mxu0 %v815
        %1235 = vmatprep.subr.bf16.mxu0 0
        %1236 = vmatpush1.bf16.msra.mxu0 %v816
        %1237 = vmatprep.subr.bf16.mxu0 0
        %1238 = vmatpush1.bf16.msra.mxu0 %v817
        %1239 = vmatprep.subr.bf16.mxu0 0
        %1240 = vmatpush1.bf16.msra.mxu0 0
        %1241 = vmatprep.subr.bf16.mxu0 0
        %1242 = vmatpush1.bf16.msra.mxu0 0
        %1243 = vmatprep.subr.bf16.mxu0 0
        %1244 = vmatpush1.bf16.msra.mxu0 0
        %1245 = vmatprep.subr.bf16.mxu0 0
        %1246 = vmatpush1.bf16.msra.mxu0 0
        %1247 = vmatprep.subr.bf16.mxu0 0
        %1248 = vmatpush1.bf16.msra.mxu0 0
        %1249 = vmatprep.subr.bf16.mxu0 0
        %1250 = vmatpush1.bf16.msra.mxu0 0
        %1251 = vmatprep.subr.bf16.mxu0 0
        %1252 = vmatpush1.bf16.msra.mxu0 0
        %1253 = vmatprep.subr.bf16.mxu0 0
        %1254 = vmatpush1.bf16.msra.mxu0 0
        %1255 = vmatprep.subr.bf16.mxu0 0
        %1256 = vmatpush1.bf16.msra.mxu0 0
        %1257 = vmatprep.subr.bf16.mxu0 0
        %1258 = vmatpush1.bf16.msra.mxu0 0
        %1259 = vmatprep.subr.bf16.mxu0 0
        %1260 = vmatpush1.bf16.msra.mxu0 0
        %1261 = vmatprep.subr.bf16.mxu0 0
        %1262 = vmatpush1.bf16.msra.mxu0 0
        %1263 = vmatprep.mubr.bf16.mxu0 0
        %1264 = vmatmul.mubr.bf16.gmra.mrb[0].mxu0 %v967
        %v1265 = vpop.f32.mrb[0].mxu0
        %v1266 = vadd.f32 0.0, %v1265
        %v1267 = vpop.f32.mrb[0].mxu0
        %v1268 = vpop.f32.mrb[0].mxu0
        %v1269 = vpop.f32.mrb[0].mxu0
        %1270 = vdwg.mxu0
        %1271 = vmatprep.subr.bf16.mxu0 0
        %1272 = vmatpush1.bf16.msra.mxu0 %v882
        %1273 = vmatprep.subr.bf16.mxu0 0
        %1274 = vmatpush1.bf16.msra.mxu0 %v883
        %1275 = vmatprep.subr.bf16.mxu0 0
        %1276 = vmatpush1.bf16.msra.mxu0 %v884
        %1277 = vmatprep.subr.bf16.mxu0 0
        %1278 = vmatpush1.bf16.msra.mxu0 %v885
        %1279 = vmatprep.subr.bf16.mxu0 0
        %1280 = vmatpush1.bf16.msra.mxu0 0
        %1281 = vmatprep.subr.bf16.mxu0 0
        %1282 = vmatpush1.bf16.msra.mxu0 0
        %1283 = vmatprep.subr.bf16.mxu0 0
        %1284 = vmatpush1.bf16.msra.mxu0 0
        %1285 = vmatprep.subr.bf16.mxu0 0
        %1286 = vmatpush1.bf16.msra.mxu0 0
        %1287 = vmatprep.subr.bf16.mxu0 0
        %1288 = vmatpush1.bf16.msra.mxu0 0
        %1289 = vmatprep.subr.bf16.mxu0 0
        %1290 = vmatpush1.bf16.msra.mxu0 0
        %1291 = vmatprep.subr.bf16.mxu0 0
        %1292 = vmatpush1.bf16.msra.mxu0 0
        %1293 = vmatprep.subr.bf16.mxu0 0
        %1294 = vmatpush1.bf16.msra.mxu0 0
        %1295 = vmatprep.subr.bf16.mxu0 0
        %1296 = vmatpush1.bf16.msra.mxu0 0
        %1297 = vmatprep.subr.bf16.mxu0 0
        %1298 = vmatpush1.bf16.msra.mxu0 0
        %1299 = vmatprep.subr.bf16.mxu0 0
        %1300 = vmatpush1.bf16.msra.mxu0 0
        %1301 = vmatprep.subr.bf16.mxu0 0
        %1302 = vmatpush1.bf16.msra.mxu0 0
        %1303 = vmatprep.mubr.bf16.mxu0 0
        %1304 = vmatmul.mubr.bf16.gmra.mrb[0].mxu0 %v824
        %v1305 = vpop.f32.mrb[0].mxu0
        %v1306 = vadd.f32 %v1266, %v1305
        %v1307 = vpop.f32.mrb[0].mxu0
        %v1308 = vpop.f32.mrb[0].mxu0
        %v1309 = vpop.f32.mrb[0].mxu0
        %1310 = vdwg.mxu0
        %v1312 = vsel %vm822, %v780, 0
        %1314 = vmatprep.subr.bf16.mxu0 0
        %1315 = vmatpush1.bf16.msra.mxu0 %v958
        %1316 = vmatprep.subr.bf16.mxu0 0
        %1317 = vmatpush1.bf16.msra.mxu0 %v959
        %1318 = vmatprep.subr.bf16.mxu0 0
        %1319 = vmatpush1.bf16.msra.mxu0 %v960
        %1320 = vmatprep.subr.bf16.mxu0 0
        %1321 = vmatpush1.bf16.msra.mxu0 %v961
        %1322 = vmatprep.subr.bf16.mxu0 0
        %1323 = vmatpush1.bf16.msra.mxu0 0
        %1324 = vmatprep.subr.bf16.mxu0 0
        %1325 = vmatpush1.bf16.msra.mxu0 0
        %1326 = vmatprep.subr.bf16.mxu0 0
        %1327 = vmatpush1.bf16.msra.mxu0 0
        %1328 = vmatprep.subr.bf16.mxu0 0
        %1329 = vmatpush1.bf16.msra.mxu0 0
        %1330 = vmatprep.subr.bf16.mxu0 0
        %1331 = vmatpush1.bf16.msra.mxu0 0
        %1332 = vmatprep.subr.bf16.mxu0 0
        %1333 = vmatpush1.bf16.msra.mxu0 0
        %1334 = vmatprep.subr.bf16.mxu0 0
        %1335 = vmatpush1.bf16.msra.mxu0 0
        %1336 = vmatprep.subr.bf16.mxu0 0
        %1337 = vmatpush1.bf16.msra.mxu0 0
        %1338 = vmatprep.subr.bf16.mxu0 0
        %1339 = vmatpush1.bf16.msra.mxu0 0
        %1340 = vmatprep.subr.bf16.mxu0 0
        %1341 = vmatpush1.bf16.msra.mxu0 0
        %1342 = vmatprep.subr.bf16.mxu0 0
        %1343 = vmatpush1.bf16.msra.mxu0 0
        %1344 = vmatprep.subr.bf16.mxu0 0
        %1345 = vmatpush1.bf16.msra.mxu0 0
        %1346 = vmatprep.mubr.bf16.mxu0 0
        %1347 = vmatmul.mubr.bf16.gmra.mrb[0].mxu0 %v1312
        %v1348 = vpop.f32.mrb[0].mxu0
        %v1349 = vadd.f32 0.0, %v1348
        %v1350 = vpop.f32.mrb[0].mxu0
        %v1351 = vpop.f32.mrb[0].mxu0
        %v1352 = vpop.f32.mrb[0].mxu0
        %1353 = vdwg.mxu0
        %v1354 = vadd.f32 %v1306, %v1349
        %v1355 = vmax.f32 %v1230, %v1354
        %1356 = vmatprep.subr.bf16.mxu0 0
        %1357 = vmatpush1.bf16.msra.mxu0 %v1044
        %1358 = vmatprep.subr.bf16.mxu0 0
        %1359 = vmatpush1.bf16.msra.mxu0 %v1045
        %1360 = vmatprep.subr.bf16.mxu0 0
        %1361 = vmatpush1.bf16.msra.mxu0 %v1046
        %1362 = vmatprep.subr.bf16.mxu0 0
        %1363 = vmatpush1.bf16.msra.mxu0 %v1047
        %1364 = vmatprep.subr.bf16.mxu0 0
        %1365 = vmatpush1.bf16.msra.mxu0 0
        %1366 = vmatprep.subr.bf16.mxu0 0
        %1367 = vmatpush1.bf16.msra.mxu0 0
        %1368 = vmatprep.subr.bf16.mxu0 0
        %1369 = vmatpush1.bf16.msra.mxu0 0
        %1370 = vmatprep.subr.bf16.mxu0 0
        %1371 = vmatpush1.bf16.msra.mxu0 0
        %1372 = vmatprep.subr.bf16.mxu0 0
        %1373 = vmatpush1.bf16.msra.mxu0 0
        %1374 = vmatprep.subr.bf16.mxu0 0
        %1375 = vmatpush1.bf16.msra.mxu0 0
        %1376 = vmatprep.subr.bf16.mxu0 0
        %1377 = vmatpush1.bf16.msra.mxu0 0
        %1378 = vmatprep.subr.bf16.mxu0 0
        %1379 = vmatpush1.bf16.msra.mxu0 0
        %1380 = vmatprep.subr.bf16.mxu0 0
        %1381 = vmatpush1.bf16.msra.mxu0 0
        %1382 = vmatprep.subr.bf16.mxu0 0
        %1383 = vmatpush1.bf16.msra.mxu0 0
        %1384 = vmatprep.subr.bf16.mxu0 0
        %1385 = vmatpush1.bf16.msra.mxu0 0
        %1386 = vmatprep.subr.bf16.mxu0 0
        %1387 = vmatpush1.bf16.msra.mxu0 0
        %1388 = vmatprep.mubr.bf16.mxu0 0
        %1389 = vmatmul.mubr.bf16.gmra.mrb[0].mxu0 %v967
        %v1390 = vpop.f32.mrb[0].mxu0
        %v1391 = vadd.f32 0.0, %v1390
        %v1392 = vpop.f32.mrb[0].mxu0
        %v1393 = vpop.f32.mrb[0].mxu0
        %v1394 = vpop.f32.mrb[0].mxu0
        %1395 = vdwg.mxu0
        %1396 = vmatprep.subr.bf16.mxu0 0
        %1397 = vmatpush1.bf16.msra.mxu0 %v1108
        %1398 = vmatprep.subr.bf16.mxu0 0
        %1399 = vmatpush1.bf16.msra.mxu0 %v1109
        %1400 = vmatprep.subr.bf16.mxu0 0
        %1401 = vmatpush1.bf16.msra.mxu0 %v1110
        %1402 = vmatprep.subr.bf16.mxu0 0
        %1403 = vmatpush1.bf16.msra.mxu0 %v1111
        %1404 = vmatprep.subr.bf16.mxu0 0
        %1405 = vmatpush1.bf16.msra.mxu0 0
        %1406 = vmatprep.subr.bf16.mxu0 0
        %1407 = vmatpush1.bf16.msra.mxu0 0
        %1408 = vmatprep.subr.bf16.mxu0 0
        %1409 = vmatpush1.bf16.msra.mxu0 0
        %1410 = vmatprep.subr.bf16.mxu0 0
        %1411 = vmatpush1.bf16.msra.mxu0 0
        %1412 = vmatprep.subr.bf16.mxu0 0
        %1413 = vmatpush1.bf16.msra.mxu0 0
        %1414 = vmatprep.subr.bf16.mxu0 0
        %1415 = vmatpush1.bf16.msra.mxu0 0
        %1416 = vmatprep.subr.bf16.mxu0 0
        %1417 = vmatpush1.bf16.msra.mxu0 0
        %1418 = vmatprep.subr.bf16.mxu0 0
        %1419 = vmatpush1.bf16.msra.mxu0 0
        %1420 = vmatprep.subr.bf16.mxu0 0
        %1421 = vmatpush1.bf16.msra.mxu0 0
        %1422 = vmatprep.subr.bf16.mxu0 0
        %1423 = vmatpush1.bf16.msra.mxu0 0
        %1424 = vmatprep.subr.bf16.mxu0 0
        %1425 = vmatpush1.bf16.msra.mxu0 0
        %1426 = vmatprep.subr.bf16.mxu0 0
        %1427 = vmatpush1.bf16.msra.mxu0 0
        %1428 = vmatprep.mubr.bf16.mxu0 0
        %1429 = vmatmul.mubr.bf16.gmra.mrb[0].mxu0 %v824
        %v1430 = vpop.f32.mrb[0].mxu0
        %v1431 = vadd.f32 %v1391, %v1430
        %v1432 = vpop.f32.mrb[0].mxu0
        %v1433 = vpop.f32.mrb[0].mxu0
        %v1434 = vpop.f32.mrb[0].mxu0
        %1435 = vdwg.mxu0
        %1436 = vmatprep.subr.bf16.mxu0 0
        %1437 = vmatpush1.bf16.msra.mxu0 %v1181
        %1438 = vmatprep.subr.bf16.mxu0 0
        %1439 = vmatpush1.bf16.msra.mxu0 %v1182
        %1440 = vmatprep.subr.bf16.mxu0 0
        %1441 = vmatpush1.bf16.msra.mxu0 %v1183
        %1442 = vmatprep.subr.bf16.mxu0 0
        %1443 = vmatpush1.bf16.msra.mxu0 %v1184
        %1444 = vmatprep.subr.bf16.mxu0 0
        %1445 = vmatpush1.bf16.msra.mxu0 0
        %1446 = vmatprep.subr.bf16.mxu0 0
        %1447 = vmatpush1.bf16.msra.mxu0 0
        %1448 = vmatprep.subr.bf16.mxu0 0
        %1449 = vmatpush1.bf16.msra.mxu0 0
        %1450 = vmatprep.subr.bf16.mxu0 0
        %1451 = vmatpush1.bf16.msra.mxu0 0
        %1452 = vmatprep.subr.bf16.mxu0 0
        %1453 = vmatpush1.bf16.msra.mxu0 0
        %1454 = vmatprep.subr.bf16.mxu0 0
        %1455 = vmatpush1.bf16.msra.mxu0 0
        %1456 = vmatprep.subr.bf16.mxu0 0
        %1457 = vmatpush1.bf16.msra.mxu0 0
        %1458 = vmatprep.subr.bf16.mxu0 0
        %1459 = vmatpush1.bf16.msra.mxu0 0
        %1460 = vmatprep.subr.bf16.mxu0 0
        %1461 = vmatpush1.bf16.msra.mxu0 0
        %1462 = vmatprep.subr.bf16.mxu0 0
        %1463 = vmatpush1.bf16.msra.mxu0 0
        %1464 = vmatprep.subr.bf16.mxu0 0
        %1465 = vmatpush1.bf16.msra.mxu0 0
        %1466 = vmatprep.subr.bf16.mxu0 0
        %1467 = vmatpush1.bf16.msra.mxu0 0
        %1468 = vmatprep.mubr.bf16.mxu0 0
        %1469 = vmatmul.mubr.bf16.gmra.mrb[0].mxu0 %v1312
        %v1470 = vpop.f32.mrb[0].mxu0
        %v1471 = vadd.f32 0.0, %v1470
        %v1472 = vpop.f32.mrb[0].mxu0
        %v1473 = vpop.f32.mrb[0].mxu0
        %v1474 = vpop.f32.mrb[0].mxu0
        %1475 = vdwg.mxu0
        %v1476 = vadd.f32 %v1431, %v1471
        %v1477 = vmax.f32 %v1355, %v1476
        %v1478 = vld [vmem:[%s3] sm:$0x1]
        %v1480 = vlaneseq
        %v1481 = vshrl.u32 %v1480, 7
        %v1482 = vsub.s32 0, %v1481
        %v1483 = vrot.slane %v1478, %v1482
        %v1485 = vadd.f32 %v1477, %v1483
        %v1486 = vmax.f32 %v1485, 0.0
        %v1487 = vpack.c.bf16 %v1486, %v1486
        %v1488 = vld [vmem:[#allocation5] sm:$0x3]
        %vm1489 = vcmask 64512
        %v1491 = vsel %vm1489, %v1488, 0
        %vm1493 = vcmask 1043456
        %v1495 = vsel %vm1493, %v1487, 0
        %1497 = vmatprep.subr.bf16.mxu0 0
        %1498 = vmatpush1.bf16.msra.mxu0 %v1495
        %1499 = vmatprep.subr.bf16.mxu0 0
        %1500 = vmatpush1.bf16.msra.mxu0 0
        %1501 = vmatprep.subr.bf16.mxu0 0
        %1502 = vmatpush1.bf16.msra.mxu0 0
        %1503 = vmatprep.subr.bf16.mxu0 0
        %1504 = vmatpush1.bf16.msra.mxu0 0
        %1505 = vmatprep.subr.bf16.mxu0 0
        %1506 = vmatpush1.bf16.msra.mxu0 0
        %1507 = vmatprep.subr.bf16.mxu0 0
        %1508 = vmatpush1.bf16.msra.mxu0 0
        %1509 = vmatprep.subr.bf16.mxu0 0
        %1510 = vmatpush1.bf16.msra.mxu0 0
        %1511 = vmatprep.subr.bf16.mxu0 0
        %1512 = vmatpush1.bf16.msra.mxu0 0
        %1513 = vmatprep.subr.bf16.mxu0 0
        %1514 = vmatpush1.bf16.msra.mxu0 0
        %1515 = vmatprep.subr.bf16.mxu0 0
        %1516 = vmatpush1.bf16.msra.mxu0 0
        %1517 = vmatprep.subr.bf16.mxu0 0
        %1518 = vmatpush1.bf16.msra.mxu0 0
        %1519 = vmatprep.subr.bf16.mxu0 0
        %1520 = vmatpush1.bf16.msra.mxu0 0
        %1521 = vmatprep.subr.bf16.mxu0 0
        %1522 = vmatpush1.bf16.msra.mxu0 0
        %1523 = vmatprep.subr.bf16.mxu0 0
        %1524 = vmatpush1.bf16.msra.mxu0 0
        %1525 = vmatprep.subr.bf16.mxu0 0
        %1526 = vmatpush1.bf16.msra.mxu0 0
        %1527 = vmatprep.subr.bf16.mxu0 0
        %1528 = vmatpush1.bf16.msra.mxu0 0
        %1529 = vmatprep.mubr.bf16.mxu0 0
        %1530 = vmatmul.mubr.bf16.gmra.mrb[0].mxu0 %v1491
        %v1531 = vpop.f32.mrb[0].mxu0
        %v1532 = vadd.f32 0.0, %v1531
        %v1533 = vpop.f32.mrb[0].mxu0
        %v1534 = vpop.f32.mrb[0].mxu0
        %v1535 = vpop.f32.mrb[0].mxu0
        %1536 = vdwg.mxu0
        %v1537 = vpack.c.bf16 %v1532, %v1532
        %s1538 = scalar_lea.vmem [#allocation5], 2
        %v1539 = vld [vmem:[%s1538] sm:$0x3]
        %v1541 = vsel %vm1489, %v1539, 0
        %1543 = vmatprep.subr.bf16.mxu0 0
        %1544 = vmatpush1.bf16.msra.mxu0 %v1495
        %1545 = vmatprep.subr.bf16.mxu0 0
        %1546 = vmatpush1.bf16.msra.mxu0 0
        %1547 = vmatprep.subr.bf16.mxu0 0
        %1548 = vmatpush1.bf16.msra.mxu0 0
        %1549 = vmatprep.subr.bf16.mxu0 0
        %1550 = vmatpush1.bf16.msra.mxu0 0
        %1551 = vmatprep.subr.bf16.mxu0 0
        %1552 = vmatpush1.bf16.msra.mxu0 0
        %1553 = vmatprep.subr.bf16.mxu0 0
        %1554 = vmatpush1.bf16.msra.mxu0 0
        %1555 = vmatprep.subr.bf16.mxu0 0
        %1556 = vmatpush1.bf16.msra.mxu0 0
        %1557 = vmatprep.subr.bf16.mxu0 0
        %1558 = vmatpush1.bf16.msra.mxu0 0
        %1559 = vmatprep.subr.bf16.mxu0 0
        %1560 = vmatpush1.bf16.msra.mxu0 0
        %1561 = vmatprep.subr.bf16.mxu0 0
        %1562 = vmatpush1.bf16.msra.mxu0 0
        %1563 = vmatprep.subr.bf16.mxu0 0
        %1564 = vmatpush1.bf16.msra.mxu0 0
        %1565 = vmatprep.subr.bf16.mxu0 0
        %1566 = vmatpush1.bf16.msra.mxu0 0
        %1567 = vmatprep.subr.bf16.mxu0 0
        %1568 = vmatpush1.bf16.msra.mxu0 0
        %1569 = vmatprep.subr.bf16.mxu0 0
        %1570 = vmatpush1.bf16.msra.mxu0 0
        %1571 = vmatprep.subr.bf16.mxu0 0
        %1572 = vmatpush1.bf16.msra.mxu0 0
        %1573 = vmatprep.subr.bf16.mxu0 0
        %1574 = vmatpush1.bf16.msra.mxu0 0
        %1575 = vmatprep.mubr.bf16.mxu0 0
        %1576 = vmatmul.mubr.bf16.gmra.mrb[0].mxu0 %v1541
        %v1577 = vpop.f32.mrb[0].mxu0
        %v1578 = vadd.f32 0.0, %v1577
        %v1579 = vpop.f32.mrb[0].mxu0
        %v1580 = vpop.f32.mrb[0].mxu0
        %v1581 = vpop.f32.mrb[0].mxu0
        %1582 = vdwg.mxu0
        %v1583 = vpack.c.bf16 %v1578, %v1578
        %s1584 = scalar_lea.vmem [#allocation5], 4
        %v1585 = vld [vmem:[%s1584] sm:$0x3]
        %v1587 = vsel %vm1489, %v1585, 0
        %1589 = vmatprep.subr.bf16.mxu0 0
        %1590 = vmatpush1.bf16.msra.mxu0 %v1495
        %1591 = vmatprep.subr.bf16.mxu0 0
        %1592 = vmatpush1.bf16.msra.mxu0 0
        %1593 = vmatprep.subr.bf16.mxu0 0
        %1594 = vmatpush1.bf16.msra.mxu0 0
        %1595 = vmatprep.subr.bf16.mxu0 0
        %1596 = vmatpush1.bf16.msra.mxu0 0
        %1597 = vmatprep.subr.bf16.mxu0 0
        %1598 = vmatpush1.bf16.msra.mxu0 0
        %1599 = vmatprep.subr.bf16.mxu0 0
        %1600 = vmatpush1.bf16.msra.mxu0 0
        %1601 = vmatprep.subr.bf16.mxu0 0
        %1602 = vmatpush1.bf16.msra.mxu0 0
        %1603 = vmatprep.subr.bf16.mxu0 0
        %1604 = vmatpush1.bf16.msra.mxu0 0
        %1605 = vmatprep.subr.bf16.mxu0 0
        %1606 = vmatpush1.bf16.msra.mxu0 0
        %1607 = vmatprep.subr.bf16.mxu0 0
        %1608 = vmatpush1.bf16.msra.mxu0 0
        %1609 = vmatprep.subr.bf16.mxu0 0
        %1610 = vmatpush1.bf16.msra.mxu0 0
        %1611 = vmatprep.subr.bf16.mxu0 0
        %1612 = vmatpush1.bf16.msra.mxu0 0
        %1613 = vmatprep.subr.bf16.mxu0 0
        %1614 = vmatpush1.bf16.msra.mxu0 0
        %1615 = vmatprep.subr.bf16.mxu0 0
        %1616 = vmatpush1.bf16.msra.mxu0 0
        %1617 = vmatprep.subr.bf16.mxu0 0
        %1618 = vmatpush1.bf16.msra.mxu0 0
        %1619 = vmatprep.subr.bf16.mxu0 0
        %1620 = vmatpush1.bf16.msra.mxu0 0
        %1621 = vmatprep.mubr.bf16.mxu0 0
        %1622 = vmatmul.mubr.bf16.gmra.mrb[0].mxu0 %v1587
        %v1623 = vpop.f32.mrb[0].mxu0
        %v1624 = vadd.f32 0.0, %v1623
        %v1625 = vpop.f32.mrb[0].mxu0
        %v1626 = vpop.f32.mrb[0].mxu0
        %v1627 = vpop.f32.mrb[0].mxu0
        %1628 = vdwg.mxu0
        %v1629 = vpack.c.bf16 %v1624, %v1624
        %s1630 = scalar_lea.vmem [#allocation5], 6
        %v1631 = vld [vmem:[%s1630] sm:$0x3]
        %v1633 = vsel %vm1489, %v1631, 0
        %1635 = vmatprep.subr.bf16.mxu0 0
        %1636 = vmatpush1.bf16.msra.mxu0 %v1495
        %1637 = vmatprep.subr.bf16.mxu0 0
        %1638 = vmatpush1.bf16.msra.mxu0 0
        %1639 = vmatprep.subr.bf16.mxu0 0
        %1640 = vmatpush1.bf16.msra.mxu0 0
        %1641 = vmatprep.subr.bf16.mxu0 0
        %1642 = vmatpush1.bf16.msra.mxu0 0
        %1643 = vmatprep.subr.bf16.mxu0 0
        %1644 = vmatpush1.bf16.msra.mxu0 0
        %1645 = vmatprep.subr.bf16.mxu0 0
        %1646 = vmatpush1.bf16.msra.mxu0 0
        %1647 = vmatprep.subr.bf16.mxu0 0
        %1648 = vmatpush1.bf16.msra.mxu0 0
        %1649 = vmatprep.subr.bf16.mxu0 0
        %1650 = vmatpush1.bf16.msra.mxu0 0
        %1651 = vmatprep.subr.bf16.mxu0 0
        %1652 = vmatpush1.bf16.msra.mxu0 0
        %1653 = vmatprep.subr.bf16.mxu0 0
        %1654 = vmatpush1.bf16.msra.mxu0 0
        %1655 = vmatprep.subr.bf16.mxu0 0
        %1656 = vmatpush1.bf16.msra.mxu0 0
        %1657 = vmatprep.subr.bf16.mxu0 0
        %1658 = vmatpush1.bf16.msra.mxu0 0
        %1659 = vmatprep.subr.bf16.mxu0 0
        %1660 = vmatpush1.bf16.msra.mxu0 0
        %1661 = vmatprep.subr.bf16.mxu0 0
        %1662 = vmatpush1.bf16.msra.mxu0 0
        %1663 = vmatprep.subr.bf16.mxu0 0
        %1664 = vmatpush1.bf16.msra.mxu0 0
        %1665 = vmatprep.subr.bf16.mxu0 0
        %1666 = vmatpush1.bf16.msra.mxu0 0
        %1667 = vmatprep.mubr.bf16.mxu0 0
        %1668 = vmatmul.mubr.bf16.gmra.mrb[0].mxu0 %v1633
        %v1669 = vpop.f32.mrb[0].mxu0
        %v1670 = vadd.f32 0.0, %v1669
        %v1671 = vpop.f32.mrb[0].mxu0
        %v1672 = vpop.f32.mrb[0].mxu0
        %v1673 = vpop.f32.mrb[0].mxu0
        %1674 = vdwg.mxu0
        %v1675 = vpack.c.bf16 %v1670, %v1670
        %v1676 = vld [vmem:[#allocation7] sm:$0xf]
        %v1677 = vld [vmem:[#allocation7 + $0x4] sm:$0xf]
        %v1678 = vld [vmem:[#allocation7 + $0x8] sm:$0xf]
        %v1679 = vld [vmem:[#allocation7 + $0xc] sm:$0xf]
        %v1680 = vld [vmem:[#allocation7 + $0x10] sm:$0xf]
        %v1681 = vld [vmem:[#allocation7 + $0x14] sm:$0xf]
        %v1682 = vld [vmem:[#allocation7 + $0x18] sm:$0xf]
        %v1683 = vld [vmem:[#allocation7 + $0x1c] sm:$0xf]
        %v1684 = vld [vmem:[#allocation7 + $0x20] sm:$0xf]
        %v1685 = vld [vmem:[#allocation7 + $0x24] sm:$0xf]
        %v1686 = vld [vmem:[#allocation7 + $0x28] sm:$0xf]
        %v1687 = vld [vmem:[#allocation7 + $0x2c] sm:$0xf]
        %v1688 = vld [vmem:[#allocation7 + $0x30] sm:$0xf]
        %v1689 = vld [vmem:[#allocation7 + $0x34] sm:$0xf]
        %v1690 = vld [vmem:[#allocation7 + $0x38] sm:$0xf]
        %v1691 = vld [vmem:[#allocation7 + $0x3c] sm:$0xf]
        %s1692 = scalar_lea.vmem [#allocation7], 128
        %v1693 = vld [vmem:[%s1692] sm:$0xf]
        %v1694 = vld [vmem:[%s1692 + $0x4] sm:$0xf]
        %v1695 = vld [vmem:[%s1692 + $0x8] sm:$0xf]
        %v1696 = vld [vmem:[%s1692 + $0xc] sm:$0xf]
        %v1697 = vld [vmem:[%s1692 + $0x10] sm:$0xf]
        %v1698 = vld [vmem:[%s1692 + $0x14] sm:$0xf]
        %v1699 = vld [vmem:[%s1692 + $0x18] sm:$0xf]
        %v1700 = vld [vmem:[%s1692 + $0x1c] sm:$0xf]
        %v1701 = vld [vmem:[%s1692 + $0x20] sm:$0xf]
        %v1702 = vld [vmem:[%s1692 + $0x24] sm:$0xf]
        %v1703 = vld [vmem:[%s1692 + $0x28] sm:$0xf]
        %v1704 = vld [vmem:[%s1692 + $0x2c] sm:$0xf]
        %v1705 = vld [vmem:[%s1692 + $0x30] sm:$0xf]
        %v1706 = vld [vmem:[%s1692 + $0x34] sm:$0xf]
        %v1707 = vld [vmem:[%s1692 + $0x38] sm:$0xf]
        %v1708 = vld [vmem:[%s1692 + $0x3c] sm:$0xf]
        %v1725 = vunpack.c.l.b16 %v1693
        %v1726 = vunpack.c.l.b16 %v1694
        %v1727 = vunpack.c.l.b16 %v1695
        %v1728 = vunpack.c.l.b16 %v1696
        %v1729 = vunpack.c.l.b16 %v1697
        %v1730 = vunpack.c.l.b16 %v1698
        %v1731 = vunpack.c.l.b16 %v1699
        %v1732 = vunpack.c.l.b16 %v1700
        %v1733 = vunpack.c.l.b16 %v1701
        %v1734 = vunpack.c.l.b16 %v1702
        %v1735 = vunpack.c.l.b16 %v1703
        %v1736 = vunpack.c.l.b16 %v1704
        %v1737 = vunpack.c.l.b16 %v1705
        %v1738 = vunpack.c.l.b16 %v1706
        %v1739 = vunpack.c.l.b16 %v1707
        %v1740 = vunpack.c.l.b16 %v1708
        %v1741 = vpack.c.b16 %v1726, %v1725
        %v1742 = vpack.c.b16 %v1728, %v1727
        %v1743 = vpack.c.b16 %v1730, %v1729
        %v1744 = vpack.c.b16 %v1732, %v1731
        %v1745 = vpack.c.b16 %v1734, %v1733
        %v1746 = vpack.c.b16 %v1736, %v1735
        %v1747 = vpack.c.b16 %v1738, %v1737
        %v1748 = vpack.c.b16 %v1740, %v1739
        %1757 = vmatprep.subr.bf16.mxu0 0
        %1758 = vmatpush1.bf16.msra.mxu0 %v1741
        %1759 = vmatprep.subr.bf16.mxu0 0
        %1760 = vmatpush1.bf16.msra.mxu0 %v1742
        %1761 = vmatprep.subr.bf16.mxu0 0
        %1762 = vmatpush1.bf16.msra.mxu0 %v1743
        %1763 = vmatprep.subr.bf16.mxu0 0
        %1764 = vmatpush1.bf16.msra.mxu0 %v1744
        %1765 = vmatprep.subr.bf16.mxu0 0
        %1766 = vmatpush1.bf16.msra.mxu0 %v1745
        %1767 = vmatprep.subr.bf16.mxu0 0
        %1768 = vmatpush1.bf16.msra.mxu0 %v1746
        %1769 = vmatprep.subr.bf16.mxu0 0
        %1770 = vmatpush1.bf16.msra.mxu0 %v1747
        %1771 = vmatprep.subr.bf16.mxu0 0
        %1772 = vmatpush1.bf16.msra.mxu0 %v1748
        %1773 = vmatprep.subr.bf16.mxu0 0
        %1774 = vmatpush1.bf16.msra.mxu0 0
        %1775 = vmatprep.subr.bf16.mxu0 0
        %1776 = vmatpush1.bf16.msra.mxu0 0
        %1777 = vmatprep.subr.bf16.mxu0 0
        %1778 = vmatpush1.bf16.msra.mxu0 0
        %1779 = vmatprep.subr.bf16.mxu0 0
        %1780 = vmatpush1.bf16.msra.mxu0 0
        %1781 = vmatprep.subr.bf16.mxu0 0
        %1782 = vmatpush1.bf16.msra.mxu0 0
        %1783 = vmatprep.subr.bf16.mxu0 0
        %1784 = vmatpush1.bf16.msra.mxu0 0
        %1785 = vmatprep.subr.bf16.mxu0 0
        %1786 = vmatpush1.bf16.msra.mxu0 0
        %1787 = vmatprep.subr.bf16.mxu0 0
        %1788 = vmatpush1.bf16.msra.mxu0 0
        %1789 = vmatprep.mubr.bf16.mxu0 0
        %1790 = vmatmul.mubr.bf16.gmra.mrb[0].mxu0 %v1583
        %v1791 = vpop.f32.mrb[0].mxu0
        %v1792 = vadd.f32 0.0, %v1791
        %v1793 = vpop.f32.mrb[0].mxu0
        %v1794 = vpop.f32.mrb[0].mxu0
        %v1795 = vpop.f32.mrb[0].mxu0
        %1796 = vdwg.mxu0
        %v1813 = vunpack.c.l.b16 %v1676
        %v1814 = vunpack.c.l.b16 %v1677
        %v1815 = vunpack.c.l.b16 %v1678
        %v1816 = vunpack.c.l.b16 %v1679
        %v1817 = vunpack.c.l.b16 %v1680
        %v1818 = vunpack.c.l.b16 %v1681
        %v1819 = vunpack.c.l.b16 %v1682
        %v1820 = vunpack.c.l.b16 %v1683
        %v1821 = vunpack.c.l.b16 %v1684
        %v1822 = vunpack.c.l.b16 %v1685
        %v1823 = vunpack.c.l.b16 %v1686
        %v1824 = vunpack.c.l.b16 %v1687
        %v1825 = vunpack.c.l.b16 %v1688
        %v1826 = vunpack.c.l.b16 %v1689
        %v1827 = vunpack.c.l.b16 %v1690
        %v1828 = vunpack.c.l.b16 %v1691
        %v1829 = vpack.c.b16 %v1814, %v1813
        %v1830 = vpack.c.b16 %v1816, %v1815
        %v1831 = vpack.c.b16 %v1818, %v1817
        %v1832 = vpack.c.b16 %v1820, %v1819
        %v1833 = vpack.c.b16 %v1822, %v1821
        %v1834 = vpack.c.b16 %v1824, %v1823
        %v1835 = vpack.c.b16 %v1826, %v1825
        %v1836 = vpack.c.b16 %v1828, %v1827
        %1845 = vmatprep.subr.bf16.mxu0 0
        %1846 = vmatpush1.bf16.msra.mxu0 %v1829
        %1847 = vmatprep.subr.bf16.mxu0 0
        %1848 = vmatpush1.bf16.msra.mxu0 %v1830
        %1849 = vmatprep.subr.bf16.mxu0 0
        %1850 = vmatpush1.bf16.msra.mxu0 %v1831
        %1851 = vmatprep.subr.bf16.mxu0 0
        %1852 = vmatpush1.bf16.msra.mxu0 %v1832
        %1853 = vmatprep.subr.bf16.mxu0 0
        %1854 = vmatpush1.bf16.msra.mxu0 %v1833
        %1855 = vmatprep.subr.bf16.mxu0 0
        %1856 = vmatpush1.bf16.msra.mxu0 %v1834
        %1857 = vmatprep.subr.bf16.mxu0 0
        %1858 = vmatpush1.bf16.msra.mxu0 %v1835
        %1859 = vmatprep.subr.bf16.mxu0 0
        %1860 = vmatpush1.bf16.msra.mxu0 %v1836
        %1861 = vmatprep.subr.bf16.mxu0 0
        %1862 = vmatpush1.bf16.msra.mxu0 0
        %1863 = vmatprep.subr.bf16.mxu0 0
        %1864 = vmatpush1.bf16.msra.mxu0 0
        %1865 = vmatprep.subr.bf16.mxu0 0
        %1866 = vmatpush1.bf16.msra.mxu0 0
        %1867 = vmatprep.subr.bf16.mxu0 0
        %1868 = vmatpush1.bf16.msra.mxu0 0
        %1869 = vmatprep.subr.bf16.mxu0 0
        %1870 = vmatpush1.bf16.msra.mxu0 0
        %1871 = vmatprep.subr.bf16.mxu0 0
        %1872 = vmatpush1.bf16.msra.mxu0 0
        %1873 = vmatprep.subr.bf16.mxu0 0
        %1874 = vmatpush1.bf16.msra.mxu0 0
        %1875 = vmatprep.subr.bf16.mxu0 0
        %1876 = vmatpush1.bf16.msra.mxu0 0
        %1877 = vmatprep.mubr.bf16.mxu0 0
        %1878 = vmatmul.mubr.bf16.gmra.mrb[0].mxu0 %v1537
        %v1879 = vpop.f32.mrb[0].mxu0
        %v1880 = vadd.f32 %v1792, %v1879
        %v1881 = vpop.f32.mrb[0].mxu0
        %v1882 = vpop.f32.mrb[0].mxu0
        %v1883 = vpop.f32.mrb[0].mxu0
        %1884 = vdwg.mxu0
        %s1885 = scalar_lea.vmem [#allocation7], 256
        %v1886 = vld [vmem:[%s1885] sm:$0xf]
        %v1887 = vld [vmem:[%s1885 + $0x4] sm:$0xf]
        %v1888 = vld [vmem:[%s1885 + $0x8] sm:$0xf]
        %v1889 = vld [vmem:[%s1885 + $0xc] sm:$0xf]
        %v1890 = vld [vmem:[%s1885 + $0x10] sm:$0xf]
        %v1891 = vld [vmem:[%s1885 + $0x14] sm:$0xf]
        %v1892 = vld [vmem:[%s1885 + $0x18] sm:$0xf]
        %v1893 = vld [vmem:[%s1885 + $0x1c] sm:$0xf]
        %v1894 = vld [vmem:[%s1885 + $0x20] sm:$0xf]
        %v1895 = vld [vmem:[%s1885 + $0x24] sm:$0xf]
        %v1896 = vld [vmem:[%s1885 + $0x28] sm:$0xf]
        %v1897 = vld [vmem:[%s1885 + $0x2c] sm:$0xf]
        %v1898 = vld [vmem:[%s1885 + $0x30] sm:$0xf]
        %v1899 = vld [vmem:[%s1885 + $0x34] sm:$0xf]
        %v1900 = vld [vmem:[%s1885 + $0x38] sm:$0xf]
        %v1901 = vld [vmem:[%s1885 + $0x3c] sm:$0xf]
        %v1918 = vunpack.c.l.b16 %v1886
        %v1919 = vunpack.c.l.b16 %v1887
        %v1920 = vunpack.c.l.b16 %v1888
        %v1921 = vunpack.c.l.b16 %v1889
        %v1922 = vunpack.c.l.b16 %v1890
        %v1923 = vunpack.c.l.b16 %v1891
        %v1924 = vunpack.c.l.b16 %v1892
        %v1925 = vunpack.c.l.b16 %v1893
        %v1926 = vunpack.c.l.b16 %v1894
        %v1927 = vunpack.c.l.b16 %v1895
        %v1928 = vunpack.c.l.b16 %v1896
        %v1929 = vunpack.c.l.b16 %v1897
        %v1930 = vunpack.c.l.b16 %v1898
        %v1931 = vunpack.c.l.b16 %v1899
        %v1932 = vunpack.c.l.b16 %v1900
        %v1933 = vunpack.c.l.b16 %v1901
        %v1934 = vpack.c.b16 %v1919, %v1918
        %v1935 = vpack.c.b16 %v1921, %v1920
        %v1936 = vpack.c.b16 %v1923, %v1922
        %v1937 = vpack.c.b16 %v1925, %v1924
        %v1938 = vpack.c.b16 %v1927, %v1926
        %v1939 = vpack.c.b16 %v1929, %v1928
        %v1940 = vpack.c.b16 %v1931, %v1930
        %v1941 = vpack.c.b16 %v1933, %v1932
        %1950 = vmatprep.subr.bf16.mxu0 0
        %1951 = vmatpush1.bf16.msra.mxu0 %v1934
        %1952 = vmatprep.subr.bf16.mxu0 0
        %1953 = vmatpush1.bf16.msra.mxu0 %v1935
        %1954 = vmatprep.subr.bf16.mxu0 0
        %1955 = vmatpush1.bf16.msra.mxu0 %v1936
        %1956 = vmatprep.subr.bf16.mxu0 0
        %1957 = vmatpush1.bf16.msra.mxu0 %v1937
        %1958 = vmatprep.subr.bf16.mxu0 0
        %1959 = vmatpush1.bf16.msra.mxu0 %v1938
        %1960 = vmatprep.subr.bf16.mxu0 0
        %1961 = vmatpush1.bf16.msra.mxu0 %v1939
        %1962 = vmatprep.subr.bf16.mxu0 0
        %1963 = vmatpush1.bf16.msra.mxu0 %v1940
        %1964 = vmatprep.subr.bf16.mxu0 0
        %1965 = vmatpush1.bf16.msra.mxu0 %v1941
        %1966 = vmatprep.subr.bf16.mxu0 0
        %1967 = vmatpush1.bf16.msra.mxu0 0
        %1968 = vmatprep.subr.bf16.mxu0 0
        %1969 = vmatpush1.bf16.msra.mxu0 0
        %1970 = vmatprep.subr.bf16.mxu0 0
        %1971 = vmatpush1.bf16.msra.mxu0 0
        %1972 = vmatprep.subr.bf16.mxu0 0
        %1973 = vmatpush1.bf16.msra.mxu0 0
        %1974 = vmatprep.subr.bf16.mxu0 0
        %1975 = vmatpush1.bf16.msra.mxu0 0
        %1976 = vmatprep.subr.bf16.mxu0 0
        %1977 = vmatpush1.bf16.msra.mxu0 0
        %1978 = vmatprep.subr.bf16.mxu0 0
        %1979 = vmatpush1.bf16.msra.mxu0 0
        %1980 = vmatprep.subr.bf16.mxu0 0
        %1981 = vmatpush1.bf16.msra.mxu0 0
        %1982 = vmatprep.mubr.bf16.mxu0 0
        %1983 = vmatmul.mubr.bf16.gmra.mrb[0].mxu0 %v1629
        %v1984 = vpop.f32.mrb[0].mxu0
        %v1985 = vadd.f32 0.0, %v1984
        %v1986 = vpop.f32.mrb[0].mxu0
        %v1987 = vpop.f32.mrb[0].mxu0
        %v1988 = vpop.f32.mrb[0].mxu0
        %1989 = vdwg.mxu0
        %v1990 = vadd.f32 %v1880, %v1985
        %s1991 = scalar_lea.vmem [#allocation7], 64
        %v1992 = vld [vmem:[%s1991] sm:$0xf]
        %v1993 = vld [vmem:[%s1991 + $0x4] sm:$0xf]
        %v1994 = vld [vmem:[%s1991 + $0x8] sm:$0xf]
        %v1995 = vld [vmem:[%s1991 + $0xc] sm:$0xf]
        %v1996 = vld [vmem:[%s1991 + $0x10] sm:$0xf]
        %v1997 = vld [vmem:[%s1991 + $0x14] sm:$0xf]
        %v1998 = vld [vmem:[%s1991 + $0x18] sm:$0xf]
        %v1999 = vld [vmem:[%s1991 + $0x1c] sm:$0xf]
        %v2000 = vld [vmem:[%s1991 + $0x20] sm:$0xf]
        %v2001 = vld [vmem:[%s1991 + $0x24] sm:$0xf]
        %v2002 = vld [vmem:[%s1991 + $0x28] sm:$0xf]
        %v2003 = vld [vmem:[%s1991 + $0x2c] sm:$0xf]
        %v2004 = vld [vmem:[%s1991 + $0x30] sm:$0xf]
        %v2005 = vld [vmem:[%s1991 + $0x34] sm:$0xf]
        %v2006 = vld [vmem:[%s1991 + $0x38] sm:$0xf]
        %v2007 = vld [vmem:[%s1991 + $0x3c] sm:$0xf]
        %s2008 = scalar_lea.vmem [#allocation7], 192
        %v2009 = vld [vmem:[%s2008] sm:$0xf]
        %v2010 = vld [vmem:[%s2008 + $0x4] sm:$0xf]
        %v2011 = vld [vmem:[%s2008 + $0x8] sm:$0xf]
        %v2012 = vld [vmem:[%s2008 + $0xc] sm:$0xf]
        %v2013 = vld [vmem:[%s2008 + $0x10] sm:$0xf]
        %v2014 = vld [vmem:[%s2008 + $0x14] sm:$0xf]
        %v2015 = vld [vmem:[%s2008 + $0x18] sm:$0xf]
        %v2016 = vld [vmem:[%s2008 + $0x1c] sm:$0xf]
        %v2017 = vld [vmem:[%s2008 + $0x20] sm:$0xf]
        %v2018 = vld [vmem:[%s2008 + $0x24] sm:$0xf]
        %v2019 = vld [vmem:[%s2008 + $0x28] sm:$0xf]
        %v2020 = vld [vmem:[%s2008 + $0x2c] sm:$0xf]
        %v2021 = vld [vmem:[%s2008 + $0x30] sm:$0xf]
        %v2022 = vld [vmem:[%s2008 + $0x34] sm:$0xf]
        %v2023 = vld [vmem:[%s2008 + $0x38] sm:$0xf]
        %v2024 = vld [vmem:[%s2008 + $0x3c] sm:$0xf]
        %v2041 = vunpack.c.l.b16 %v2009
        %v2042 = vunpack.c.l.b16 %v2010
        %v2043 = vunpack.c.l.b16 %v2011
        %v2044 = vunpack.c.l.b16 %v2012
        %v2045 = vunpack.c.l.b16 %v2013
        %v2046 = vunpack.c.l.b16 %v2014
        %v2047 = vunpack.c.l.b16 %v2015
        %v2048 = vunpack.c.l.b16 %v2016
        %v2049 = vunpack.c.l.b16 %v2017
        %v2050 = vunpack.c.l.b16 %v2018
        %v2051 = vunpack.c.l.b16 %v2019
        %v2052 = vunpack.c.l.b16 %v2020
        %v2053 = vunpack.c.l.b16 %v2021
        %v2054 = vunpack.c.l.b16 %v2022
        %v2055 = vunpack.c.l.b16 %v2023
        %v2056 = vunpack.c.l.b16 %v2024
        %v2057 = vpack.c.b16 %v2042, %v2041
        %v2058 = vpack.c.b16 %v2044, %v2043
        %v2059 = vpack.c.b16 %v2046, %v2045
        %v2060 = vpack.c.b16 %v2048, %v2047
        %v2061 = vpack.c.b16 %v2050, %v2049
        %v2062 = vpack.c.b16 %v2052, %v2051
        %v2063 = vpack.c.b16 %v2054, %v2053
        %v2064 = vpack.c.b16 %v2056, %v2055
        %2073 = vmatprep.subr.bf16.mxu0 0
        %2074 = vmatpush1.bf16.msra.mxu0 %v2057
        %2075 = vmatprep.subr.bf16.mxu0 0
        %2076 = vmatpush1.bf16.msra.mxu0 %v2058
        %2077 = vmatprep.subr.bf16.mxu0 0
        %2078 = vmatpush1.bf16.msra.mxu0 %v2059
        %2079 = vmatprep.subr.bf16.mxu0 0
        %2080 = vmatpush1.bf16.msra.mxu0 %v2060
        %2081 = vmatprep.subr.bf16.mxu0 0
        %2082 = vmatpush1.bf16.msra.mxu0 %v2061
        %2083 = vmatprep.subr.bf16.mxu0 0
        %2084 = vmatpush1.bf16.msra.mxu0 %v2062
        %2085 = vmatprep.subr.bf16.mxu0 0
        %2086 = vmatpush1.bf16.msra.mxu0 %v2063
        %2087 = vmatprep.subr.bf16.mxu0 0
        %2088 = vmatpush1.bf16.msra.mxu0 %v2064
        %2089 = vmatprep.subr.bf16.mxu0 0
        %2090 = vmatpush1.bf16.msra.mxu0 0
        %2091 = vmatprep.subr.bf16.mxu0 0
        %2092 = vmatpush1.bf16.msra.mxu0 0
        %2093 = vmatprep.subr.bf16.mxu0 0
        %2094 = vmatpush1.bf16.msra.mxu0 0
        %2095 = vmatprep.subr.bf16.mxu0 0
        %2096 = vmatpush1.bf16.msra.mxu0 0
        %2097 = vmatprep.subr.bf16.mxu0 0
        %2098 = vmatpush1.bf16.msra.mxu0 0
        %2099 = vmatprep.subr.bf16.mxu0 0
        %2100 = vmatpush1.bf16.msra.mxu0 0
        %2101 = vmatprep.subr.bf16.mxu0 0
        %2102 = vmatpush1.bf16.msra.mxu0 0
        %2103 = vmatprep.subr.bf16.mxu0 0
        %2104 = vmatpush1.bf16.msra.mxu0 0
        %2105 = vmatprep.mubr.bf16.mxu0 0
        %2106 = vmatmul.mubr.bf16.gmra.mrb[0].mxu0 %v1583
        %v2107 = vpop.f32.mrb[0].mxu0
        %v2108 = vadd.f32 0.0, %v2107
        %v2109 = vpop.f32.mrb[0].mxu0
        %v2110 = vpop.f32.mrb[0].mxu0
        %v2111 = vpop.f32.mrb[0].mxu0
        %2112 = vdwg.mxu0
        %v2129 = vunpack.c.l.b16 %v1992
        %v2130 = vunpack.c.l.b16 %v1993
        %v2131 = vunpack.c.l.b16 %v1994
        %v2132 = vunpack.c.l.b16 %v1995
        %v2133 = vunpack.c.l.b16 %v1996
        %v2134 = vunpack.c.l.b16 %v1997
        %v2135 = vunpack.c.l.b16 %v1998
        %v2136 = vunpack.c.l.b16 %v1999
        %v2137 = vunpack.c.l.b16 %v2000
        %v2138 = vunpack.c.l.b16 %v2001
        %v2139 = vunpack.c.l.b16 %v2002
        %v2140 = vunpack.c.l.b16 %v2003
        %v2141 = vunpack.c.l.b16 %v2004
        %v2142 = vunpack.c.l.b16 %v2005
        %v2143 = vunpack.c.l.b16 %v2006
        %v2144 = vunpack.c.l.b16 %v2007
        %v2145 = vpack.c.b16 %v2130, %v2129
        %v2146 = vpack.c.b16 %v2132, %v2131
        %v2147 = vpack.c.b16 %v2134, %v2133
        %v2148 = vpack.c.b16 %v2136, %v2135
        %v2149 = vpack.c.b16 %v2138, %v2137
        %v2150 = vpack.c.b16 %v2140, %v2139
        %v2151 = vpack.c.b16 %v2142, %v2141
        %v2152 = vpack.c.b16 %v2144, %v2143
        %2161 = vmatprep.subr.bf16.mxu0 0
        %2162 = vmatpush1.bf16.msra.mxu0 %v2145
        %2163 = vmatprep.subr.bf16.mxu0 0
        %2164 = vmatpush1.bf16.msra.mxu0 %v2146
        %2165 = vmatprep.subr.bf16.mxu0 0
        %2166 = vmatpush1.bf16.msra.mxu0 %v2147
        %2167 = vmatprep.subr.bf16.mxu0 0
        %2168 = vmatpush1.bf16.msra.mxu0 %v2148
        %2169 = vmatprep.subr.bf16.mxu0 0
        %2170 = vmatpush1.bf16.msra.mxu0 %v2149
        %2171 = vmatprep.subr.bf16.mxu0 0
        %2172 = vmatpush1.bf16.msra.mxu0 %v2150
        %2173 = vmatprep.subr.bf16.mxu0 0
        %2174 = vmatpush1.bf16.msra.mxu0 %v2151
        %2175 = vmatprep.subr.bf16.mxu0 0
        %2176 = vmatpush1.bf16.msra.mxu0 %v2152
        %2177 = vmatprep.subr.bf16.mxu0 0
        %2178 = vmatpush1.bf16.msra.mxu0 0
        %2179 = vmatprep.subr.bf16.mxu0 0
        %2180 = vmatpush1.bf16.msra.mxu0 0
        %2181 = vmatprep.subr.bf16.mxu0 0
        %2182 = vmatpush1.bf16.msra.mxu0 0
        %2183 = vmatprep.subr.bf16.mxu0 0
        %2184 = vmatpush1.bf16.msra.mxu0 0
        %2185 = vmatprep.subr.bf16.mxu0 0
        %2186 = vmatpush1.bf16.msra.mxu0 0
        %2187 = vmatprep.subr.bf16.mxu0 0
        %2188 = vmatpush1.bf16.msra.mxu0 0
        %2189 = vmatprep.subr.bf16.mxu0 0
        %2190 = vmatpush1.bf16.msra.mxu0 0
        %2191 = vmatprep.subr.bf16.mxu0 0
        %2192 = vmatpush1.bf16.msra.mxu0 0
        %2193 = vmatprep.mubr.bf16.mxu0 0
        %2194 = vmatmul.mubr.bf16.gmra.mrb[0].mxu0 %v1537
        %v2195 = vpop.f32.mrb[0].mxu0
        %v2196 = vadd.f32 %v2108, %v2195
        %v2197 = vpop.f32.mrb[0].mxu0
        %v2198 = vpop.f32.mrb[0].mxu0
        %v2199 = vpop.f32.mrb[0].mxu0
        %2200 = vdwg.mxu0
        %s2201 = scalar_lea.vmem [#allocation7], 320
        %v2202 = vld [vmem:[%s2201] sm:$0xf]
        %v2203 = vld [vmem:[%s2201 + $0x4] sm:$0xf]
        %v2204 = vld [vmem:[%s2201 + $0x8] sm:$0xf]
        %v2205 = vld [vmem:[%s2201 + $0xc] sm:$0xf]
        %v2206 = vld [vmem:[%s2201 + $0x10] sm:$0xf]
        %v2207 = vld [vmem:[%s2201 + $0x14] sm:$0xf]
        %v2208 = vld [vmem:[%s2201 + $0x18] sm:$0xf]
        %v2209 = vld [vmem:[%s2201 + $0x1c] sm:$0xf]
        %v2210 = vld [vmem:[%s2201 + $0x20] sm:$0xf]
        %v2211 = vld [vmem:[%s2201 + $0x24] sm:$0xf]
        %v2212 = vld [vmem:[%s2201 + $0x28] sm:$0xf]
        %v2213 = vld [vmem:[%s2201 + $0x2c] sm:$0xf]
        %v2214 = vld [vmem:[%s2201 + $0x30] sm:$0xf]
        %v2215 = vld [vmem:[%s2201 + $0x34] sm:$0xf]
        %v2216 = vld [vmem:[%s2201 + $0x38] sm:$0xf]
        %v2217 = vld [vmem:[%s2201 + $0x3c] sm:$0xf]
        %v2234 = vunpack.c.l.b16 %v2202
        %v2235 = vunpack.c.l.b16 %v2203
        %v2236 = vunpack.c.l.b16 %v2204
        %v2237 = vunpack.c.l.b16 %v2205
        %v2238 = vunpack.c.l.b16 %v2206
        %v2239 = vunpack.c.l.b16 %v2207
        %v2240 = vunpack.c.l.b16 %v2208
        %v2241 = vunpack.c.l.b16 %v2209
        %v2242 = vunpack.c.l.b16 %v2210
        %v2243 = vunpack.c.l.b16 %v2211
        %v2244 = vunpack.c.l.b16 %v2212
        %v2245 = vunpack.c.l.b16 %v2213
        %v2246 = vunpack.c.l.b16 %v2214
        %v2247 = vunpack.c.l.b16 %v2215
        %v2248 = vunpack.c.l.b16 %v2216
        %v2249 = vunpack.c.l.b16 %v2217
        %v2250 = vpack.c.b16 %v2235, %v2234
        %v2251 = vpack.c.b16 %v2237, %v2236
        %v2252 = vpack.c.b16 %v2239, %v2238
        %v2253 = vpack.c.b16 %v2241, %v2240
        %v2254 = vpack.c.b16 %v2243, %v2242
        %v2255 = vpack.c.b16 %v2245, %v2244
        %v2256 = vpack.c.b16 %v2247, %v2246
        %v2257 = vpack.c.b16 %v2249, %v2248
        %2266 = vmatprep.subr.bf16.mxu0 0
        %2267 = vmatpush1.bf16.msra.mxu0 %v2250
        %2268 = vmatprep.subr.bf16.mxu0 0
        %2269 = vmatpush1.bf16.msra.mxu0 %v2251
        %2270 = vmatprep.subr.bf16.mxu0 0
        %2271 = vmatpush1.bf16.msra.mxu0 %v2252
        %2272 = vmatprep.subr.bf16.mxu0 0
        %2273 = vmatpush1.bf16.msra.mxu0 %v2253
        %2274 = vmatprep.subr.bf16.mxu0 0
        %2275 = vmatpush1.bf16.msra.mxu0 %v2254
        %2276 = vmatprep.subr.bf16.mxu0 0
        %2277 = vmatpush1.bf16.msra.mxu0 %v2255
        %2278 = vmatprep.subr.bf16.mxu0 0
        %2279 = vmatpush1.bf16.msra.mxu0 %v2256
        %2280 = vmatprep.subr.bf16.mxu0 0
        %2281 = vmatpush1.bf16.msra.mxu0 %v2257
        %2282 = vmatprep.subr.bf16.mxu0 0
        %2283 = vmatpush1.bf16.msra.mxu0 0
        %2284 = vmatprep.subr.bf16.mxu0 0
        %2285 = vmatpush1.bf16.msra.mxu0 0
        %2286 = vmatprep.subr.bf16.mxu0 0
        %2287 = vmatpush1.bf16.msra.mxu0 0
        %2288 = vmatprep.subr.bf16.mxu0 0
        %2289 = vmatpush1.bf16.msra.mxu0 0
        %2290 = vmatprep.subr.bf16.mxu0 0
        %2291 = vmatpush1.bf16.msra.mxu0 0
        %2292 = vmatprep.subr.bf16.mxu0 0
        %2293 = vmatpush1.bf16.msra.mxu0 0
        %2294 = vmatprep.subr.bf16.mxu0 0
        %2295 = vmatpush1.bf16.msra.mxu0 0
        %2296 = vmatprep.subr.bf16.mxu0 0
        %2297 = vmatpush1.bf16.msra.mxu0 0
        %2298 = vmatprep.mubr.bf16.mxu0 0
        %2299 = vmatmul.mubr.bf16.gmra.mrb[0].mxu0 %v1629
        %v2300 = vpop.f32.mrb[0].mxu0
        %v2301 = vadd.f32 0.0, %v2300
        %v2302 = vpop.f32.mrb[0].mxu0
        %v2303 = vpop.f32.mrb[0].mxu0
        %v2304 = vpop.f32.mrb[0].mxu0
        %2305 = vdwg.mxu0
        %v2306 = vadd.f32 %v2196, %v2301
        %v2307 = vmax.f32 %v1990, %v2306
        %2308 = vmatprep.subr.bf16.mxu0 0
        %2309 = vmatpush1.bf16.msra.mxu0 %v1741
        %2310 = vmatprep.subr.bf16.mxu0 0
        %2311 = vmatpush1.bf16.msra.mxu0 %v1742
        %2312 = vmatprep.subr.bf16.mxu0 0
        %2313 = vmatpush1.bf16.msra.mxu0 %v1743
        %2314 = vmatprep.subr.bf16.mxu0 0
        %2315 = vmatpush1.bf16.msra.mxu0 %v1744
        %2316 = vmatprep.subr.bf16.mxu0 0
        %2317 = vmatpush1.bf16.msra.mxu0 %v1745
        %2318 = vmatprep.subr.bf16.mxu0 0
        %2319 = vmatpush1.bf16.msra.mxu0 %v1746
        %2320 = vmatprep.subr.bf16.mxu0 0
        %2321 = vmatpush1.bf16.msra.mxu0 %v1747
        %2322 = vmatprep.subr.bf16.mxu0 0
        %2323 = vmatpush1.bf16.msra.mxu0 %v1748
        %2324 = vmatprep.subr.bf16.mxu0 0
        %2325 = vmatpush1.bf16.msra.mxu0 0
        %2326 = vmatprep.subr.bf16.mxu0 0
        %2327 = vmatpush1.bf16.msra.mxu0 0
        %2328 = vmatprep.subr.bf16.mxu0 0
        %2329 = vmatpush1.bf16.msra.mxu0 0
        %2330 = vmatprep.subr.bf16.mxu0 0
        %2331 = vmatpush1.bf16.msra.mxu0 0
        %2332 = vmatprep.subr.bf16.mxu0 0
        %2333 = vmatpush1.bf16.msra.mxu0 0
        %2334 = vmatprep.subr.bf16.mxu0 0
        %2335 = vmatpush1.bf16.msra.mxu0 0
        %2336 = vmatprep.subr.bf16.mxu0 0
        %2337 = vmatpush1.bf16.msra.mxu0 0
        %2338 = vmatprep.subr.bf16.mxu0 0
        %2339 = vmatpush1.bf16.msra.mxu0 0
        %2340 = vmatprep.mubr.bf16.mxu0 0
        %2341 = vmatmul.mubr.bf16.gmra.mrb[0].mxu0 %v1629
        %v2342 = vpop.f32.mrb[0].mxu0
        %v2343 = vadd.f32 0.0, %v2342
        %v2344 = vpop.f32.mrb[0].mxu0
        %v2345 = vpop.f32.mrb[0].mxu0
        %v2346 = vpop.f32.mrb[0].mxu0
        %2347 = vdwg.mxu0
        %2348 = vmatprep.subr.bf16.mxu0 0
        %2349 = vmatpush1.bf16.msra.mxu0 %v1829
        %2350 = vmatprep.subr.bf16.mxu0 0
        %2351 = vmatpush1.bf16.msra.mxu0 %v1830
        %2352 = vmatprep.subr.bf16.mxu0 0
        %2353 = vmatpush1.bf16.msra.mxu0 %v1831
        %2354 = vmatprep.subr.bf16.mxu0 0
        %2355 = vmatpush1.bf16.msra.mxu0 %v1832
        %2356 = vmatprep.subr.bf16.mxu0 0
        %2357 = vmatpush1.bf16.msra.mxu0 %v1833
        %2358 = vmatprep.subr.bf16.mxu0 0
        %2359 = vmatpush1.bf16.msra.mxu0 %v1834
        %2360 = vmatprep.subr.bf16.mxu0 0
        %2361 = vmatpush1.bf16.msra.mxu0 %v1835
        %2362 = vmatprep.subr.bf16.mxu0 0
        %2363 = vmatpush1.bf16.msra.mxu0 %v1836
        %2364 = vmatprep.subr.bf16.mxu0 0
        %2365 = vmatpush1.bf16.msra.mxu0 0
        %2366 = vmatprep.subr.bf16.mxu0 0
        %2367 = vmatpush1.bf16.msra.mxu0 0
        %2368 = vmatprep.subr.bf16.mxu0 0
        %2369 = vmatpush1.bf16.msra.mxu0 0
        %2370 = vmatprep.subr.bf16.mxu0 0
        %2371 = vmatpush1.bf16.msra.mxu0 0
        %2372 = vmatprep.subr.bf16.mxu0 0
        %2373 = vmatpush1.bf16.msra.mxu0 0
        %2374 = vmatprep.subr.bf16.mxu0 0
        %2375 = vmatpush1.bf16.msra.mxu0 0
        %2376 = vmatprep.subr.bf16.mxu0 0
        %2377 = vmatpush1.bf16.msra.mxu0 0
        %2378 = vmatprep.subr.bf16.mxu0 0
        %2379 = vmatpush1.bf16.msra.mxu0 0
        %2380 = vmatprep.mubr.bf16.mxu0 0
        %2381 = vmatmul.mubr.bf16.gmra.mrb[0].mxu0 %v1583
        %v2382 = vpop.f32.mrb[0].mxu0
        %v2383 = vadd.f32 %v2343, %v2382
        %v2384 = vpop.f32.mrb[0].mxu0
        %v2385 = vpop.f32.mrb[0].mxu0
        %v2386 = vpop.f32.mrb[0].mxu0
        %2387 = vdwg.mxu0
        %2388 = vmatprep.subr.bf16.mxu0 0
        %2389 = vmatpush1.bf16.msra.mxu0 %v1934
        %2390 = vmatprep.subr.bf16.mxu0 0
        %2391 = vmatpush1.bf16.msra.mxu0 %v1935
        %2392 = vmatprep.subr.bf16.mxu0 0
        %2393 = vmatpush1.bf16.msra.mxu0 %v1936
        %2394 = vmatprep.subr.bf16.mxu0 0
        %2395 = vmatpush1.bf16.msra.mxu0 %v1937
        %2396 = vmatprep.subr.bf16.mxu0 0
        %2397 = vmatpush1.bf16.msra.mxu0 %v1938
        %2398 = vmatprep.subr.bf16.mxu0 0
        %2399 = vmatpush1.bf16.msra.mxu0 %v1939
        %2400 = vmatprep.subr.bf16.mxu0 0
        %2401 = vmatpush1.bf16.msra.mxu0 %v1940
        %2402 = vmatprep.subr.bf16.mxu0 0
        %2403 = vmatpush1.bf16.msra.mxu0 %v1941
        %2404 = vmatprep.subr.bf16.mxu0 0
        %2405 = vmatpush1.bf16.msra.mxu0 0
        %2406 = vmatprep.subr.bf16.mxu0 0
        %2407 = vmatpush1.bf16.msra.mxu0 0
        %2408 = vmatprep.subr.bf16.mxu0 0
        %2409 = vmatpush1.bf16.msra.mxu0 0
        %2410 = vmatprep.subr.bf16.mxu0 0
        %2411 = vmatpush1.bf16.msra.mxu0 0
        %2412 = vmatprep.subr.bf16.mxu0 0
        %2413 = vmatpush1.bf16.msra.mxu0 0
        %2414 = vmatprep.subr.bf16.mxu0 0
        %2415 = vmatpush1.bf16.msra.mxu0 0
        %2416 = vmatprep.subr.bf16.mxu0 0
        %2417 = vmatpush1.bf16.msra.mxu0 0
        %2418 = vmatprep.subr.bf16.mxu0 0
        %2419 = vmatpush1.bf16.msra.mxu0 0
        %2420 = vmatprep.mubr.bf16.mxu0 0
        %2421 = vmatmul.mubr.bf16.gmra.mrb[0].mxu0 %v1675
        %v2422 = vpop.f32.mrb[0].mxu0
        %v2423 = vadd.f32 0.0, %v2422
        %v2424 = vpop.f32.mrb[0].mxu0
        %v2425 = vpop.f32.mrb[0].mxu0
        %v2426 = vpop.f32.mrb[0].mxu0
        %2427 = vdwg.mxu0
        %v2428 = vadd.f32 %v2383, %v2423
        %v2429 = vmax.f32 %v2307, %v2428
        %2430 = vmatprep.subr.bf16.mxu0 0
        %2431 = vmatpush1.bf16.msra.mxu0 %v2057
        %2432 = vmatprep.subr.bf16.mxu0 0
        %2433 = vmatpush1.bf16.msra.mxu0 %v2058
        %2434 = vmatprep.subr.bf16.mxu0 0
        %2435 = vmatpush1.bf16.msra.mxu0 %v2059
        %2436 = vmatprep.subr.bf16.mxu0 0
        %2437 = vmatpush1.bf16.msra.mxu0 %v2060
        %2438 = vmatprep.subr.bf16.mxu0 0
        %2439 = vmatpush1.bf16.msra.mxu0 %v2061
        %2440 = vmatprep.subr.bf16.mxu0 0
        %2441 = vmatpush1.bf16.msra.mxu0 %v2062
        %2442 = vmatprep.subr.bf16.mxu0 0
        %2443 = vmatpush1.bf16.msra.mxu0 %v2063
        %2444 = vmatprep.subr.bf16.mxu0 0
        %2445 = vmatpush1.bf16.msra.mxu0 %v2064
        %2446 = vmatprep.subr.bf16.mxu0 0
        %2447 = vmatpush1.bf16.msra.mxu0 0
        %2448 = vmatprep.subr.bf16.mxu0 0
        %2449 = vmatpush1.bf16.msra.mxu0 0
        %2450 = vmatprep.subr.bf16.mxu0 0
        %2451 = vmatpush1.bf16.msra.mxu0 0
        %2452 = vmatprep.subr.bf16.mxu0 0
        %2453 = vmatpush1.bf16.msra.mxu0 0
        %2454 = vmatprep.subr.bf16.mxu0 0
        %2455 = vmatpush1.bf16.msra.mxu0 0
        %2456 = vmatprep.subr.bf16.mxu0 0
        %2457 = vmatpush1.bf16.msra.mxu0 0
        %2458 = vmatprep.subr.bf16.mxu0 0
        %2459 = vmatpush1.bf16.msra.mxu0 0
        %2460 = vmatprep.subr.bf16.mxu0 0
        %2461 = vmatpush1.bf16.msra.mxu0 0
        %2462 = vmatprep.mubr.bf16.mxu0 0
        %2463 = vmatmul.mubr.bf16.gmra.mrb[0].mxu0 %v1629
        %v2464 = vpop.f32.mrb[0].mxu0
        %v2465 = vadd.f32 0.0, %v2464
        %v2466 = vpop.f32.mrb[0].mxu0
        %v2467 = vpop.f32.mrb[0].mxu0
        %v2468 = vpop.f32.mrb[0].mxu0
        %2469 = vdwg.mxu0
        %2470 = vmatprep.subr.bf16.mxu0 0
        %2471 = vmatpush1.bf16.msra.mxu0 %v2145
        %2472 = vmatprep.subr.bf16.mxu0 0
        %2473 = vmatpush1.bf16.msra.mxu0 %v2146
        %2474 = vmatprep.subr.bf16.mxu0 0
        %2475 = vmatpush1.bf16.msra.mxu0 %v2147
        %2476 = vmatprep.subr.bf16.mxu0 0
        %2477 = vmatpush1.bf16.msra.mxu0 %v2148
        %2478 = vmatprep.subr.bf16.mxu0 0
        %2479 = vmatpush1.bf16.msra.mxu0 %v2149
        %2480 = vmatprep.subr.bf16.mxu0 0
        %2481 = vmatpush1.bf16.msra.mxu0 %v2150
        %2482 = vmatprep.subr.bf16.mxu0 0
        %2483 = vmatpush1.bf16.msra.mxu0 %v2151
        %2484 = vmatprep.subr.bf16.mxu0 0
        %2485 = vmatpush1.bf16.msra.mxu0 %v2152
        %2486 = vmatprep.subr.bf16.mxu0 0
        %2487 = vmatpush1.bf16.msra.mxu0 0
        %2488 = vmatprep.subr.bf16.mxu0 0
        %2489 = vmatpush1.bf16.msra.mxu0 0
        %2490 = vmatprep.subr.bf16.mxu0 0
        %2491 = vmatpush1.bf16.msra.mxu0 0
        %2492 = vmatprep.subr.bf16.mxu0 0
        %2493 = vmatpush1.bf16.msra.mxu0 0
        %2494 = vmatprep.subr.bf16.mxu0 0
        %2495 = vmatpush1.bf16.msra.mxu0 0
        %2496 = vmatprep.subr.bf16.mxu0 0
        %2497 = vmatpush1.bf16.msra.mxu0 0
        %2498 = vmatprep.subr.bf16.mxu0 0
        %2499 = vmatpush1.bf16.msra.mxu0 0
        %2500 = vmatprep.subr.bf16.mxu0 0
        %2501 = vmatpush1.bf16.msra.mxu0 0
        %2502 = vmatprep.mubr.bf16.mxu0 0
        %2503 = vmatmul.mubr.bf16.gmra.mrb[0].mxu0 %v1583
        %v2504 = vpop.f32.mrb[0].mxu0
        %v2505 = vadd.f32 %v2465, %v2504
        %v2506 = vpop.f32.mrb[0].mxu0
        %v2507 = vpop.f32.mrb[0].mxu0
        %v2508 = vpop.f32.mrb[0].mxu0
        %2509 = vdwg.mxu0
        %2510 = vmatprep.subr.bf16.mxu0 0
        %2511 = vmatpush1.bf16.msra.mxu0 %v2250
        %2512 = vmatprep.subr.bf16.mxu0 0
        %2513 = vmatpush1.bf16.msra.mxu0 %v2251
        %2514 = vmatprep.subr.bf16.mxu0 0
        %2515 = vmatpush1.bf16.msra.mxu0 %v2252
        %2516 = vmatprep.subr.bf16.mxu0 0
        %2517 = vmatpush1.bf16.msra.mxu0 %v2253
        %2518 = vmatprep.subr.bf16.mxu0 0
        %2519 = vmatpush1.bf16.msra.mxu0 %v2254
        %2520 = vmatprep.subr.bf16.mxu0 0
        %2521 = vmatpush1.bf16.msra.mxu0 %v2255
        %2522 = vmatprep.subr.bf16.mxu0 0
        %2523 = vmatpush1.bf16.msra.mxu0 %v2256
        %2524 = vmatprep.subr.bf16.mxu0 0
        %2525 = vmatpush1.bf16.msra.mxu0 %v2257
        %2526 = vmatprep.subr.bf16.mxu0 0
        %2527 = vmatpush1.bf16.msra.mxu0 0
        %2528 = vmatprep.subr.bf16.mxu0 0
        %2529 = vmatpush1.bf16.msra.mxu0 0
        %2530 = vmatprep.subr.bf16.mxu0 0
        %2531 = vmatpush1.bf16.msra.mxu0 0
        %2532 = vmatprep.subr.bf16.mxu0 0
        %2533 = vmatpush1.bf16.msra.mxu0 0
        %2534 = vmatprep.subr.bf16.mxu0 0
        %2535 = vmatpush1.bf16.msra.mxu0 0
        %2536 = vmatprep.subr.bf16.mxu0 0
        %2537 = vmatpush1.bf16.msra.mxu0 0
        %2538 = vmatprep.subr.bf16.mxu0 0
        %2539 = vmatpush1.bf16.msra.mxu0 0
        %2540 = vmatprep.subr.bf16.mxu0 0
        %2541 = vmatpush1.bf16.msra.mxu0 0
        %2542 = vmatprep.mubr.bf16.mxu0 0
        %2543 = vmatmul.mubr.bf16.gmra.mrb[0].mxu0 %v1675
        %v2544 = vpop.f32.mrb[0].mxu0
        %v2545 = vadd.f32 0.0, %v2544
        %v2546 = vpop.f32.mrb[0].mxu0
        %v2547 = vpop.f32.mrb[0].mxu0
        %v2548 = vpop.f32.mrb[0].mxu0
        %2549 = vdwg.mxu0
        %v2550 = vadd.f32 %v2505, %v2545
        %v2551 = vmax.f32 %v2429, %v2550
        %v2552 = vld [vmem:[#allocation8] sm:$0x1]
        %v2554 = vlaneseq
        %v2555 = vshrl.u32 %v2554, 7
        %v2556 = vsub.s32 0, %v2555
        %v2557 = vrot.slane %v2552, %v2556
        %v2559 = vadd.f32 %v2551, %v2557
        %v2560 = vmax.f32 %v2559, 0.0
        %v2561 = vpack.c.bf16 %v2560, %v2560
        %v2562 = vld [vmem:[#allocation10] sm:$0x1]
        %vm2563 = vcmask 31744
        %v2565 = vsel %vm2563, %v2562, 0
        %vm2567 = vcmask 1041408
        %v2569 = vsel %vm2567, %v2561, 0
        %2571 = vmatprep.subr.bf16.mxu0 0
        %2572 = vmatpush1.bf16.msra.mxu0 %v2569
        %2573 = vmatprep.subr.bf16.mxu0 0
        %2574 = vmatpush1.bf16.msra.mxu0 0
        %2575 = vmatprep.subr.bf16.mxu0 0
        %2576 = vmatpush1.bf16.msra.mxu0 0
        %2577 = vmatprep.subr.bf16.mxu0 0
        %2578 = vmatpush1.bf16.msra.mxu0 0
        %2579 = vmatprep.subr.bf16.mxu0 0
        %2580 = vmatpush1.bf16.msra.mxu0 0
        %2581 = vmatprep.subr.bf16.mxu0 0
        %2582 = vmatpush1.bf16.msra.mxu0 0
        %2583 = vmatprep.subr.bf16.mxu0 0
        %2584 = vmatpush1.bf16.msra.mxu0 0
        %2585 = vmatprep.subr.bf16.mxu0 0
        %2586 = vmatpush1.bf16.msra.mxu0 0
        %2587 = vmatprep.subr.bf16.mxu0 0
        %2588 = vmatpush1.bf16.msra.mxu0 0
        %2589 = vmatprep.subr.bf16.mxu0 0
        %2590 = vmatpush1.bf16.msra.mxu0 0
        %2591 = vmatprep.subr.bf16.mxu0 0
        %2592 = vmatpush1.bf16.msra.mxu0 0
        %2593 = vmatprep.subr.bf16.mxu0 0
        %2594 = vmatpush1.bf16.msra.mxu0 0
        %2595 = vmatprep.subr.bf16.mxu0 0
        %2596 = vmatpush1.bf16.msra.mxu0 0
        %2597 = vmatprep.subr.bf16.mxu0 0
        %2598 = vmatpush1.bf16.msra.mxu0 0
        %2599 = vmatprep.subr.bf16.mxu0 0
        %2600 = vmatpush1.bf16.msra.mxu0 0
        %2601 = vmatprep.subr.bf16.mxu0 0
        %2602 = vmatpush1.bf16.msra.mxu0 0
        %2603 = vmatprep.mubr.bf16.mxu0 0
        %2604 = vmatmul.mubr.bf16.gmra.mrb[0].mxu0 %v2565
        %v2605 = vpop.f32.mrb[0].mxu0
        %v2606 = vadd.f32 0.0, %v2605
        %v2607 = vpop.f32.mrb[0].mxu0
        %v2608 = vpop.f32.mrb[0].mxu0
        %v2609 = vpop.f32.mrb[0].mxu0
        %2610 = vdwg.mxu0
        %v2611 = vpack.c.bf16 %v2606, %v2606
        %s2612 = scalar_lea.vmem [#allocation10], 1
        %v2613 = vld [vmem:[%s2612] sm:$0x1]
        %v2615 = vsel %vm2563, %v2613, 0
        %2617 = vmatprep.subr.bf16.mxu0 0
        %2618 = vmatpush1.bf16.msra.mxu0 %v2569
        %2619 = vmatprep.subr.bf16.mxu0 0
        %2620 = vmatpush1.bf16.msra.mxu0 0
        %2621 = vmatprep.subr.bf16.mxu0 0
        %2622 = vmatpush1.bf16.msra.mxu0 0
        %2623 = vmatprep.subr.bf16.mxu0 0
        %2624 = vmatpush1.bf16.msra.mxu0 0
        %2625 = vmatprep.subr.bf16.mxu0 0
        %2626 = vmatpush1.bf16.msra.mxu0 0
        %2627 = vmatprep.subr.bf16.mxu0 0
        %2628 = vmatpush1.bf16.msra.mxu0 0
        %2629 = vmatprep.subr.bf16.mxu0 0
        %2630 = vmatpush1.bf16.msra.mxu0 0
        %2631 = vmatprep.subr.bf16.mxu0 0
        %2632 = vmatpush1.bf16.msra.mxu0 0
        %2633 = vmatprep.subr.bf16.mxu0 0
        %2634 = vmatpush1.bf16.msra.mxu0 0
        %2635 = vmatprep.subr.bf16.mxu0 0
        %2636 = vmatpush1.bf16.msra.mxu0 0
        %2637 = vmatprep.subr.bf16.mxu0 0
        %2638 = vmatpush1.bf16.msra.mxu0 0
        %2639 = vmatprep.subr.bf16.mxu0 0
        %2640 = vmatpush1.bf16.msra.mxu0 0
        %2641 = vmatprep.subr.bf16.mxu0 0
        %2642 = vmatpush1.bf16.msra.mxu0 0
        %2643 = vmatprep.subr.bf16.mxu0 0
        %2644 = vmatpush1.bf16.msra.mxu0 0
        %2645 = vmatprep.subr.bf16.mxu0 0
        %2646 = vmatpush1.bf16.msra.mxu0 0
        %2647 = vmatprep.subr.bf16.mxu0 0
        %2648 = vmatpush1.bf16.msra.mxu0 0
        %2649 = vmatprep.mubr.bf16.mxu0 0
        %2650 = vmatmul.mubr.bf16.gmra.mrb[0].mxu0 %v2615
        %v2651 = vpop.f32.mrb[0].mxu0
        %v2652 = vadd.f32 0.0, %v2651
        %v2653 = vpop.f32.mrb[0].mxu0
        %v2654 = vpop.f32.mrb[0].mxu0
        %v2655 = vpop.f32.mrb[0].mxu0
        %2656 = vdwg.mxu0
        %v2657 = vpack.c.bf16 %v2652, %v2652
        %s2658 = scalar_lea.vmem [#allocation10], 2
        %v2659 = vld [vmem:[%s2658] sm:$0x1]
        %v2661 = vsel %vm2563, %v2659, 0
        %2663 = vmatprep.subr.bf16.mxu0 0
        %2664 = vmatpush1.bf16.msra.mxu0 %v2569
        %2665 = vmatprep.subr.bf16.mxu0 0
        %2666 = vmatpush1.bf16.msra.mxu0 0
        %2667 = vmatprep.subr.bf16.mxu0 0
        %2668 = vmatpush1.bf16.msra.mxu0 0
        %2669 = vmatprep.subr.bf16.mxu0 0
        %2670 = vmatpush1.bf16.msra.mxu0 0
        %2671 = vmatprep.subr.bf16.mxu0 0
        %2672 = vmatpush1.bf16.msra.mxu0 0
        %2673 = vmatprep.subr.bf16.mxu0 0
        %2674 = vmatpush1.bf16.msra.mxu0 0
        %2675 = vmatprep.subr.bf16.mxu0 0
        %2676 = vmatpush1.bf16.msra.mxu0 0
        %2677 = vmatprep.subr.bf16.mxu0 0
        %2678 = vmatpush1.bf16.msra.mxu0 0
        %2679 = vmatprep.subr.bf16.mxu0 0
        %2680 = vmatpush1.bf16.msra.mxu0 0
        %2681 = vmatprep.subr.bf16.mxu0 0
        %2682 = vmatpush1.bf16.msra.mxu0 0
        %2683 = vmatprep.subr.bf16.mxu0 0
        %2684 = vmatpush1.bf16.msra.mxu0 0
        %2685 = vmatprep.subr.bf16.mxu0 0
        %2686 = vmatpush1.bf16.msra.mxu0 0
        %2687 = vmatprep.subr.bf16.mxu0 0
        %2688 = vmatpush1.bf16.msra.mxu0 0
        %2689 = vmatprep.subr.bf16.mxu0 0
        %2690 = vmatpush1.bf16.msra.mxu0 0
        %2691 = vmatprep.subr.bf16.mxu0 0
        %2692 = vmatpush1.bf16.msra.mxu0 0
        %2693 = vmatprep.subr.bf16.mxu0 0
        %2694 = vmatpush1.bf16.msra.mxu0 0
        %2695 = vmatprep.mubr.bf16.mxu0 0
        %2696 = vmatmul.mubr.bf16.gmra.mrb[0].mxu0 %v2661
        %v2697 = vpop.f32.mrb[0].mxu0
        %v2698 = vadd.f32 0.0, %v2697
        %v2699 = vpop.f32.mrb[0].mxu0
        %v2700 = vpop.f32.mrb[0].mxu0
        %v2701 = vpop.f32.mrb[0].mxu0
        %2702 = vdwg.mxu0
        %v2703 = vpack.c.bf16 %v2698, %v2698
        %s2704 = scalar_lea.vmem [#allocation10], 3
        %v2705 = vld [vmem:[%s2704] sm:$0x1]
        %v2707 = vsel %vm2563, %v2705, 0
        %2709 = vmatprep.subr.bf16.mxu0 0
        %2710 = vmatpush1.bf16.msra.mxu0 %v2569
        %2711 = vmatprep.subr.bf16.mxu0 0
        %2712 = vmatpush1.bf16.msra.mxu0 0
        %2713 = vmatprep.subr.bf16.mxu0 0
        %2714 = vmatpush1.bf16.msra.mxu0 0
        %2715 = vmatprep.subr.bf16.mxu0 0
        %2716 = vmatpush1.bf16.msra.mxu0 0
        %2717 = vmatprep.subr.bf16.mxu0 0
        %2718 = vmatpush1.bf16.msra.mxu0 0
        %2719 = vmatprep.subr.bf16.mxu0 0
        %2720 = vmatpush1.bf16.msra.mxu0 0
        %2721 = vmatprep.subr.bf16.mxu0 0
        %2722 = vmatpush1.bf16.msra.mxu0 0
        %2723 = vmatprep.subr.bf16.mxu0 0
        %2724 = vmatpush1.bf16.msra.mxu0 0
        %2725 = vmatprep.subr.bf16.mxu0 0
        %2726 = vmatpush1.bf16.msra.mxu0 0
        %2727 = vmatprep.subr.bf16.mxu0 0
        %2728 = vmatpush1.bf16.msra.mxu0 0
        %2729 = vmatprep.subr.bf16.mxu0 0
        %2730 = vmatpush1.bf16.msra.mxu0 0
        %2731 = vmatprep.subr.bf16.mxu0 0
        %2732 = vmatpush1.bf16.msra.mxu0 0
        %2733 = vmatprep.subr.bf16.mxu0 0
        %2734 = vmatpush1.bf16.msra.mxu0 0
        %2735 = vmatprep.subr.bf16.mxu0 0
        %2736 = vmatpush1.bf16.msra.mxu0 0
        %2737 = vmatprep.subr.bf16.mxu0 0
        %2738 = vmatpush1.bf16.msra.mxu0 0
        %2739 = vmatprep.subr.bf16.mxu0 0
        %2740 = vmatpush1.bf16.msra.mxu0 0
        %2741 = vmatprep.mubr.bf16.mxu0 0
        %2742 = vmatmul.mubr.bf16.gmra.mrb[0].mxu0 %v2707
        %v2743 = vpop.f32.mrb[0].mxu0
        %v2744 = vadd.f32 0.0, %v2743
        %v2745 = vpop.f32.mrb[0].mxu0
        %v2746 = vpop.f32.mrb[0].mxu0
        %v2747 = vpop.f32.mrb[0].mxu0
        %2748 = vdwg.mxu0
        %v2749 = vpack.c.bf16 %v2744, %v2744
        %v2750 = vld [vmem:[#allocation11] sm:$0xf]
        %v2751 = vld [vmem:[#allocation11 + $0x4] sm:$0xf]
        %v2752 = vld [vmem:[#allocation11 + $0x8] sm:$0xf]
        %v2753 = vld [vmem:[#allocation11 + $0xc] sm:$0xf]
        %v2754 = vld [vmem:[#allocation11 + $0x10] sm:$0xf]
        %v2755 = vld [vmem:[#allocation11 + $0x14] sm:$0xf]
        %v2756 = vld [vmem:[#allocation11 + $0x18] sm:$0xf]
        %v2757 = vld [vmem:[#allocation11 + $0x1c] sm:$0xf]
        %v2758 = vld [vmem:[#allocation11 + $0x20] sm:$0xf]
        %v2759 = vld [vmem:[#allocation11 + $0x24] sm:$0xf]
        %v2760 = vld [vmem:[#allocation11 + $0x28] sm:$0xf]
        %v2761 = vld [vmem:[#allocation11 + $0x2c] sm:$0xf]
        %v2762 = vld [vmem:[#allocation11 + $0x30] sm:$0xf]
        %v2763 = vld [vmem:[#allocation11 + $0x34] sm:$0xf]
        %v2764 = vld [vmem:[#allocation11 + $0x38] sm:$0xf]
        %v2765 = vld [vmem:[#allocation11 + $0x3c] sm:$0xf]
        %s2766 = scalar_lea.vmem [#allocation11], 128
        %v2767 = vld [vmem:[%s2766] sm:$0xf]
        %v2768 = vld [vmem:[%s2766 + $0x4] sm:$0xf]
        %v2769 = vld [vmem:[%s2766 + $0x8] sm:$0xf]
        %v2770 = vld [vmem:[%s2766 + $0xc] sm:$0xf]
        %v2771 = vld [vmem:[%s2766 + $0x10] sm:$0xf]
        %v2772 = vld [vmem:[%s2766 + $0x14] sm:$0xf]
        %v2773 = vld [vmem:[%s2766 + $0x18] sm:$0xf]
        %v2774 = vld [vmem:[%s2766 + $0x1c] sm:$0xf]
        %v2775 = vld [vmem:[%s2766 + $0x20] sm:$0xf]
        %v2776 = vld [vmem:[%s2766 + $0x24] sm:$0xf]
        %v2777 = vld [vmem:[%s2766 + $0x28] sm:$0xf]
        %v2778 = vld [vmem:[%s2766 + $0x2c] sm:$0xf]
        %v2779 = vld [vmem:[%s2766 + $0x30] sm:$0xf]
        %v2780 = vld [vmem:[%s2766 + $0x34] sm:$0xf]
        %v2781 = vld [vmem:[%s2766 + $0x38] sm:$0xf]
        %v2782 = vld [vmem:[%s2766 + $0x3c] sm:$0xf]
        %v2799 = vunpack.c.l.b16 %v2767
        %v2800 = vunpack.c.l.b16 %v2768
        %v2801 = vunpack.c.l.b16 %v2769
        %v2802 = vunpack.c.l.b16 %v2770
        %v2803 = vunpack.c.l.b16 %v2771
        %v2804 = vunpack.c.l.b16 %v2772
        %v2805 = vunpack.c.l.b16 %v2773
        %v2806 = vunpack.c.l.b16 %v2774
        %v2807 = vunpack.c.l.b16 %v2775
        %v2808 = vunpack.c.l.b16 %v2776
        %v2809 = vunpack.c.l.b16 %v2777
        %v2810 = vunpack.c.l.b16 %v2778
        %v2811 = vunpack.c.l.b16 %v2779
        %v2812 = vunpack.c.l.b16 %v2780
        %v2813 = vunpack.c.l.b16 %v2781
        %v2814 = vunpack.c.l.b16 %v2782
        %v2815 = vpack.c.b16 %v2800, %v2799
        %v2816 = vpack.c.b16 %v2802, %v2801
        %v2817 = vpack.c.b16 %v2804, %v2803
        %v2818 = vpack.c.b16 %v2806, %v2805
        %v2819 = vpack.c.b16 %v2808, %v2807
        %v2820 = vpack.c.b16 %v2810, %v2809
        %v2821 = vpack.c.b16 %v2812, %v2811
        %v2822 = vpack.c.b16 %v2814, %v2813
        %2831 = vmatprep.subr.bf16.mxu0 0
        %2832 = vmatpush1.bf16.msra.mxu0 %v2815
        %2833 = vmatprep.subr.bf16.mxu0 0
        %2834 = vmatpush1.bf16.msra.mxu0 %v2816
        %2835 = vmatprep.subr.bf16.mxu0 0
        %2836 = vmatpush1.bf16.msra.mxu0 %v2817
        %2837 = vmatprep.subr.bf16.mxu0 0
        %2838 = vmatpush1.bf16.msra.mxu0 %v2818
        %2839 = vmatprep.subr.bf16.mxu0 0
        %2840 = vmatpush1.bf16.msra.mxu0 %v2819
        %2841 = vmatprep.subr.bf16.mxu0 0
        %2842 = vmatpush1.bf16.msra.mxu0 %v2820
        %2843 = vmatprep.subr.bf16.mxu0 0
        %2844 = vmatpush1.bf16.msra.mxu0 %v2821
        %2845 = vmatprep.subr.bf16.mxu0 0
        %2846 = vmatpush1.bf16.msra.mxu0 %v2822
        %2847 = vmatprep.subr.bf16.mxu0 0
        %2848 = vmatpush1.bf16.msra.mxu0 0
        %2849 = vmatprep.subr.bf16.mxu0 0
        %2850 = vmatpush1.bf16.msra.mxu0 0
        %2851 = vmatprep.subr.bf16.mxu0 0
        %2852 = vmatpush1.bf16.msra.mxu0 0
        %2853 = vmatprep.subr.bf16.mxu0 0
        %2854 = vmatpush1.bf16.msra.mxu0 0
        %2855 = vmatprep.subr.bf16.mxu0 0
        %2856 = vmatpush1.bf16.msra.mxu0 0
        %2857 = vmatprep.subr.bf16.mxu0 0
        %2858 = vmatpush1.bf16.msra.mxu0 0
        %2859 = vmatprep.subr.bf16.mxu0 0
        %2860 = vmatpush1.bf16.msra.mxu0 0
        %2861 = vmatprep.subr.bf16.mxu0 0
        %2862 = vmatpush1.bf16.msra.mxu0 0
        %2863 = vmatprep.mubr.bf16.mxu0 0
        %2864 = vmatmul.mubr.bf16.gmra.mrb[0].mxu0 %v2657
        %v2865 = vpop.f32.mrb[0].mxu0
        %v2866 = vadd.f32 0.0, %v2865
        %v2867 = vpop.f32.mrb[0].mxu0
        %v2868 = vpop.f32.mrb[0].mxu0
        %v2869 = vpop.f32.mrb[0].mxu0
        %2870 = vdwg.mxu0
        %v2887 = vunpack.c.l.b16 %v2750
        %v2888 = vunpack.c.l.b16 %v2751
        %v2889 = vunpack.c.l.b16 %v2752
        %v2890 = vunpack.c.l.b16 %v2753
        %v2891 = vunpack.c.l.b16 %v2754
        %v2892 = vunpack.c.l.b16 %v2755
        %v2893 = vunpack.c.l.b16 %v2756
        %v2894 = vunpack.c.l.b16 %v2757
        %v2895 = vunpack.c.l.b16 %v2758
        %v2896 = vunpack.c.l.b16 %v2759
        %v2897 = vunpack.c.l.b16 %v2760
        %v2898 = vunpack.c.l.b16 %v2761
        %v2899 = vunpack.c.l.b16 %v2762
        %v2900 = vunpack.c.l.b16 %v2763
        %v2901 = vunpack.c.l.b16 %v2764
        %v2902 = vunpack.c.l.b16 %v2765
        %v2903 = vpack.c.b16 %v2888, %v2887
        %v2904 = vpack.c.b16 %v2890, %v2889
        %v2905 = vpack.c.b16 %v2892, %v2891
        %v2906 = vpack.c.b16 %v2894, %v2893
        %v2907 = vpack.c.b16 %v2896, %v2895
        %v2908 = vpack.c.b16 %v2898, %v2897
        %v2909 = vpack.c.b16 %v2900, %v2899
        %v2910 = vpack.c.b16 %v2902, %v2901
        %2919 = vmatprep.subr.bf16.mxu0 0
        %2920 = vmatpush1.bf16.msra.mxu0 %v2903
        %2921 = vmatprep.subr.bf16.mxu0 0
        %2922 = vmatpush1.bf16.msra.mxu0 %v2904
        %2923 = vmatprep.subr.bf16.mxu0 0
        %2924 = vmatpush1.bf16.msra.mxu0 %v2905
        %2925 = vmatprep.subr.bf16.mxu0 0
        %2926 = vmatpush1.bf16.msra.mxu0 %v2906
        %2927 = vmatprep.subr.bf16.mxu0 0
        %2928 = vmatpush1.bf16.msra.mxu0 %v2907
        %2929 = vmatprep.subr.bf16.mxu0 0
        %2930 = vmatpush1.bf16.msra.mxu0 %v2908
        %2931 = vmatprep.subr.bf16.mxu0 0
        %2932 = vmatpush1.bf16.msra.mxu0 %v2909
        %2933 = vmatprep.subr.bf16.mxu0 0
        %2934 = vmatpush1.bf16.msra.mxu0 %v2910
        %2935 = vmatprep.subr.bf16.mxu0 0
        %2936 = vmatpush1.bf16.msra.mxu0 0
        %2937 = vmatprep.subr.bf16.mxu0 0
        %2938 = vmatpush1.bf16.msra.mxu0 0
        %2939 = vmatprep.subr.bf16.mxu0 0
        %2940 = vmatpush1.bf16.msra.mxu0 0
        %2941 = vmatprep.subr.bf16.mxu0 0
        %2942 = vmatpush1.bf16.msra.mxu0 0
        %2943 = vmatprep.subr.bf16.mxu0 0
        %2944 = vmatpush1.bf16.msra.mxu0 0
        %2945 = vmatprep.subr.bf16.mxu0 0
        %2946 = vmatpush1.bf16.msra.mxu0 0
        %2947 = vmatprep.subr.bf16.mxu0 0
        %2948 = vmatpush1.bf16.msra.mxu0 0
        %2949 = vmatprep.subr.bf16.mxu0 0
        %2950 = vmatpush1.bf16.msra.mxu0 0
        %2951 = vmatprep.mubr.bf16.mxu0 0
        %2952 = vmatmul.mubr.bf16.gmra.mrb[0].mxu0 %v2611
        %v2953 = vpop.f32.mrb[0].mxu0
        %v2954 = vadd.f32 %v2866, %v2953
        %v2955 = vpop.f32.mrb[0].mxu0
        %v2956 = vpop.f32.mrb[0].mxu0
        %v2957 = vpop.f32.mrb[0].mxu0
        %2958 = vdwg.mxu0
        %s2959 = scalar_lea.vmem [#allocation11], 256
        %v2960 = vld [vmem:[%s2959] sm:$0xf]
        %v2961 = vld [vmem:[%s2959 + $0x4] sm:$0xf]
        %v2962 = vld [vmem:[%s2959 + $0x8] sm:$0xf]
        %v2963 = vld [vmem:[%s2959 + $0xc] sm:$0xf]
        %v2964 = vld [vmem:[%s2959 + $0x10] sm:$0xf]
        %v2965 = vld [vmem:[%s2959 + $0x14] sm:$0xf]
        %v2966 = vld [vmem:[%s2959 + $0x18] sm:$0xf]
        %v2967 = vld [vmem:[%s2959 + $0x1c] sm:$0xf]
        %v2968 = vld [vmem:[%s2959 + $0x20] sm:$0xf]
        %v2969 = vld [vmem:[%s2959 + $0x24] sm:$0xf]
        %v2970 = vld [vmem:[%s2959 + $0x28] sm:$0xf]
        %v2971 = vld [vmem:[%s2959 + $0x2c] sm:$0xf]
        %v2972 = vld [vmem:[%s2959 + $0x30] sm:$0xf]
        %v2973 = vld [vmem:[%s2959 + $0x34] sm:$0xf]
        %v2974 = vld [vmem:[%s2959 + $0x38] sm:$0xf]
        %v2975 = vld [vmem:[%s2959 + $0x3c] sm:$0xf]
        %v2992 = vunpack.c.l.b16 %v2960
        %v2993 = vunpack.c.l.b16 %v2961
        %v2994 = vunpack.c.l.b16 %v2962
        %v2995 = vunpack.c.l.b16 %v2963
        %v2996 = vunpack.c.l.b16 %v2964
        %v2997 = vunpack.c.l.b16 %v2965
        %v2998 = vunpack.c.l.b16 %v2966
        %v2999 = vunpack.c.l.b16 %v2967
        %v3000 = vunpack.c.l.b16 %v2968
        %v3001 = vunpack.c.l.b16 %v2969
        %v3002 = vunpack.c.l.b16 %v2970
        %v3003 = vunpack.c.l.b16 %v2971
        %v3004 = vunpack.c.l.b16 %v2972
        %v3005 = vunpack.c.l.b16 %v2973
        %v3006 = vunpack.c.l.b16 %v2974
        %v3007 = vunpack.c.l.b16 %v2975
        %v3008 = vpack.c.b16 %v2993, %v2992
        %v3009 = vpack.c.b16 %v2995, %v2994
        %v3010 = vpack.c.b16 %v2997, %v2996
        %v3011 = vpack.c.b16 %v2999, %v2998
        %v3012 = vpack.c.b16 %v3001, %v3000
        %v3013 = vpack.c.b16 %v3003, %v3002
        %v3014 = vpack.c.b16 %v3005, %v3004
        %v3015 = vpack.c.b16 %v3007, %v3006
        %3024 = vmatprep.subr.bf16.mxu0 0
        %3025 = vmatpush1.bf16.msra.mxu0 %v3008
        %3026 = vmatprep.subr.bf16.mxu0 0
        %3027 = vmatpush1.bf16.msra.mxu0 %v3009
        %3028 = vmatprep.subr.bf16.mxu0 0
        %3029 = vmatpush1.bf16.msra.mxu0 %v3010
        %3030 = vmatprep.subr.bf16.mxu0 0
        %3031 = vmatpush1.bf16.msra.mxu0 %v3011
        %3032 = vmatprep.subr.bf16.mxu0 0
        %3033 = vmatpush1.bf16.msra.mxu0 %v3012
        %3034 = vmatprep.subr.bf16.mxu0 0
        %3035 = vmatpush1.bf16.msra.mxu0 %v3013
        %3036 = vmatprep.subr.bf16.mxu0 0
        %3037 = vmatpush1.bf16.msra.mxu0 %v3014
        %3038 = vmatprep.subr.bf16.mxu0 0
        %3039 = vmatpush1.bf16.msra.mxu0 %v3015
        %3040 = vmatprep.subr.bf16.mxu0 0
        %3041 = vmatpush1.bf16.msra.mxu0 0
        %3042 = vmatprep.subr.bf16.mxu0 0
        %3043 = vmatpush1.bf16.msra.mxu0 0
        %3044 = vmatprep.subr.bf16.mxu0 0
        %3045 = vmatpush1.bf16.msra.mxu0 0
        %3046 = vmatprep.subr.bf16.mxu0 0
        %3047 = vmatpush1.bf16.msra.mxu0 0
        %3048 = vmatprep.subr.bf16.mxu0 0
        %3049 = vmatpush1.bf16.msra.mxu0 0
        %3050 = vmatprep.subr.bf16.mxu0 0
        %3051 = vmatpush1.bf16.msra.mxu0 0
        %3052 = vmatprep.subr.bf16.mxu0 0
        %3053 = vmatpush1.bf16.msra.mxu0 0
        %3054 = vmatprep.subr.bf16.mxu0 0
        %3055 = vmatpush1.bf16.msra.mxu0 0
        %3056 = vmatprep.mubr.bf16.mxu0 0
        %3057 = vmatmul.mubr.bf16.gmra.mrb[0].mxu0 %v2703
        %v3058 = vpop.f32.mrb[0].mxu0
        %v3059 = vadd.f32 0.0, %v3058
        %v3060 = vpop.f32.mrb[0].mxu0
        %v3061 = vpop.f32.mrb[0].mxu0
        %v3062 = vpop.f32.mrb[0].mxu0
        %3063 = vdwg.mxu0
        %v3064 = vadd.f32 %v2954, %v3059
        %s3065 = scalar_lea.vmem [#allocation11], 64
        %v3066 = vld [vmem:[%s3065] sm:$0xf]
        %v3067 = vld [vmem:[%s3065 + $0x4] sm:$0xf]
        %v3068 = vld [vmem:[%s3065 + $0x8] sm:$0xf]
        %v3069 = vld [vmem:[%s3065 + $0xc] sm:$0xf]
        %v3070 = vld [vmem:[%s3065 + $0x10] sm:$0xf]
        %v3071 = vld [vmem:[%s3065 + $0x14] sm:$0xf]
        %v3072 = vld [vmem:[%s3065 + $0x18] sm:$0xf]
        %v3073 = vld [vmem:[%s3065 + $0x1c] sm:$0xf]
        %v3074 = vld [vmem:[%s3065 + $0x20] sm:$0xf]
        %v3075 = vld [vmem:[%s3065 + $0x24] sm:$0xf]
        %v3076 = vld [vmem:[%s3065 + $0x28] sm:$0xf]
        %v3077 = vld [vmem:[%s3065 + $0x2c] sm:$0xf]
        %v3078 = vld [vmem:[%s3065 + $0x30] sm:$0xf]
        %v3079 = vld [vmem:[%s3065 + $0x34] sm:$0xf]
        %v3080 = vld [vmem:[%s3065 + $0x38] sm:$0xf]
        %v3081 = vld [vmem:[%s3065 + $0x3c] sm:$0xf]
        %s3082 = scalar_lea.vmem [#allocation11], 192
        %v3083 = vld [vmem:[%s3082] sm:$0xf]
        %v3084 = vld [vmem:[%s3082 + $0x4] sm:$0xf]
        %v3085 = vld [vmem:[%s3082 + $0x8] sm:$0xf]
        %v3086 = vld [vmem:[%s3082 + $0xc] sm:$0xf]
        %v3087 = vld [vmem:[%s3082 + $0x10] sm:$0xf]
        %v3088 = vld [vmem:[%s3082 + $0x14] sm:$0xf]
        %v3089 = vld [vmem:[%s3082 + $0x18] sm:$0xf]
        %v3090 = vld [vmem:[%s3082 + $0x1c] sm:$0xf]
        %v3091 = vld [vmem:[%s3082 + $0x20] sm:$0xf]
        %v3092 = vld [vmem:[%s3082 + $0x24] sm:$0xf]
        %v3093 = vld [vmem:[%s3082 + $0x28] sm:$0xf]
        %v3094 = vld [vmem:[%s3082 + $0x2c] sm:$0xf]
        %v3095 = vld [vmem:[%s3082 + $0x30] sm:$0xf]
        %v3096 = vld [vmem:[%s3082 + $0x34] sm:$0xf]
        %v3097 = vld [vmem:[%s3082 + $0x38] sm:$0xf]
        %v3098 = vld [vmem:[%s3082 + $0x3c] sm:$0xf]
        %v3115 = vunpack.c.l.b16 %v3083
        %v3116 = vunpack.c.l.b16 %v3084
        %v3117 = vunpack.c.l.b16 %v3085
        %v3118 = vunpack.c.l.b16 %v3086
        %v3119 = vunpack.c.l.b16 %v3087
        %v3120 = vunpack.c.l.b16 %v3088
        %v3121 = vunpack.c.l.b16 %v3089
        %v3122 = vunpack.c.l.b16 %v3090
        %v3123 = vunpack.c.l.b16 %v3091
        %v3124 = vunpack.c.l.b16 %v3092
        %v3125 = vunpack.c.l.b16 %v3093
        %v3126 = vunpack.c.l.b16 %v3094
        %v3127 = vunpack.c.l.b16 %v3095
        %v3128 = vunpack.c.l.b16 %v3096
        %v3129 = vunpack.c.l.b16 %v3097
        %v3130 = vunpack.c.l.b16 %v3098
        %v3131 = vpack.c.b16 %v3116, %v3115
        %v3132 = vpack.c.b16 %v3118, %v3117
        %v3133 = vpack.c.b16 %v3120, %v3119
        %v3134 = vpack.c.b16 %v3122, %v3121
        %v3135 = vpack.c.b16 %v3124, %v3123
        %v3136 = vpack.c.b16 %v3126, %v3125
        %v3137 = vpack.c.b16 %v3128, %v3127
        %v3138 = vpack.c.b16 %v3130, %v3129
        %3147 = vmatprep.subr.bf16.mxu0 0
        %3148 = vmatpush1.bf16.msra.mxu0 %v3131
        %3149 = vmatprep.subr.bf16.mxu0 0
        %3150 = vmatpush1.bf16.msra.mxu0 %v3132
        %3151 = vmatprep.subr.bf16.mxu0 0
        %3152 = vmatpush1.bf16.msra.mxu0 %v3133
        %3153 = vmatprep.subr.bf16.mxu0 0
        %3154 = vmatpush1.bf16.msra.mxu0 %v3134
        %3155 = vmatprep.subr.bf16.mxu0 0
        %3156 = vmatpush1.bf16.msra.mxu0 %v3135
        %3157 = vmatprep.subr.bf16.mxu0 0
        %3158 = vmatpush1.bf16.msra.mxu0 %v3136
        %3159 = vmatprep.subr.bf16.mxu0 0
        %3160 = vmatpush1.bf16.msra.mxu0 %v3137
        %3161 = vmatprep.subr.bf16.mxu0 0
        %3162 = vmatpush1.bf16.msra.mxu0 %v3138
        %3163 = vmatprep.subr.bf16.mxu0 0
        %3164 = vmatpush1.bf16.msra.mxu0 0
        %3165 = vmatprep.subr.bf16.mxu0 0
        %3166 = vmatpush1.bf16.msra.mxu0 0
        %3167 = vmatprep.subr.bf16.mxu0 0
        %3168 = vmatpush1.bf16.msra.mxu0 0
        %3169 = vmatprep.subr.bf16.mxu0 0
        %3170 = vmatpush1.bf16.msra.mxu0 0
        %3171 = vmatprep.subr.bf16.mxu0 0
        %3172 = vmatpush1.bf16.msra.mxu0 0
        %3173 = vmatprep.subr.bf16.mxu0 0
        %3174 = vmatpush1.bf16.msra.mxu0 0
        %3175 = vmatprep.subr.bf16.mxu0 0
        %3176 = vmatpush1.bf16.msra.mxu0 0
        %3177 = vmatprep.subr.bf16.mxu0 0
        %3178 = vmatpush1.bf16.msra.mxu0 0
        %3179 = vmatprep.mubr.bf16.mxu0 0
        %3180 = vmatmul.mubr.bf16.gmra.mrb[0].mxu0 %v2657
        %v3181 = vpop.f32.mrb[0].mxu0
        %v3182 = vadd.f32 0.0, %v3181
        %v3183 = vpop.f32.mrb[0].mxu0
        %v3184 = vpop.f32.mrb[0].mxu0
        %v3185 = vpop.f32.mrb[0].mxu0
        %3186 = vdwg.mxu0
        %v3203 = vunpack.c.l.b16 %v3066
        %v3204 = vunpack.c.l.b16 %v3067
        %v3205 = vunpack.c.l.b16 %v3068
        %v3206 = vunpack.c.l.b16 %v3069
        %v3207 = vunpack.c.l.b16 %v3070
        %v3208 = vunpack.c.l.b16 %v3071
        %v3209 = vunpack.c.l.b16 %v3072
        %v3210 = vunpack.c.l.b16 %v3073
        %v3211 = vunpack.c.l.b16 %v3074
        %v3212 = vunpack.c.l.b16 %v3075
        %v3213 = vunpack.c.l.b16 %v3076
        %v3214 = vunpack.c.l.b16 %v3077
        %v3215 = vunpack.c.l.b16 %v3078
        %v3216 = vunpack.c.l.b16 %v3079
        %v3217 = vunpack.c.l.b16 %v3080
        %v3218 = vunpack.c.l.b16 %v3081
        %v3219 = vpack.c.b16 %v3204, %v3203
        %v3220 = vpack.c.b16 %v3206, %v3205
        %v3221 = vpack.c.b16 %v3208, %v3207
        %v3222 = vpack.c.b16 %v3210, %v3209
        %v3223 = vpack.c.b16 %v3212, %v3211
        %v3224 = vpack.c.b16 %v3214, %v3213
        %v3225 = vpack.c.b16 %v3216, %v3215
        %v3226 = vpack.c.b16 %v3218, %v3217
        %3235 = vmatprep.subr.bf16.mxu0 0
        %3236 = vmatpush1.bf16.msra.mxu0 %v3219
        %3237 = vmatprep.subr.bf16.mxu0 0
        %3238 = vmatpush1.bf16.msra.mxu0 %v3220
        %3239 = vmatprep.subr.bf16.mxu0 0
        %3240 = vmatpush1.bf16.msra.mxu0 %v3221
        %3241 = vmatprep.subr.bf16.mxu0 0
        %3242 = vmatpush1.bf16.msra.mxu0 %v3222
        %3243 = vmatprep.subr.bf16.mxu0 0
        %3244 = vmatpush1.bf16.msra.mxu0 %v3223
        %3245 = vmatprep.subr.bf16.mxu0 0
        %3246 = vmatpush1.bf16.msra.mxu0 %v3224
        %3247 = vmatprep.subr.bf16.mxu0 0
        %3248 = vmatpush1.bf16.msra.mxu0 %v3225
        %3249 = vmatprep.subr.bf16.mxu0 0
        %3250 = vmatpush1.bf16.msra.mxu0 %v3226
        %3251 = vmatprep.subr.bf16.mxu0 0
        %3252 = vmatpush1.bf16.msra.mxu0 0
        %3253 = vmatprep.subr.bf16.mxu0 0
        %3254 = vmatpush1.bf16.msra.mxu0 0
        %3255 = vmatprep.subr.bf16.mxu0 0
        %3256 = vmatpush1.bf16.msra.mxu0 0
        %3257 = vmatprep.subr.bf16.mxu0 0
        %3258 = vmatpush1.bf16.msra.mxu0 0
        %3259 = vmatprep.subr.bf16.mxu0 0
        %3260 = vmatpush1.bf16.msra.mxu0 0
        %3261 = vmatprep.subr.bf16.mxu0 0
        %3262 = vmatpush1.bf16.msra.mxu0 0
        %3263 = vmatprep.subr.bf16.mxu0 0
        %3264 = vmatpush1.bf16.msra.mxu0 0
        %3265 = vmatprep.subr.bf16.mxu0 0
        %3266 = vmatpush1.bf16.msra.mxu0 0
        %3267 = vmatprep.mubr.bf16.mxu0 0
        %3268 = vmatmul.mubr.bf16.gmra.mrb[0].mxu0 %v2611
        %v3269 = vpop.f32.mrb[0].mxu0
        %v3270 = vadd.f32 %v3182, %v3269
        %v3271 = vpop.f32.mrb[0].mxu0
        %v3272 = vpop.f32.mrb[0].mxu0
        %v3273 = vpop.f32.mrb[0].mxu0
        %3274 = vdwg.mxu0
        %s3275 = scalar_lea.vmem [#allocation11], 320
        %v3276 = vld [vmem:[%s3275] sm:$0xf]
        %v3277 = vld [vmem:[%s3275 + $0x4] sm:$0xf]
        %v3278 = vld [vmem:[%s3275 + $0x8] sm:$0xf]
        %v3279 = vld [vmem:[%s3275 + $0xc] sm:$0xf]
        %v3280 = vld [vmem:[%s3275 + $0x10] sm:$0xf]
        %v3281 = vld [vmem:[%s3275 + $0x14] sm:$0xf]
        %v3282 = vld [vmem:[%s3275 + $0x18] sm:$0xf]
        %v3283 = vld [vmem:[%s3275 + $0x1c] sm:$0xf]
        %v3284 = vld [vmem:[%s3275 + $0x20] sm:$0xf]
        %v3285 = vld [vmem:[%s3275 + $0x24] sm:$0xf]
        %v3286 = vld [vmem:[%s3275 + $0x28] sm:$0xf]
        %v3287 = vld [vmem:[%s3275 + $0x2c] sm:$0xf]
        %v3288 = vld [vmem:[%s3275 + $0x30] sm:$0xf]
        %v3289 = vld [vmem:[%s3275 + $0x34] sm:$0xf]
        %v3290 = vld [vmem:[%s3275 + $0x38] sm:$0xf]
        %v3291 = vld [vmem:[%s3275 + $0x3c] sm:$0xf]
        %v3308 = vunpack.c.l.b16 %v3276
        %v3309 = vunpack.c.l.b16 %v3277
        %v3310 = vunpack.c.l.b16 %v3278
        %v3311 = vunpack.c.l.b16 %v3279
        %v3312 = vunpack.c.l.b16 %v3280
        %v3313 = vunpack.c.l.b16 %v3281
        %v3314 = vunpack.c.l.b16 %v3282
        %v3315 = vunpack.c.l.b16 %v3283
        %v3316 = vunpack.c.l.b16 %v3284
        %v3317 = vunpack.c.l.b16 %v3285
        %v3318 = vunpack.c.l.b16 %v3286
        %v3319 = vunpack.c.l.b16 %v3287
        %v3320 = vunpack.c.l.b16 %v3288
        %v3321 = vunpack.c.l.b16 %v3289
        %v3322 = vunpack.c.l.b16 %v3290
        %v3323 = vunpack.c.l.b16 %v3291
        %v3324 = vpack.c.b16 %v3309, %v3308
        %v3325 = vpack.c.b16 %v3311, %v3310
        %v3326 = vpack.c.b16 %v3313, %v3312
        %v3327 = vpack.c.b16 %v3315, %v3314
        %v3328 = vpack.c.b16 %v3317, %v3316
        %v3329 = vpack.c.b16 %v3319, %v3318
        %v3330 = vpack.c.b16 %v3321, %v3320
        %v3331 = vpack.c.b16 %v3323, %v3322
        %3340 = vmatprep.subr.bf16.mxu0 0
        %3341 = vmatpush1.bf16.msra.mxu0 %v3324
        %3342 = vmatprep.subr.bf16.mxu0 0
        %3343 = vmatpush1.bf16.msra.mxu0 %v3325
        %3344 = vmatprep.subr.bf16.mxu0 0
        %3345 = vmatpush1.bf16.msra.mxu0 %v3326
        %3346 = vmatprep.subr.bf16.mxu0 0
        %3347 = vmatpush1.bf16.msra.mxu0 %v3327
        %3348 = vmatprep.subr.bf16.mxu0 0
        %3349 = vmatpush1.bf16.msra.mxu0 %v3328
        %3350 = vmatprep.subr.bf16.mxu0 0
        %3351 = vmatpush1.bf16.msra.mxu0 %v3329
        %3352 = vmatprep.subr.bf16.mxu0 0
        %3353 = vmatpush1.bf16.msra.mxu0 %v3330
        %3354 = vmatprep.subr.bf16.mxu0 0
        %3355 = vmatpush1.bf16.msra.mxu0 %v3331
        %3356 = vmatprep.subr.bf16.mxu0 0
        %3357 = vmatpush1.bf16.msra.mxu0 0
        %3358 = vmatprep.subr.bf16.mxu0 0
        %3359 = vmatpush1.bf16.msra.mxu0 0
        %3360 = vmatprep.subr.bf16.mxu0 0
        %3361 = vmatpush1.bf16.msra.mxu0 0
        %3362 = vmatprep.subr.bf16.mxu0 0
        %3363 = vmatpush1.bf16.msra.mxu0 0
        %3364 = vmatprep.subr.bf16.mxu0 0
        %3365 = vmatpush1.bf16.msra.mxu0 0
        %3366 = vmatprep.subr.bf16.mxu0 0
        %3367 = vmatpush1.bf16.msra.mxu0 0
        %3368 = vmatprep.subr.bf16.mxu0 0
        %3369 = vmatpush1.bf16.msra.mxu0 0
        %3370 = vmatprep.subr.bf16.mxu0 0
        %3371 = vmatpush1.bf16.msra.mxu0 0
        %3372 = vmatprep.mubr.bf16.mxu0 0
        %3373 = vmatmul.mubr.bf16.gmra.mrb[0].mxu0 %v2703
        %v3374 = vpop.f32.mrb[0].mxu0
        %v3375 = vadd.f32 0.0, %v3374
        %v3376 = vpop.f32.mrb[0].mxu0
        %v3377 = vpop.f32.mrb[0].mxu0
        %v3378 = vpop.f32.mrb[0].mxu0
        %3379 = vdwg.mxu0
        %v3380 = vadd.f32 %v3270, %v3375
        %v3381 = vmax.f32 %v3064, %v3380
        %3382 = vmatprep.subr.bf16.mxu0 0
        %3383 = vmatpush1.bf16.msra.mxu0 %v2815
        %3384 = vmatprep.subr.bf16.mxu0 0
        %3385 = vmatpush1.bf16.msra.mxu0 %v2816
        %3386 = vmatprep.subr.bf16.mxu0 0
        %3387 = vmatpush1.bf16.msra.mxu0 %v2817
        %3388 = vmatprep.subr.bf16.mxu0 0
        %3389 = vmatpush1.bf16.msra.mxu0 %v2818
        %3390 = vmatprep.subr.bf16.mxu0 0
        %3391 = vmatpush1.bf16.msra.mxu0 %v2819
        %3392 = vmatprep.subr.bf16.mxu0 0
        %3393 = vmatpush1.bf16.msra.mxu0 %v2820
        %3394 = vmatprep.subr.bf16.mxu0 0
        %3395 = vmatpush1.bf16.msra.mxu0 %v2821
        %3396 = vmatprep.subr.bf16.mxu0 0
        %3397 = vmatpush1.bf16.msra.mxu0 %v2822
        %3398 = vmatprep.subr.bf16.mxu0 0
        %3399 = vmatpush1.bf16.msra.mxu0 0
        %3400 = vmatprep.subr.bf16.mxu0 0
        %3401 = vmatpush1.bf16.msra.mxu0 0
        %3402 = vmatprep.subr.bf16.mxu0 0
        %3403 = vmatpush1.bf16.msra.mxu0 0
        %3404 = vmatprep.subr.bf16.mxu0 0
        %3405 = vmatpush1.bf16.msra.mxu0 0
        %3406 = vmatprep.subr.bf16.mxu0 0
        %3407 = vmatpush1.bf16.msra.mxu0 0
        %3408 = vmatprep.subr.bf16.mxu0 0
        %3409 = vmatpush1.bf16.msra.mxu0 0
        %3410 = vmatprep.subr.bf16.mxu0 0
        %3411 = vmatpush1.bf16.msra.mxu0 0
        %3412 = vmatprep.subr.bf16.mxu0 0
        %3413 = vmatpush1.bf16.msra.mxu0 0
        %3414 = vmatprep.mubr.bf16.mxu0 0
        %3415 = vmatmul.mubr.bf16.gmra.mrb[0].mxu0 %v2703
        %v3416 = vpop.f32.mrb[0].mxu0
        %v3417 = vadd.f32 0.0, %v3416
        %v3418 = vpop.f32.mrb[0].mxu0
        %v3419 = vpop.f32.mrb[0].mxu0
        %v3420 = vpop.f32.mrb[0].mxu0
        %3421 = vdwg.mxu0
        %3422 = vmatprep.subr.bf16.mxu0 0
        %3423 = vmatpush1.bf16.msra.mxu0 %v2903
        %3424 = vmatprep.subr.bf16.mxu0 0
        %3425 = vmatpush1.bf16.msra.mxu0 %v2904
        %3426 = vmatprep.subr.bf16.mxu0 0
        %3427 = vmatpush1.bf16.msra.mxu0 %v2905
        %3428 = vmatprep.subr.bf16.mxu0 0
        %3429 = vmatpush1.bf16.msra.mxu0 %v2906
        %3430 = vmatprep.subr.bf16.mxu0 0
        %3431 = vmatpush1.bf16.msra.mxu0 %v2907
        %3432 = vmatprep.subr.bf16.mxu0 0
        %3433 = vmatpush1.bf16.msra.mxu0 %v2908
        %3434 = vmatprep.subr.bf16.mxu0 0
        %3435 = vmatpush1.bf16.msra.mxu0 %v2909
        %3436 = vmatprep.subr.bf16.mxu0 0
        %3437 = vmatpush1.bf16.msra.mxu0 %v2910
        %3438 = vmatprep.subr.bf16.mxu0 0
        %3439 = vmatpush1.bf16.msra.mxu0 0
        %3440 = vmatprep.subr.bf16.mxu0 0
        %3441 = vmatpush1.bf16.msra.mxu0 0
        %3442 = vmatprep.subr.bf16.mxu0 0
        %3443 = vmatpush1.bf16.msra.mxu0 0
        %3444 = vmatprep.subr.bf16.mxu0 0
        %3445 = vmatpush1.bf16.msra.mxu0 0
        %3446 = vmatprep.subr.bf16.mxu0 0
        %3447 = vmatpush1.bf16.msra.mxu0 0
        %3448 = vmatprep.subr.bf16.mxu0 0
        %3449 = vmatpush1.bf16.msra.mxu0 0
        %3450 = vmatprep.subr.bf16.mxu0 0
        %3451 = vmatpush1.bf16.msra.mxu0 0
        %3452 = vmatprep.subr.bf16.mxu0 0
        %3453 = vmatpush1.bf16.msra.mxu0 0
        %3454 = vmatprep.mubr.bf16.mxu0 0
        %3455 = vmatmul.mubr.bf16.gmra.mrb[0].mxu0 %v2657
        %v3456 = vpop.f32.mrb[0].mxu0
        %v3457 = vadd.f32 %v3417, %v3456
        %v3458 = vpop.f32.mrb[0].mxu0
        %v3459 = vpop.f32.mrb[0].mxu0
        %v3460 = vpop.f32.mrb[0].mxu0
        %3461 = vdwg.mxu0
        %3462 = vmatprep.subr.bf16.mxu0 0
        %3463 = vmatpush1.bf16.msra.mxu0 %v3008
        %3464 = vmatprep.subr.bf16.mxu0 0
        %3465 = vmatpush1.bf16.msra.mxu0 %v3009
        %3466 = vmatprep.subr.bf16.mxu0 0
        %3467 = vmatpush1.bf16.msra.mxu0 %v3010
        %3468 = vmatprep.subr.bf16.mxu0 0
        %3469 = vmatpush1.bf16.msra.mxu0 %v3011
        %3470 = vmatprep.subr.bf16.mxu0 0
        %3471 = vmatpush1.bf16.msra.mxu0 %v3012
        %3472 = vmatprep.subr.bf16.mxu0 0
        %3473 = vmatpush1.bf16.msra.mxu0 %v3013
        %3474 = vmatprep.subr.bf16.mxu0 0
        %3475 = vmatpush1.bf16.msra.mxu0 %v3014
        %3476 = vmatprep.subr.bf16.mxu0 0
        %3477 = vmatpush1.bf16.msra.mxu0 %v3015
        %3478 = vmatprep.subr.bf16.mxu0 0
        %3479 = vmatpush1.bf16.msra.mxu0 0
        %3480 = vmatprep.subr.bf16.mxu0 0
        %3481 = vmatpush1.bf16.msra.mxu0 0
        %3482 = vmatprep.subr.bf16.mxu0 0
        %3483 = vmatpush1.bf16.msra.mxu0 0
        %3484 = vmatprep.subr.bf16.mxu0 0
        %3485 = vmatpush1.bf16.msra.mxu0 0
        %3486 = vmatprep.subr.bf16.mxu0 0
        %3487 = vmatpush1.bf16.msra.mxu0 0
        %3488 = vmatprep.subr.bf16.mxu0 0
        %3489 = vmatpush1.bf16.msra.mxu0 0
        %3490 = vmatprep.subr.bf16.mxu0 0
        %3491 = vmatpush1.bf16.msra.mxu0 0
        %3492 = vmatprep.subr.bf16.mxu0 0
        %3493 = vmatpush1.bf16.msra.mxu0 0
        %3494 = vmatprep.mubr.bf16.mxu0 0
        %3495 = vmatmul.mubr.bf16.gmra.mrb[0].mxu0 %v2749
        %v3496 = vpop.f32.mrb[0].mxu0
        %v3497 = vadd.f32 0.0, %v3496
        %v3498 = vpop.f32.mrb[0].mxu0
        %v3499 = vpop.f32.mrb[0].mxu0
        %v3500 = vpop.f32.mrb[0].mxu0
        %3501 = vdwg.mxu0
        %v3502 = vadd.f32 %v3457, %v3497
        %v3503 = vmax.f32 %v3381, %v3502
        %3504 = vmatprep.subr.bf16.mxu0 0
        %3505 = vmatpush1.bf16.msra.mxu0 %v3131
        %3506 = vmatprep.subr.bf16.mxu0 0
        %3507 = vmatpush1.bf16.msra.mxu0 %v3132
        %3508 = vmatprep.subr.bf16.mxu0 0
        %3509 = vmatpush1.bf16.msra.mxu0 %v3133
        %3510 = vmatprep.subr.bf16.mxu0 0
        %3511 = vmatpush1.bf16.msra.mxu0 %v3134
        %3512 = vmatprep.subr.bf16.mxu0 0
        %3513 = vmatpush1.bf16.msra.mxu0 %v3135
        %3514 = vmatprep.subr.bf16.mxu0 0
        %3515 = vmatpush1.bf16.msra.mxu0 %v3136
        %3516 = vmatprep.subr.bf16.mxu0 0
        %3517 = vmatpush1.bf16.msra.mxu0 %v3137
        %3518 = vmatprep.subr.bf16.mxu0 0
        %3519 = vmatpush1.bf16.msra.mxu0 %v3138
        %3520 = vmatprep.subr.bf16.mxu0 0
        %3521 = vmatpush1.bf16.msra.mxu0 0
        %3522 = vmatprep.subr.bf16.mxu0 0
        %3523 = vmatpush1.bf16.msra.mxu0 0
        %3524 = vmatprep.subr.bf16.mxu0 0
        %3525 = vmatpush1.bf16.msra.mxu0 0
        %3526 = vmatprep.subr.bf16.mxu0 0
        %3527 = vmatpush1.bf16.msra.mxu0 0
        %3528 = vmatprep.subr.bf16.mxu0 0
        %3529 = vmatpush1.bf16.msra.mxu0 0
        %3530 = vmatprep.subr.bf16.mxu0 0
        %3531 = vmatpush1.bf16.msra.mxu0 0
        %3532 = vmatprep.subr.bf16.mxu0 0
        %3533 = vmatpush1.bf16.msra.mxu0 0
        %3534 = vmatprep.subr.bf16.mxu0 0
        %3535 = vmatpush1.bf16.msra.mxu0 0
        %3536 = vmatprep.mubr.bf16.mxu0 0
        %3537 = vmatmul.mubr.bf16.gmra.mrb[0].mxu0 %v2703
        %v3538 = vpop.f32.mrb[0].mxu0
        %v3539 = vadd.f32 0.0, %v3538
        %v3540 = vpop.f32.mrb[0].mxu0
        %v3541 = vpop.f32.mrb[0].mxu0
        %v3542 = vpop.f32.mrb[0].mxu0
        %3543 = vdwg.mxu0
        %3544 = vmatprep.subr.bf16.mxu0 0
        %3545 = vmatpush1.bf16.msra.mxu0 %v3219
        %3546 = vmatprep.subr.bf16.mxu0 0
        %3547 = vmatpush1.bf16.msra.mxu0 %v3220
        %3548 = vmatprep.subr.bf16.mxu0 0
        %3549 = vmatpush1.bf16.msra.mxu0 %v3221
        %3550 = vmatprep.subr.bf16.mxu0 0
        %3551 = vmatpush1.bf16.msra.mxu0 %v3222
        %3552 = vmatprep.subr.bf16.mxu0 0
        %3553 = vmatpush1.bf16.msra.mxu0 %v3223
        %3554 = vmatprep.subr.bf16.mxu0 0
        %3555 = vmatpush1.bf16.msra.mxu0 %v3224
        %3556 = vmatprep.subr.bf16.mxu0 0
        %3557 = vmatpush1.bf16.msra.mxu0 %v3225
        %3558 = vmatprep.subr.bf16.mxu0 0
        %3559 = vmatpush1.bf16.msra.mxu0 %v3226
        %3560 = vmatprep.subr.bf16.mxu0 0
        %3561 = vmatpush1.bf16.msra.mxu0 0
        %3562 = vmatprep.subr.bf16.mxu0 0
        %3563 = vmatpush1.bf16.msra.mxu0 0
        %3564 = vmatprep.subr.bf16.mxu0 0
        %3565 = vmatpush1.bf16.msra.mxu0 0
        %3566 = vmatprep.subr.bf16.mxu0 0
        %3567 = vmatpush1.bf16.msra.mxu0 0
        %3568 = vmatprep.subr.bf16.mxu0 0
        %3569 = vmatpush1.bf16.msra.mxu0 0
        %3570 = vmatprep.subr.bf16.mxu0 0
        %3571 = vmatpush1.bf16.msra.mxu0 0
        %3572 = vmatprep.subr.bf16.mxu0 0
        %3573 = vmatpush1.bf16.msra.mxu0 0
        %3574 = vmatprep.subr.bf16.mxu0 0
        %3575 = vmatpush1.bf16.msra.mxu0 0
        %3576 = vmatprep.mubr.bf16.mxu0 0
        %3577 = vmatmul.mubr.bf16.gmra.mrb[0].mxu0 %v2657
        %v3578 = vpop.f32.mrb[0].mxu0
        %v3579 = vadd.f32 %v3539, %v3578
        %v3580 = vpop.f32.mrb[0].mxu0
        %v3581 = vpop.f32.mrb[0].mxu0
        %v3582 = vpop.f32.mrb[0].mxu0
        %3583 = vdwg.mxu0
        %3584 = vmatprep.subr.bf16.mxu0 0
        %3585 = vmatpush1.bf16.msra.mxu0 %v3324
        %3586 = vmatprep.subr.bf16.mxu0 0
        %3587 = vmatpush1.bf16.msra.mxu0 %v3325
        %3588 = vmatprep.subr.bf16.mxu0 0
        %3589 = vmatpush1.bf16.msra.mxu0 %v3326
        %3590 = vmatprep.subr.bf16.mxu0 0
        %3591 = vmatpush1.bf16.msra.mxu0 %v3327
        %3592 = vmatprep.subr.bf16.mxu0 0
        %3593 = vmatpush1.bf16.msra.mxu0 %v3328
        %3594 = vmatprep.subr.bf16.mxu0 0
        %3595 = vmatpush1.bf16.msra.mxu0 %v3329
        %3596 = vmatprep.subr.bf16.mxu0 0
        %3597 = vmatpush1.bf16.msra.mxu0 %v3330
        %3598 = vmatprep.subr.bf16.mxu0 0
        %3599 = vmatpush1.bf16.msra.mxu0 %v3331
        %3600 = vmatprep.subr.bf16.mxu0 0
        %3601 = vmatpush1.bf16.msra.mxu0 0
        %3602 = vmatprep.subr.bf16.mxu0 0
        %3603 = vmatpush1.bf16.msra.mxu0 0
        %3604 = vmatprep.subr.bf16.mxu0 0
        %3605 = vmatpush1.bf16.msra.mxu0 0
        %3606 = vmatprep.subr.bf16.mxu0 0
        %3607 = vmatpush1.bf16.msra.mxu0 0
        %3608 = vmatprep.subr.bf16.mxu0 0
        %3609 = vmatpush1.bf16.msra.mxu0 0
        %3610 = vmatprep.subr.bf16.mxu0 0
        %3611 = vmatpush1.bf16.msra.mxu0 0
        %3612 = vmatprep.subr.bf16.mxu0 0
        %3613 = vmatpush1.bf16.msra.mxu0 0
        %3614 = vmatprep.subr.bf16.mxu0 0
        %3615 = vmatpush1.bf16.msra.mxu0 0
        %3616 = vmatprep.mubr.bf16.mxu0 0
        %3617 = vmatmul.mubr.bf16.gmra.mrb[0].mxu0 %v2749
        %v3618 = vpop.f32.mrb[0].mxu0
        %v3619 = vadd.f32 0.0, %v3618
        %v3620 = vpop.f32.mrb[0].mxu0
        %v3621 = vpop.f32.mrb[0].mxu0
        %v3622 = vpop.f32.mrb[0].mxu0
        %3623 = vdwg.mxu0
        %v3624 = vadd.f32 %v3579, %v3619
        %v3625 = vmax.f32 %v3503, %v3624
        %v3626 = vld [vmem:[#allocation13] sm:$0x1]
        %v3628 = vlaneseq
        %v3629 = vshrl.u32 %v3628, 7
        %v3630 = vsub.s32 0, %v3629
        %v3631 = vrot.slane %v3626, %v3630
        %v3633 = vadd.f32 %v3625, %v3631
        %v3634 = vmax.f32 %v3633, 0.0
        %v3635 = vpack.c.bf16 %v3634, %v3634
        %v3636 = vld [vmem:[%s10] sm:$0xff]
        %v3637 = vld [vmem:[%s10 + $0x8] sm:$0xff]
        %v3638 = vld [vmem:[%s10 + $0x10] sm:$0xff]
        %v3639 = vld [vmem:[%s10 + $0x18] sm:$0xff]
        %v3640 = vld [vmem:[%s10 + $0x20] sm:$0xff]
        %v3641 = vld [vmem:[%s10 + $0x28] sm:$0xff]
        %v3642 = vld [vmem:[%s10 + $0x30] sm:$0xff]
        %v3643 = vld [vmem:[%s10 + $0x38] sm:$0xff]
        %v3644 = vld [vmem:[%s10 + $0x40] sm:$0xff]
        %v3645 = vld [vmem:[%s10 + $0x48] sm:$0xff]
        %v3646 = vld [vmem:[%s10 + $0x50] sm:$0xff]
        %v3647 = vld [vmem:[%s10 + $0x58] sm:$0xff]
        %v3648 = vld [vmem:[%s10 + $0x60] sm:$0xff]
        %v3649 = vld [vmem:[%s10 + $0x68] sm:$0xff]
        %v3650 = vld [vmem:[%s10 + $0x70] sm:$0xff]
        %v3651 = vld [vmem:[%s10 + $0x78] sm:$0xff]
        %v3652 = vld [vmem:[%s10 + $0x80] sm:$0xff]
        %v3653 = vld [vmem:[%s10 + $0x88] sm:$0xff]
        %v3654 = vld [vmem:[%s10 + $0x90] sm:$0xff]
        %v3655 = vld [vmem:[%s10 + $0x98] sm:$0xff]
        %v3656 = vld [vmem:[%s10 + $0xa0] sm:$0xff]
        %v3657 = vld [vmem:[%s10 + $0xa8] sm:$0xff]
        %v3658 = vld [vmem:[%s10 + $0xb0] sm:$0xff]
        %v3659 = vld [vmem:[%s10 + $0xb8] sm:$0xff]
        %v3660 = vld [vmem:[%s10 + $0xc0] sm:$0xff]
        %v3661 = vld [vmem:[%s10 + $0xc8] sm:$0xff]
        %v3662 = vld [vmem:[%s10 + $0xd0] sm:$0xff]
        %v3663 = vld [vmem:[%s10 + $0xd8] sm:$0xff]
        %v3664 = vld [vmem:[%s10 + $0xe0] sm:$0xff]
        %v3665 = vld [vmem:[%s10 + $0xe8] sm:$0xff]
        %v3666 = vld [vmem:[%s10 + $0xf0] sm:$0xff]
        %v3667 = vld [vmem:[%s10 + $0xf8] sm:$0xff]
        %s3668 = scalar_lea.vmem %s10, 256
        %v3669 = vld [vmem:[%s3668] sm:$0xff]
        %v3670 = vld [vmem:[%s3668 + $0x8] sm:$0xff]
        %v3671 = vld [vmem:[%s3668 + $0x10] sm:$0xff]
        %v3672 = vld [vmem:[%s3668 + $0x18] sm:$0xff]
        %v3673 = vld [vmem:[%s3668 + $0x20] sm:$0xff]
        %v3674 = vld [vmem:[%s3668 + $0x28] sm:$0xff]
        %v3675 = vld [vmem:[%s3668 + $0x30] sm:$0xff]
        %v3676 = vld [vmem:[%s3668 + $0x38] sm:$0xff]
        %v3677 = vld [vmem:[%s3668 + $0x40] sm:$0xff]
        %v3678 = vld [vmem:[%s3668 + $0x48] sm:$0xff]
        %v3679 = vld [vmem:[%s3668 + $0x50] sm:$0xff]
        %v3680 = vld [vmem:[%s3668 + $0x58] sm:$0xff]
        %v3681 = vld [vmem:[%s3668 + $0x60] sm:$0xff]
        %v3682 = vld [vmem:[%s3668 + $0x68] sm:$0xff]
        %v3683 = vld [vmem:[%s3668 + $0x70] sm:$0xff]
        %v3684 = vld [vmem:[%s3668 + $0x78] sm:$0xff]
        %v3685 = vld [vmem:[%s3668 + $0x80] sm:$0xff]
        %v3686 = vld [vmem:[%s3668 + $0x88] sm:$0xff]
        %v3687 = vld [vmem:[%s3668 + $0x90] sm:$0xff]
        %v3688 = vld [vmem:[%s3668 + $0x98] sm:$0xff]
        %v3689 = vld [vmem:[%s3668 + $0xa0] sm:$0xff]
        %v3690 = vld [vmem:[%s3668 + $0xa8] sm:$0xff]
        %v3691 = vld [vmem:[%s3668 + $0xb0] sm:$0xff]
        %v3692 = vld [vmem:[%s3668 + $0xb8] sm:$0xff]
        %v3693 = vld [vmem:[%s3668 + $0xc0] sm:$0xff]
        %v3694 = vld [vmem:[%s3668 + $0xc8] sm:$0xff]
        %v3695 = vld [vmem:[%s3668 + $0xd0] sm:$0xff]
        %v3696 = vld [vmem:[%s3668 + $0xd8] sm:$0xff]
        %v3697 = vld [vmem:[%s3668 + $0xe0] sm:$0xff]
        %v3698 = vld [vmem:[%s3668 + $0xe8] sm:$0xff]
        %v3699 = vld [vmem:[%s3668 + $0xf0] sm:$0xff]
        %v3700 = vld [vmem:[%s3668 + $0xf8] sm:$0xff]
        %v3702 = vshrl.u32 %v3635, 16
        %v3737 = vunpack.c.l.b16 %v3669
        %v3738 = vunpack.c.h.b16 %v3669
        %v3739 = vunpack.c.l.b16 %v3670
        %v3740 = vunpack.c.h.b16 %v3670
        %v3741 = vunpack.c.l.b16 %v3671
        %v3742 = vunpack.c.h.b16 %v3671
        %v3743 = vunpack.c.l.b16 %v3672
        %v3744 = vunpack.c.h.b16 %v3672
        %v3745 = vunpack.c.l.b16 %v3673
        %v3746 = vunpack.c.h.b16 %v3673
        %v3747 = vunpack.c.l.b16 %v3674
        %v3748 = vunpack.c.h.b16 %v3674
        %v3749 = vunpack.c.l.b16 %v3675
        %v3750 = vunpack.c.h.b16 %v3675
        %v3751 = vunpack.c.l.b16 %v3676
        %v3752 = vunpack.c.h.b16 %v3676
        %v3753 = vunpack.c.l.b16 %v3677
        %v3754 = vunpack.c.h.b16 %v3677
        %v3755 = vunpack.c.l.b16 %v3678
        %v3756 = vunpack.c.h.b16 %v3678
        %v3757 = vunpack.c.l.b16 %v3679
        %v3758 = vunpack.c.h.b16 %v3679
        %v3759 = vunpack.c.l.b16 %v3680
        %v3760 = vunpack.c.h.b16 %v3680
        %v3761 = vunpack.c.l.b16 %v3681
        %v3762 = vunpack.c.h.b16 %v3681
        %v3763 = vunpack.c.l.b16 %v3682
        %v3764 = vunpack.c.h.b16 %v3682
        %v3765 = vunpack.c.l.b16 %v3683
        %v3766 = vunpack.c.h.b16 %v3683
        %v3767 = vunpack.c.l.b16 %v3684
        %v3768 = vunpack.c.h.b16 %v3684
        %v3769 = vunpack.c.l.b16 %v3685
        %v3770 = vunpack.c.h.b16 %v3685
        %v3771 = vunpack.c.l.b16 %v3686
        %v3772 = vunpack.c.h.b16 %v3686
        %v3773 = vunpack.c.l.b16 %v3687
        %v3774 = vunpack.c.h.b16 %v3687
        %v3775 = vunpack.c.l.b16 %v3688
        %v3776 = vunpack.c.h.b16 %v3688
        %v3777 = vunpack.c.l.b16 %v3689
        %v3778 = vunpack.c.h.b16 %v3689
        %v3779 = vunpack.c.l.b16 %v3690
        %v3780 = vunpack.c.h.b16 %v3690
        %v3781 = vunpack.c.l.b16 %v3691
        %v3782 = vunpack.c.h.b16 %v3691
        %v3783 = vunpack.c.l.b16 %v3692
        %v3784 = vunpack.c.h.b16 %v3692
        %v3785 = vunpack.c.l.b16 %v3693
        %v3786 = vunpack.c.h.b16 %v3693
        %v3787 = vunpack.c.l.b16 %v3694
        %v3788 = vunpack.c.h.b16 %v3694
        %v3789 = vunpack.c.l.b16 %v3695
        %v3790 = vunpack.c.h.b16 %v3695
        %v3791 = vunpack.c.l.b16 %v3696
        %v3792 = vunpack.c.h.b16 %v3696
        %v3793 = vunpack.c.l.b16 %v3697
        %v3794 = vunpack.c.h.b16 %v3697
        %v3795 = vunpack.c.l.b16 %v3698
        %v3796 = vunpack.c.h.b16 %v3698
        %v3797 = vunpack.c.l.b16 %v3699
        %v3798 = vunpack.c.h.b16 %v3699
        %v3799 = vunpack.c.l.b16 %v3700
        %v3800 = vunpack.c.h.b16 %v3700
        %v3801 = vpack.c.b16 %v3741, %v3737
        %v3802 = vpack.c.b16 %v3742, %v3738
        %v3803 = vpack.c.b16 %v3743, %v3739
        %v3804 = vpack.c.b16 %v3744, %v3740
        %v3805 = vpack.c.b16 %v3749, %v3745
        %v3806 = vpack.c.b16 %v3750, %v3746
        %v3807 = vpack.c.b16 %v3751, %v3747
        %v3808 = vpack.c.b16 %v3752, %v3748
        %v3809 = vpack.c.b16 %v3757, %v3753
        %v3810 = vpack.c.b16 %v3758, %v3754
        %v3811 = vpack.c.b16 %v3759, %v3755
        %v3812 = vpack.c.b16 %v3760, %v3756
        %v3813 = vpack.c.b16 %v3765, %v3761
        %v3814 = vpack.c.b16 %v3766, %v3762
        %v3815 = vpack.c.b16 %v3767, %v3763
        %v3816 = vpack.c.b16 %v3768, %v3764
        %v3817 = vpack.c.b16 %v3773, %v3769
        %v3818 = vpack.c.b16 %v3774, %v3770
        %v3819 = vpack.c.b16 %v3775, %v3771
        %v3820 = vpack.c.b16 %v3776, %v3772
        %v3821 = vpack.c.b16 %v3781, %v3777
        %v3822 = vpack.c.b16 %v3782, %v3778
        %v3823 = vpack.c.b16 %v3783, %v3779
        %v3824 = vpack.c.b16 %v3784, %v3780
        %v3825 = vpack.c.b16 %v3789, %v3785
        %v3826 = vpack.c.b16 %v3790, %v3786
        %v3827 = vpack.c.b16 %v3791, %v3787
        %v3828 = vpack.c.b16 %v3792, %v3788
        %v3829 = vpack.c.b16 %v3797, %v3793
        %v3830 = vpack.c.b16 %v3798, %v3794
        %v3831 = vpack.c.b16 %v3799, %v3795
        %v3832 = vpack.c.b16 %v3800, %v3796
        %3865 = vmatprep.subr.bf16.mxu0 %v3802
        %3866 = vmatpush1.bf16.msra.mxu0 %v3801
        %3867 = vmatprep.subr.bf16.mxu0 %v3806
        %3868 = vmatpush1.bf16.msra.mxu0 %v3805
        %3869 = vmatprep.subr.bf16.mxu0 %v3810
        %3870 = vmatpush1.bf16.msra.mxu0 %v3809
        %3871 = vmatprep.subr.bf16.mxu0 %v3814
        %3872 = vmatpush1.bf16.msra.mxu0 %v3813
        %3873 = vmatprep.subr.bf16.mxu0 %v3818
        %3874 = vmatpush1.bf16.msra.mxu0 %v3817
        %3875 = vmatprep.subr.bf16.mxu0 %v3822
        %3876 = vmatpush1.bf16.msra.mxu0 %v3821
        %3877 = vmatprep.subr.bf16.mxu0 %v3826
        %3878 = vmatpush1.bf16.msra.mxu0 %v3825
        %3879 = vmatprep.subr.bf16.mxu0 %v3830
        %3880 = vmatpush1.bf16.msra.mxu0 %v3829
        %3881 = vmatprep.subr.bf16.mxu0 0
        %3882 = vmatpush1.bf16.msra.mxu0 0
        %3883 = vmatprep.subr.bf16.mxu0 0
        %3884 = vmatpush1.bf16.msra.mxu0 0
        %3885 = vmatprep.subr.bf16.mxu0 0
        %3886 = vmatpush1.bf16.msra.mxu0 0
        %3887 = vmatprep.subr.bf16.mxu0 0
        %3888 = vmatpush1.bf16.msra.mxu0 0
        %3889 = vmatprep.subr.bf16.mxu0 0
        %3890 = vmatpush1.bf16.msra.mxu0 0
        %3891 = vmatprep.subr.bf16.mxu0 0
        %3892 = vmatpush1.bf16.msra.mxu0 0
        %3893 = vmatprep.subr.bf16.mxu0 0
        %3894 = vmatpush1.bf16.msra.mxu0 0
        %3895 = vmatprep.subr.bf16.mxu0 0
        %3896 = vmatpush1.bf16.msra.mxu0 0
        %3897 = vmatprep.mubr.bf16.mxu0 0
        %3898 = vmatmul.mubr.bf16.gmra.mrb[0].mxu0 %v3702
        %v3899 = vpop.f32.mrb[0].mxu0
        %v3900 = vadd.f32 0.0, %v3899
        %v3901 = vpop.f32.mrb[0].mxu0
        %v3902 = vadd.f32 0.0, %v3901
        %v3903 = vpop.f32.mrb[0].mxu0
        %v3904 = vpop.f32.mrb[0].mxu0
        %3905 = vdwg.mxu0
        %3906 = vmatprep.subr.bf16.mxu0 %v3804
        %3907 = vmatpush1.bf16.msra.mxu0 %v3803
        %3908 = vmatprep.subr.bf16.mxu0 %v3808
        %3909 = vmatpush1.bf16.msra.mxu0 %v3807
        %3910 = vmatprep.subr.bf16.mxu0 %v3812
        %3911 = vmatpush1.bf16.msra.mxu0 %v3811
        %3912 = vmatprep.subr.bf16.mxu0 %v3816
        %3913 = vmatpush1.bf16.msra.mxu0 %v3815
        %3914 = vmatprep.subr.bf16.mxu0 %v3820
        %3915 = vmatpush1.bf16.msra.mxu0 %v3819
        %3916 = vmatprep.subr.bf16.mxu0 %v3824
        %3917 = vmatpush1.bf16.msra.mxu0 %v3823
        %3918 = vmatprep.subr.bf16.mxu0 %v3828
        %3919 = vmatpush1.bf16.msra.mxu0 %v3827
        %3920 = vmatprep.subr.bf16.mxu0 %v3832
        %3921 = vmatpush1.bf16.msra.mxu0 %v3831
        %3922 = vmatprep.subr.bf16.mxu0 0
        %3923 = vmatpush1.bf16.msra.mxu0 0
        %3924 = vmatprep.subr.bf16.mxu0 0
        %3925 = vmatpush1.bf16.msra.mxu0 0
        %3926 = vmatprep.subr.bf16.mxu0 0
        %3927 = vmatpush1.bf16.msra.mxu0 0
        %3928 = vmatprep.subr.bf16.mxu0 0
        %3929 = vmatpush1.bf16.msra.mxu0 0
        %3930 = vmatprep.subr.bf16.mxu0 0
        %3931 = vmatpush1.bf16.msra.mxu0 0
        %3932 = vmatprep.subr.bf16.mxu0 0
        %3933 = vmatpush1.bf16.msra.mxu0 0
        %3934 = vmatprep.subr.bf16.mxu0 0
        %3935 = vmatpush1.bf16.msra.mxu0 0
        %3936 = vmatprep.subr.bf16.mxu0 0
        %3937 = vmatpush1.bf16.msra.mxu0 0
        %3938 = vmatprep.mubr.bf16.mxu0 0
        %3939 = vmatmul.mubr.bf16.gmra.mrb[0].mxu0 %v3702
        %v3940 = vpop.f32.mrb[0].mxu0
        %v3941 = vadd.f32 0.0, %v3940
        %v3942 = vpop.f32.mrb[0].mxu0
        %v3943 = vadd.f32 0.0, %v3942
        %v3944 = vpop.f32.mrb[0].mxu0
        %v3945 = vpop.f32.mrb[0].mxu0
        %3946 = vdwg.mxu0
        %v3979 = vunpack.c.l.b16 %v3636
        %v3980 = vunpack.c.h.b16 %v3636
        %v3981 = vunpack.c.l.b16 %v3637
        %v3982 = vunpack.c.h.b16 %v3637
        %v3983 = vunpack.c.l.b16 %v3638
        %v3984 = vunpack.c.h.b16 %v3638
        %v3985 = vunpack.c.l.b16 %v3639
        %v3986 = vunpack.c.h.b16 %v3639
        %v3987 = vunpack.c.l.b16 %v3640
        %v3988 = vunpack.c.h.b16 %v3640
        %v3989 = vunpack.c.l.b16 %v3641
        %v3990 = vunpack.c.h.b16 %v3641
        %v3991 = vunpack.c.l.b16 %v3642
        %v3992 = vunpack.c.h.b16 %v3642
        %v3993 = vunpack.c.l.b16 %v3643
        %v3994 = vunpack.c.h.b16 %v3643
        %v3995 = vunpack.c.l.b16 %v3644
        %v3996 = vunpack.c.h.b16 %v3644
        %v3997 = vunpack.c.l.b16 %v3645
        %v3998 = vunpack.c.h.b16 %v3645
        %v3999 = vunpack.c.l.b16 %v3646
        %v4000 = vunpack.c.h.b16 %v3646
        %v4001 = vunpack.c.l.b16 %v3647
        %v4002 = vunpack.c.h.b16 %v3647
        %v4003 = vunpack.c.l.b16 %v3648
        %v4004 = vunpack.c.h.b16 %v3648
        %v4005 = vunpack.c.l.b16 %v3649
        %v4006 = vunpack.c.h.b16 %v3649
        %v4007 = vunpack.c.l.b16 %v3650
        %v4008 = vunpack.c.h.b16 %v3650
        %v4009 = vunpack.c.l.b16 %v3651
        %v4010 = vunpack.c.h.b16 %v3651
        %v4011 = vunpack.c.l.b16 %v3652
        %v4012 = vunpack.c.h.b16 %v3652
        %v4013 = vunpack.c.l.b16 %v3653
        %v4014 = vunpack.c.h.b16 %v3653
        %v4015 = vunpack.c.l.b16 %v3654
        %v4016 = vunpack.c.h.b16 %v3654
        %v4017 = vunpack.c.l.b16 %v3655
        %v4018 = vunpack.c.h.b16 %v3655
        %v4019 = vunpack.c.l.b16 %v3656
        %v4020 = vunpack.c.h.b16 %v3656
        %v4021 = vunpack.c.l.b16 %v3657
        %v4022 = vunpack.c.h.b16 %v3657
        %v4023 = vunpack.c.l.b16 %v3658
        %v4024 = vunpack.c.h.b16 %v3658
        %v4025 = vunpack.c.l.b16 %v3659
        %v4026 = vunpack.c.h.b16 %v3659
        %v4027 = vunpack.c.l.b16 %v3660
        %v4028 = vunpack.c.h.b16 %v3660
        %v4029 = vunpack.c.l.b16 %v3661
        %v4030 = vunpack.c.h.b16 %v3661
        %v4031 = vunpack.c.l.b16 %v3662
        %v4032 = vunpack.c.h.b16 %v3662
        %v4033 = vunpack.c.l.b16 %v3663
        %v4034 = vunpack.c.h.b16 %v3663
        %v4035 = vunpack.c.l.b16 %v3664
        %v4036 = vunpack.c.h.b16 %v3664
        %v4037 = vunpack.c.l.b16 %v3665
        %v4038 = vunpack.c.h.b16 %v3665
        %v4039 = vunpack.c.l.b16 %v3666
        %v4040 = vunpack.c.h.b16 %v3666
        %v4041 = vunpack.c.l.b16 %v3667
        %v4042 = vunpack.c.h.b16 %v3667
        %v4043 = vpack.c.b16 %v3983, %v3979
        %v4044 = vpack.c.b16 %v3984, %v3980
        %v4045 = vpack.c.b16 %v3985, %v3981
        %v4046 = vpack.c.b16 %v3986, %v3982
        %v4047 = vpack.c.b16 %v3991, %v3987
        %v4048 = vpack.c.b16 %v3992, %v3988
        %v4049 = vpack.c.b16 %v3993, %v3989
        %v4050 = vpack.c.b16 %v3994, %v3990
        %v4051 = vpack.c.b16 %v3999, %v3995
        %v4052 = vpack.c.b16 %v4000, %v3996
        %v4053 = vpack.c.b16 %v4001, %v3997
        %v4054 = vpack.c.b16 %v4002, %v3998
        %v4055 = vpack.c.b16 %v4007, %v4003
        %v4056 = vpack.c.b16 %v4008, %v4004
        %v4057 = vpack.c.b16 %v4009, %v4005
        %v4058 = vpack.c.b16 %v4010, %v4006
        %v4059 = vpack.c.b16 %v4015, %v4011
        %v4060 = vpack.c.b16 %v4016, %v4012
        %v4061 = vpack.c.b16 %v4017, %v4013
        %v4062 = vpack.c.b16 %v4018, %v4014
        %v4063 = vpack.c.b16 %v4023, %v4019
        %v4064 = vpack.c.b16 %v4024, %v4020
        %v4065 = vpack.c.b16 %v4025, %v4021
        %v4066 = vpack.c.b16 %v4026, %v4022
        %v4067 = vpack.c.b16 %v4031, %v4027
        %v4068 = vpack.c.b16 %v4032, %v4028
        %v4069 = vpack.c.b16 %v4033, %v4029
        %v4070 = vpack.c.b16 %v4034, %v4030
        %v4071 = vpack.c.b16 %v4039, %v4035
        %v4072 = vpack.c.b16 %v4040, %v4036
        %v4073 = vpack.c.b16 %v4041, %v4037
        %v4074 = vpack.c.b16 %v4042, %v4038
        %4107 = vmatprep.subr.bf16.mxu0 %v4044
        %4108 = vmatpush1.bf16.msra.mxu0 %v4043
        %4109 = vmatprep.subr.bf16.mxu0 %v4048
        %4110 = vmatpush1.bf16.msra.mxu0 %v4047
        %4111 = vmatprep.subr.bf16.mxu0 %v4052
        %4112 = vmatpush1.bf16.msra.mxu0 %v4051
        %4113 = vmatprep.subr.bf16.mxu0 %v4056
        %4114 = vmatpush1.bf16.msra.mxu0 %v4055
        %4115 = vmatprep.subr.bf16.mxu0 %v4060
        %4116 = vmatpush1.bf16.msra.mxu0 %v4059
        %4117 = vmatprep.subr.bf16.mxu0 %v4064
        %4118 = vmatpush1.bf16.msra.mxu0 %v4063
        %4119 = vmatprep.subr.bf16.mxu0 %v4068
        %4120 = vmatpush1.bf16.msra.mxu0 %v4067
        %4121 = vmatprep.subr.bf16.mxu0 %v4072
        %4122 = vmatpush1.bf16.msra.mxu0 %v4071
        %4123 = vmatprep.subr.bf16.mxu0 0
        %4124 = vmatpush1.bf16.msra.mxu0 0
        %4125 = vmatprep.subr.bf16.mxu0 0
        %4126 = vmatpush1.bf16.msra.mxu0 0
        %4127 = vmatprep.subr.bf16.mxu0 0
        %4128 = vmatpush1.bf16.msra.mxu0 0
        %4129 = vmatprep.subr.bf16.mxu0 0
        %4130 = vmatpush1.bf16.msra.mxu0 0
        %4131 = vmatprep.subr.bf16.mxu0 0
        %4132 = vmatpush1.bf16.msra.mxu0 0
        %4133 = vmatprep.subr.bf16.mxu0 0
        %4134 = vmatpush1.bf16.msra.mxu0 0
        %4135 = vmatprep.subr.bf16.mxu0 0
        %4136 = vmatpush1.bf16.msra.mxu0 0
        %4137 = vmatprep.subr.bf16.mxu0 0
        %4138 = vmatpush1.bf16.msra.mxu0 0
        %4139 = vmatprep.mubr.bf16.mxu0 0
        %4140 = vmatmul.mubr.bf16.gmra.mrb[0].mxu0 %v3635
        %v4141 = vpop.f32.mrb[0].mxu0
        %v4142 = vadd.f32 %v3900, %v4141
        %v4143 = vpop.f32.mrb[0].mxu0
        %v4144 = vadd.f32 %v3902, %v4143
        %v4145 = vpop.f32.mrb[0].mxu0
        %v4146 = vpop.f32.mrb[0].mxu0
        %4147 = vdwg.mxu0
        %4148 = vmatprep.subr.bf16.mxu0 %v4046
        %4149 = vmatpush1.bf16.msra.mxu0 %v4045
        %4150 = vmatprep.subr.bf16.mxu0 %v4050
        %4151 = vmatpush1.bf16.msra.mxu0 %v4049
        %4152 = vmatprep.subr.bf16.mxu0 %v4054
        %4153 = vmatpush1.bf16.msra.mxu0 %v4053
        %4154 = vmatprep.subr.bf16.mxu0 %v4058
        %4155 = vmatpush1.bf16.msra.mxu0 %v4057
        %4156 = vmatprep.subr.bf16.mxu0 %v4062
        %4157 = vmatpush1.bf16.msra.mxu0 %v4061
        %4158 = vmatprep.subr.bf16.mxu0 %v4066
        %4159 = vmatpush1.bf16.msra.mxu0 %v4065
        %4160 = vmatprep.subr.bf16.mxu0 %v4070
        %4161 = vmatpush1.bf16.msra.mxu0 %v4069
        %4162 = vmatprep.subr.bf16.mxu0 %v4074
        %4163 = vmatpush1.bf16.msra.mxu0 %v4073
        %4164 = vmatprep.subr.bf16.mxu0 0
        %4165 = vmatpush1.bf16.msra.mxu0 0
        %4166 = vmatprep.subr.bf16.mxu0 0
        %4167 = vmatpush1.bf16.msra.mxu0 0
        %4168 = vmatprep.subr.bf16.mxu0 0
        %4169 = vmatpush1.bf16.msra.mxu0 0
        %4170 = vmatprep.subr.bf16.mxu0 0
        %4171 = vmatpush1.bf16.msra.mxu0 0
        %4172 = vmatprep.subr.bf16.mxu0 0
        %4173 = vmatpush1.bf16.msra.mxu0 0
        %4174 = vmatprep.subr.bf16.mxu0 0
        %4175 = vmatpush1.bf16.msra.mxu0 0
        %4176 = vmatprep.subr.bf16.mxu0 0
        %4177 = vmatpush1.bf16.msra.mxu0 0
        %4178 = vmatprep.subr.bf16.mxu0 0
        %4179 = vmatpush1.bf16.msra.mxu0 0
        %4180 = vmatprep.mubr.bf16.mxu0 0
        %4181 = vmatmul.mubr.bf16.gmra.mrb[0].mxu0 %v3635
        %v4182 = vpop.f32.mrb[0].mxu0
        %v4183 = vadd.f32 %v3941, %v4182
        %v4184 = vpop.f32.mrb[0].mxu0
        %v4185 = vadd.f32 %v3943, %v4184
        %v4186 = vpop.f32.mrb[0].mxu0
        %v4187 = vpop.f32.mrb[0].mxu0
        %4188 = vdwg.mxu0
        %v4189 = vld [vmem:[#allocation14] sm:$0xf]
        %v4191 = vlaneseq
        %v4192 = vshrl.u32 %v4191, 7
        %v4193 = vsub.s32 0, %v4192
        %v4194 = vrot.slane %v4189, %v4193
        %v4195 = vlaneseq
        %v4196 = vshrl.u32 %v4195, 7
        %v4197 = vsub.s32 1, %v4196
        %v4198 = vrot.slane %v4189, %v4197
        %v4199 = vlaneseq
        %v4200 = vshrl.u32 %v4199, 7
        %v4201 = vsub.s32 2, %v4200
        %v4202 = vrot.slane %v4189, %v4201
        %v4203 = vlaneseq
        %v4204 = vshrl.u32 %v4203, 7
        %v4205 = vsub.s32 3, %v4204
        %v4206 = vrot.slane %v4189, %v4205
        %v4211 = vadd.f32 %v4142, %v4194
        %v4212 = vadd.f32 %v4144, %v4198
        %v4213 = vadd.f32 %v4183, %v4202
        %v4214 = vadd.f32 %v4185, %v4206
        %v4215 = vmax.f32 %v4211, 0.0
        %v4216 = vmax.f32 %v4212, 0.0
        %v4217 = vmax.f32 %v4213, 0.0
        %v4218 = vmax.f32 %v4214, 0.0
        %v4219 = vpack.c.bf16 %v4215, %v4215
        %v4220 = vpack.c.bf16 %v4216, %v4216
        %v4221 = vpack.c.bf16 %v4217, %v4217
        %v4222 = vpack.c.bf16 %v4218, %v4218
        %v4223 = vld [vmem:[%s12] sm:$0xf]
        %v4224 = vld [vmem:[%s12 + $0x4] sm:$0xf]
        %v4225 = vld [vmem:[%s12 + $0x8] sm:$0xf]
        %v4226 = vld [vmem:[%s12 + $0xc] sm:$0xf]
        %v4227 = vld [vmem:[%s12 + $0x10] sm:$0xf]
        %v4228 = vld [vmem:[%s12 + $0x14] sm:$0xf]
        %v4229 = vld [vmem:[%s12 + $0x18] sm:$0xf]
        %v4230 = vld [vmem:[%s12 + $0x1c] sm:$0xf]
        %v4231 = vld [vmem:[%s12 + $0x20] sm:$0xf]
        %v4232 = vld [vmem:[%s12 + $0x24] sm:$0xf]
        %v4233 = vld [vmem:[%s12 + $0x28] sm:$0xf]
        %v4234 = vld [vmem:[%s12 + $0x2c] sm:$0xf]
        %v4235 = vld [vmem:[%s12 + $0x30] sm:$0xf]
        %v4236 = vld [vmem:[%s12 + $0x34] sm:$0xf]
        %v4237 = vld [vmem:[%s12 + $0x38] sm:$0xf]
        %v4238 = vld [vmem:[%s12 + $0x3c] sm:$0xf]
        %v4239 = vld [vmem:[%s12 + $0x40] sm:$0xf]
        %v4240 = vld [vmem:[%s12 + $0x44] sm:$0xf]
        %v4241 = vld [vmem:[%s12 + $0x48] sm:$0xf]
        %v4242 = vld [vmem:[%s12 + $0x4c] sm:$0xf]
        %v4243 = vld [vmem:[%s12 + $0x50] sm:$0xf]
        %v4244 = vld [vmem:[%s12 + $0x54] sm:$0xf]
        %v4245 = vld [vmem:[%s12 + $0x58] sm:$0xf]
        %v4246 = vld [vmem:[%s12 + $0x5c] sm:$0xf]
        %v4247 = vld [vmem:[%s12 + $0x60] sm:$0xf]
        %v4248 = vld [vmem:[%s12 + $0x64] sm:$0xf]
        %v4249 = vld [vmem:[%s12 + $0x68] sm:$0xf]
        %v4250 = vld [vmem:[%s12 + $0x6c] sm:$0xf]
        %v4251 = vld [vmem:[%s12 + $0x70] sm:$0xf]
        %v4252 = vld [vmem:[%s12 + $0x74] sm:$0xf]
        %v4253 = vld [vmem:[%s12 + $0x78] sm:$0xf]
        %v4254 = vld [vmem:[%s12 + $0x7c] sm:$0xf]
        %v4255 = vld [vmem:[%s12 + $0x80] sm:$0xf]
        %v4256 = vld [vmem:[%s12 + $0x84] sm:$0xf]
        %v4257 = vld [vmem:[%s12 + $0x88] sm:$0xf]
        %v4258 = vld [vmem:[%s12 + $0x8c] sm:$0xf]
        %v4259 = vld [vmem:[%s12 + $0x90] sm:$0xf]
        %v4260 = vld [vmem:[%s12 + $0x94] sm:$0xf]
        %v4261 = vld [vmem:[%s12 + $0x98] sm:$0xf]
        %v4262 = vld [vmem:[%s12 + $0x9c] sm:$0xf]
        %v4263 = vld [vmem:[%s12 + $0xa0] sm:$0xf]
        %v4264 = vld [vmem:[%s12 + $0xa4] sm:$0xf]
        %v4265 = vld [vmem:[%s12 + $0xa8] sm:$0xf]
        %v4266 = vld [vmem:[%s12 + $0xac] sm:$0xf]
        %v4267 = vld [vmem:[%s12 + $0xb0] sm:$0xf]
        %v4268 = vld [vmem:[%s12 + $0xb4] sm:$0xf]
        %v4269 = vld [vmem:[%s12 + $0xb8] sm:$0xf]
        %v4270 = vld [vmem:[%s12 + $0xbc] sm:$0xf]
        %v4271 = vld [vmem:[%s12 + $0xc0] sm:$0xf]
        %v4272 = vld [vmem:[%s12 + $0xc4] sm:$0xf]
        %v4273 = vld [vmem:[%s12 + $0xc8] sm:$0xf]
        %v4274 = vld [vmem:[%s12 + $0xcc] sm:$0xf]
        %v4275 = vld [vmem:[%s12 + $0xd0] sm:$0xf]
        %v4276 = vld [vmem:[%s12 + $0xd4] sm:$0xf]
        %v4277 = vld [vmem:[%s12 + $0xd8] sm:$0xf]
        %v4278 = vld [vmem:[%s12 + $0xdc] sm:$0xf]
        %v4279 = vld [vmem:[%s12 + $0xe0] sm:$0xf]
        %v4280 = vld [vmem:[%s12 + $0xe4] sm:$0xf]
        %v4281 = vld [vmem:[%s12 + $0xe8] sm:$0xf]
        %v4282 = vld [vmem:[%s12 + $0xec] sm:$0xf]
        %v4283 = vld [vmem:[%s12 + $0xf0] sm:$0xf]
        %v4284 = vld [vmem:[%s12 + $0xf4] sm:$0xf]
        %v4285 = vld [vmem:[%s12 + $0xf8] sm:$0xf]
        %v4286 = vld [vmem:[%s12 + $0xfc] sm:$0xf]
        %v4287 = vld [vmem:[#allocation16] sm:$0x1]
        %v4352 = vunpack.c.l.b16 %v4223
        %v4353 = vunpack.c.l.b16 %v4224
        %v4354 = vunpack.c.l.b16 %v4225
        %v4355 = vunpack.c.l.b16 %v4226
        %v4356 = vunpack.c.l.b16 %v4227
        %v4357 = vunpack.c.l.b16 %v4228
        %v4358 = vunpack.c.l.b16 %v4229
        %v4359 = vunpack.c.l.b16 %v4230
        %v4360 = vunpack.c.l.b16 %v4231
        %v4361 = vunpack.c.l.b16 %v4232
        %v4362 = vunpack.c.l.b16 %v4233
        %v4363 = vunpack.c.l.b16 %v4234
        %v4364 = vunpack.c.l.b16 %v4235
        %v4365 = vunpack.c.l.b16 %v4236
        %v4366 = vunpack.c.l.b16 %v4237
        %v4367 = vunpack.c.l.b16 %v4238
        %v4368 = vunpack.c.l.b16 %v4239
        %v4369 = vunpack.c.l.b16 %v4240
        %v4370 = vunpack.c.l.b16 %v4241
        %v4371 = vunpack.c.l.b16 %v4242
        %v4372 = vunpack.c.l.b16 %v4243
        %v4373 = vunpack.c.l.b16 %v4244
        %v4374 = vunpack.c.l.b16 %v4245
        %v4375 = vunpack.c.l.b16 %v4246
        %v4376 = vunpack.c.l.b16 %v4247
        %v4377 = vunpack.c.l.b16 %v4248
        %v4378 = vunpack.c.l.b16 %v4249
        %v4379 = vunpack.c.l.b16 %v4250
        %v4380 = vunpack.c.l.b16 %v4251
        %v4381 = vunpack.c.l.b16 %v4252
        %v4382 = vunpack.c.l.b16 %v4253
        %v4383 = vunpack.c.l.b16 %v4254
        %v4384 = vunpack.c.l.b16 %v4255
        %v4385 = vunpack.c.l.b16 %v4256
        %v4386 = vunpack.c.l.b16 %v4257
        %v4387 = vunpack.c.l.b16 %v4258
        %v4388 = vunpack.c.l.b16 %v4259
        %v4389 = vunpack.c.l.b16 %v4260
        %v4390 = vunpack.c.l.b16 %v4261
        %v4391 = vunpack.c.l.b16 %v4262
        %v4392 = vunpack.c.l.b16 %v4263
        %v4393 = vunpack.c.l.b16 %v4264
        %v4394 = vunpack.c.l.b16 %v4265
        %v4395 = vunpack.c.l.b16 %v4266
        %v4396 = vunpack.c.l.b16 %v4267
        %v4397 = vunpack.c.l.b16 %v4268
        %v4398 = vunpack.c.l.b16 %v4269
        %v4399 = vunpack.c.l.b16 %v4270
        %v4400 = vunpack.c.l.b16 %v4271
        %v4401 = vunpack.c.l.b16 %v4272
        %v4402 = vunpack.c.l.b16 %v4273
        %v4403 = vunpack.c.l.b16 %v4274
        %v4404 = vunpack.c.l.b16 %v4275
        %v4405 = vunpack.c.l.b16 %v4276
        %v4406 = vunpack.c.l.b16 %v4277
        %v4407 = vunpack.c.l.b16 %v4278
        %v4408 = vunpack.c.l.b16 %v4279
        %v4409 = vunpack.c.l.b16 %v4280
        %v4410 = vunpack.c.l.b16 %v4281
        %v4411 = vunpack.c.l.b16 %v4282
        %v4412 = vunpack.c.l.b16 %v4283
        %v4413 = vunpack.c.l.b16 %v4284
        %v4414 = vunpack.c.l.b16 %v4285
        %v4415 = vunpack.c.l.b16 %v4286
        %v4416 = vpack.c.b16 %v4353, %v4352
        %v4417 = vpack.c.b16 %v4355, %v4354
        %v4418 = vpack.c.b16 %v4357, %v4356
        %v4419 = vpack.c.b16 %v4359, %v4358
        %v4420 = vpack.c.b16 %v4361, %v4360
        %v4421 = vpack.c.b16 %v4363, %v4362
        %v4422 = vpack.c.b16 %v4365, %v4364
        %v4423 = vpack.c.b16 %v4367, %v4366
        %v4424 = vpack.c.b16 %v4369, %v4368
        %v4425 = vpack.c.b16 %v4371, %v4370
        %v4426 = vpack.c.b16 %v4373, %v4372
        %v4427 = vpack.c.b16 %v4375, %v4374
        %v4428 = vpack.c.b16 %v4377, %v4376
        %v4429 = vpack.c.b16 %v4379, %v4378
        %v4430 = vpack.c.b16 %v4381, %v4380
        %v4431 = vpack.c.b16 %v4383, %v4382
        %v4432 = vpack.c.b16 %v4385, %v4384
        %v4433 = vpack.c.b16 %v4387, %v4386
        %v4434 = vpack.c.b16 %v4389, %v4388
        %v4435 = vpack.c.b16 %v4391, %v4390
        %v4436 = vpack.c.b16 %v4393, %v4392
        %v4437 = vpack.c.b16 %v4395, %v4394
        %v4438 = vpack.c.b16 %v4397, %v4396
        %v4439 = vpack.c.b16 %v4399, %v4398
        %v4440 = vpack.c.b16 %v4401, %v4400
        %v4441 = vpack.c.b16 %v4403, %v4402
        %v4442 = vpack.c.b16 %v4405, %v4404
        %v4443 = vpack.c.b16 %v4407, %v4406
        %v4444 = vpack.c.b16 %v4409, %v4408
        %v4445 = vpack.c.b16 %v4411, %v4410
        %v4446 = vpack.c.b16 %v4413, %v4412
        %v4447 = vpack.c.b16 %v4415, %v4414
        %4480 = vmatprep.subr.bf16.mxu0 0
        %4481 = vmatpush1.bf16.msra.mxu0 %v4416
        %4482 = vmatprep.subr.bf16.mxu0 0
        %4483 = vmatpush1.bf16.msra.mxu0 %v4417
        %4484 = vmatprep.subr.bf16.mxu0 0
        %4485 = vmatpush1.bf16.msra.mxu0 %v4418
        %4486 = vmatprep.subr.bf16.mxu0 0
        %4487 = vmatpush1.bf16.msra.mxu0 %v4419
        %4488 = vmatprep.subr.bf16.mxu0 0
        %4489 = vmatpush1.bf16.msra.mxu0 %v4420
        %4490 = vmatprep.subr.bf16.mxu0 0
        %4491 = vmatpush1.bf16.msra.mxu0 %v4421
        %4492 = vmatprep.subr.bf16.mxu0 0
        %4493 = vmatpush1.bf16.msra.mxu0 %v4422
        %4494 = vmatprep.subr.bf16.mxu0 0
        %4495 = vmatpush1.bf16.msra.mxu0 %v4423
        %4496 = vmatprep.subr.bf16.mxu0 0
        %4497 = vmatpush1.bf16.msra.mxu0 %v4424
        %4498 = vmatprep.subr.bf16.mxu0 0
        %4499 = vmatpush1.bf16.msra.mxu0 %v4425
        %4500 = vmatprep.subr.bf16.mxu0 0
        %4501 = vmatpush1.bf16.msra.mxu0 %v4426
        %4502 = vmatprep.subr.bf16.mxu0 0
        %4503 = vmatpush1.bf16.msra.mxu0 %v4427
        %4504 = vmatprep.subr.bf16.mxu0 0
        %4505 = vmatpush1.bf16.msra.mxu0 %v4428
        %4506 = vmatprep.subr.bf16.mxu0 0
        %4507 = vmatpush1.bf16.msra.mxu0 %v4429
        %4508 = vmatprep.subr.bf16.mxu0 0
        %4509 = vmatpush1.bf16.msra.mxu0 %v4430
        %4510 = vmatprep.subr.bf16.mxu0 0
        %4511 = vmatpush1.bf16.msra.mxu0 %v4431
        %4512 = vmatprep.mubr.bf16.mxu0 %v4220
        %4513 = vmatmul.mubr.bf16.gmra.mrb[0].mxu0 %v4219
        %v4514 = vpop.f32.mrb[0].mxu0
        %v4515 = vadd.f32 %v4287, %v4514
        %v4516 = vpop.f32.mrb[0].mxu0
        %v4517 = vpop.f32.mrb[0].mxu0
        %v4518 = vpop.f32.mrb[0].mxu0
        %4519 = vdwg.mxu0
        %4520 = vmatprep.subr.bf16.mxu0 0
        %4521 = vmatpush1.bf16.msra.mxu0 %v4432
        %4522 = vmatprep.subr.bf16.mxu0 0
        %4523 = vmatpush1.bf16.msra.mxu0 %v4433
        %4524 = vmatprep.subr.bf16.mxu0 0
        %4525 = vmatpush1.bf16.msra.mxu0 %v4434
        %4526 = vmatprep.subr.bf16.mxu0 0
        %4527 = vmatpush1.bf16.msra.mxu0 %v4435
        %4528 = vmatprep.subr.bf16.mxu0 0
        %4529 = vmatpush1.bf16.msra.mxu0 %v4436
        %4530 = vmatprep.subr.bf16.mxu0 0
        %4531 = vmatpush1.bf16.msra.mxu0 %v4437
        %4532 = vmatprep.subr.bf16.mxu0 0
        %4533 = vmatpush1.bf16.msra.mxu0 %v4438
        %4534 = vmatprep.subr.bf16.mxu0 0
        %4535 = vmatpush1.bf16.msra.mxu0 %v4439
        %4536 = vmatprep.subr.bf16.mxu0 0
        %4537 = vmatpush1.bf16.msra.mxu0 %v4440
        %4538 = vmatprep.subr.bf16.mxu0 0
        %4539 = vmatpush1.bf16.msra.mxu0 %v4441
        %4540 = vmatprep.subr.bf16.mxu0 0
        %4541 = vmatpush1.bf16.msra.mxu0 %v4442
        %4542 = vmatprep.subr.bf16.mxu0 0
        %4543 = vmatpush1.bf16.msra.mxu0 %v4443
        %4544 = vmatprep.subr.bf16.mxu0 0
        %4545 = vmatpush1.bf16.msra.mxu0 %v4444
        %4546 = vmatprep.subr.bf16.mxu0 0
        %4547 = vmatpush1.bf16.msra.mxu0 %v4445
        %4548 = vmatprep.subr.bf16.mxu0 0
        %4549 = vmatpush1.bf16.msra.mxu0 %v4446
        %4550 = vmatprep.subr.bf16.mxu0 0
        %4551 = vmatpush1.bf16.msra.mxu0 %v4447
        %4552 = vmatprep.mubr.bf16.mxu0 %v4222
        %4553 = vmatmul.mubr.bf16.gmra.mrb[0].mxu0 %v4221
        %v4554 = vpop.f32.mrb[0].mxu0
        %v4555 = vadd.f32 %v4515, %v4554
        %v4556 = vpop.f32.mrb[0].mxu0
        %v4557 = vpop.f32.mrb[0].mxu0
        %v4558 = vpop.f32.mrb[0].mxu0
        %4559 = vdwg.mxu0
        %vm4560 = vcmask 40960
        %4561 = vst.msk [vmem:[%s582] sm:$0x1] %vm4560, %v4555
        %s4562 = sand.u32 %s340, 1
        %s4563 = scalar_lea.sflag [#allocation4], %s4562
        %s4564 = sand.u32 %s340, 1
        %s4565 = scalar_lea.vmem [#allocation17], %s4564
        // Predicated region
        $region113: #{cnn_policy_forward.1} parent=75 // pred_check
          %p4566 = pneg %p350
        $region114: #{cnn_policy_forward.1} parent=75 // pred_check_branch
          %4568 = sbr.rel (%p4566) target = $region116
        $region115: #{cnn_policy_forward.1} parent=75 // pred_region
          %s4570 = ssub.s32 16, 16
          %4571 = vsyncadd %s4563, %s4570
          %s4572 = smul.addr %s33, 16
          %s4573 = scalar_lea.hbm %s14, %s4572
          %s4575 = sshll.u32 %s4565, 4
          %s4576 = int_to_ptr.vmem [resolvable:$true] %s4575
          %4578 = dma.vmem_to_hbm [thread:$0]  %s4576, 16, %s4573, %s4563
        $region116: #{cnn_policy_forward.1} parent=75 // pred_fallthru
          _
      $region76: #{cnn_policy_forward.1} parent=5 // pred_fallthru
        _
      %p4579 = scmp.le.s32.totalorder 2, %s28
      // Predicated region
      $region117: #{cnn_policy_forward.1} parent=5 // pred_check
        %p4580 = pneg %p4579
      $region118: #{cnn_policy_forward.1} parent=5 // pred_check_branch
        %4582 = sbr.rel (%p4580) target = $region120
      $region119: #{cnn_policy_forward.1} parent=5 // pred_region
        %s4583 = ssub.s32 %s28, 2
        // Predicated region
        $region121: #{cnn_policy_forward.1} parent=119 // pred_check
          %p4584 = pneg %p356
        $region122: #{cnn_policy_forward.1} parent=119 // pred_check_branch
          %4586 = sbr.rel (%p4584) target = $region124
        $region123: #{cnn_policy_forward.1} parent=119 // pred_region
          %s4587 = sand.u32 %s341, 1
          %s4588 = scalar_lea.sflag [#allocation4], %s4587
          %s4589 = sand.u32 %s341, 1
          %s4590 = scalar_lea.vmem [#allocation17], %s4589
          %4591 = dma.done %s4588, 16
        $region124: #{cnn_policy_forward.1} parent=119 // pred_fallthru
          _
      $region120: #{cnn_policy_forward.1} parent=5 // pred_fallthru
        _
    $region6: #{cnn_policy_forward.1} parent=1 // loop_footer
      %s32 = sadd.s32 1, %s28
    $region7: #{cnn_policy_forward.1} parent=1 // loop_footer_branch
      %27 = sbr.rel target = $region3
    $region8: #{cnn_policy_forward.1} parent=1 // loop_exit
      _
    %4592 = vsyncpa [#allocation3], 1
    %s4593 = scalar_lea.sflag [#allocation3], 1
    %4594 = vsyncpa %s4593, 1
    %4595 = vsyncpa [#allocation6], 1
    %4596 = vsyncpa [#allocation9], 1
    %4597 = vsyncpa [#allocation12], 1
    %4598 = vsyncpa [#allocation15], 1
    %4599 = vsyncpa [#allocation4], 1
    %s4600 = scalar_lea.sflag [#allocation4], 1
    %4601 = vsyncpa %s4600, 1

</llo_original>
